<compile_context>
chip_gen: v7x
topology: tpu7x:2x2x1
jax: 0.10.0
libtpu: 0.0.40
codegen_flags: <defaults>
</compile_context>

<pallas_src>
import math

import jax
import jax.numpy as jnp
from jax.experimental import pallas as pl
from jax.experimental.pallas import tpu as pltpu


# Below this many input elements, XLA's fused dot beats pallas_call dispatch.
_MIN_PALLAS_ELEMS = 64 * 1024

# Largest M-tile (rows per grid step); multiple of 16 (bf16 sublane tile).
_TM_MAX = 4096


def _round_up(x, m):
    return ((x + m - 1) // m) * m


def _vmem_budget_bytes():
    """Scoped-VMEM budget: ~70% of physical VMEM (96->~90 MiB on v5e/v6e,
    64->~45 MiB on v7x), leaving headroom for compiler-internal scratch."""
    cap = 64 * 1024 * 1024
    try:
        info = pltpu.get_tpu_info()
        cap = int(getattr(info, "vmem_capacity_bytes", cap))
    except Exception:
        pass
    return max(int(cap * 0.70), 32 * 1024 * 1024)


def _choose_tm(m_rows, k_cols, n_cols, in_itemsize, out_itemsize,
               basis_bytes, vmem_budget):
    """Largest M-tile (multiple of 16, or the full M) that fits the budget
    after the resident basis and double-buffered in/out tiles are accounted.
    NOTE(v7x): with 2 TensorCores a >=2-step 'parallel' M grid load-balances
    across cores; with tiles this large typical M already yields >=2 steps."""
    if m_rows <= 16:
        return m_rows
    per_row = (k_cols * in_itemsize + n_cols * out_itemsize) * 2  # dbl-buffered
    avail = max(vmem_budget - basis_bytes - (2 << 20), per_row * 16)
    tm = min(_TM_MAX, avail // per_row)
    tm = max(16, (tm // 16) * 16)
    if tm >= m_rows:
        return m_rows        # single full-extent block (always a legal block)
    return tm


# --------------------------------------------------------------------------
# Kernels
# --------------------------------------------------------------------------

def _matmul_kernel(x_ref, b_ref, o_ref):
    # One MXU matmul per M-tile; bf16 feed, f32 accumulate. Scale is folded
    # into the basis, so the hot path is a single dot + store.
    o_ref[...] = jnp.dot(
        x_ref[...], b_ref[...], preferred_element_type=jnp.float32
    ).astype(o_ref.dtype)


def _matmul_reduce_kernel(x_ref, b_ref, o_ref, acc_ref):
    # K-reduction variant for large L (basis does not fit VMEM resident).
    @pl.when(pl.program_id(2) == 0)
    def _init():
        acc_ref[...] = jnp.zeros_like(acc_ref)

    acc_ref[...] += jnp.dot(x_ref[...], b_ref[...],
                            preferred_element_type=jnp.float32)

    @pl.when(pl.program_id(2) == pl.num_programs(2) - 1)
    def _finalize():
        o_ref[...] = acc_ref[...].astype(o_ref.dtype)


# --------------------------------------------------------------------------
# pallas_call wrappers
# --------------------------------------------------------------------------

def _matmul_resident(x2d, basis, out_dtype, vmem_budget):
    """x2d: (M, K), basis: (K, N) resident in VMEM -> (M, N), tiled over M."""
    M, K = x2d.shape
    Kb, N = basis.shape
    assert K == Kb
    in_it = x2d.dtype.itemsize
    b_it = basis.dtype.itemsize
    o_it = jnp.dtype(out_dtype).itemsize

    # Constant index_map -> DMA'd once, but the pipeline still allocates two
    # buffers for it; account both in the tile budget.
    basis_bytes = 2 * K * N * b_it
    tm = _choose_tm(M, K, N, in_it, o_it, basis_bytes, vmem_budget)
    grid = (pl.cdiv(M, tm),)   # partial last block is masked by Pallas

    cost = pl.CostEstimate(
        flops=2 * M * K * N,
        transcendentals=0,
        bytes_accessed=M * K * in_it + K * N * b_it + M * N * o_it,
    )
    return pl.pallas_call(
        _matmul_kernel,
        out_shape=jax.ShapeDtypeStruct((M, N), out_dtype),
        grid_spec=pltpu.PrefetchScalarGridSpec(
            num_scalar_prefetch=0,
            grid=grid,
            in_specs=[
                pl.BlockSpec((tm, K), lambda i: (i, 0)),   # input rows tile
                pl.BlockSpec((K, N), lambda i: (0, 0)),    # full basis, resident
            ],
            out_specs=pl.BlockSpec((tm, N), lambda i: (i, 0)),
        ),
        compiler_params=pltpu.CompilerParams(
            dimension_semantics=("parallel",),
            vmem_limit_bytes=int(vmem_budget),
        ),
        cost_estimate=cost,
    )(x2d, basis)


def _matmul_reduction(x2d, basis, out_dtype, vmem_budget):
    """Large-L path: (M, N, K) grid with an f32 VMEM accumulator so the full
    (L, L) basis never has to be resident.  tk=tn=256 fills the 2x256^2 MXU on
    v6e/v7x (v5e just takes two passes of its 128-wide MXU)."""
    M, K = x2d.shape
    _, N = basis.shape
    in_it = x2d.dtype.itemsize
    b_it = basis.dtype.itemsize
    o_it = jnp.dtype(out_dtype).itemsize

    tn = 256 if N >= 256 else N
    tk = 256 if K >= 256 else K
    # Zero-pad the contraction axis so no partially-masked (stale-VMEM) K block
    # can leak into the accumulator.  Padding is tiny relative to large L.
    K_pad = _round_up(K, tk)
    if K_pad != K:
        x2d = jnp.pad(x2d, ((0, 0), (0, K_pad - K)))
        basis = jnp.pad(basis, ((0, K_pad - K), (0, 0)))

    fixed = 2 * tk * tn * b_it + (2 << 20)                  # basis tiles + slack
    per_row = 2 * tk * in_it + 2 * tn * o_it + tn * 4       # x dbl, out dbl, acc
    tm = max(16, min(_TM_MAX, (vmem_budget - fixed) // per_row) // 16 * 16)
    if tm >= M:
        tm = M

    grid = (pl.cdiv(M, tm), pl.cdiv(N, tn), K_pad // tk)
    cost = pl.CostEstimate(
        flops=2 * M * K_pad * N,
        transcendentals=0,
        bytes_accessed=M * K_pad * in_it + K_pad * N * b_it + M * N * o_it,
    )
    return pl.pallas_call(
        _matmul_reduce_kernel,
        out_shape=jax.ShapeDtypeStruct((M, N), out_dtype),
        grid_spec=pltpu.PrefetchScalarGridSpec(
            num_scalar_prefetch=0,
            grid=grid,
            in_specs=[
                pl.BlockSpec((tm, tk), lambda i, j, k: (i, k)),
                pl.BlockSpec((tk, tn), lambda i, j, k: (k, j)),
            ],
            out_specs=pl.BlockSpec((tm, tn), lambda i, j, k: (i, j)),
            scratch_shapes=[pltpu.VMEM((tm, tn), jnp.float32)],
        ),
        compiler_params=pltpu.CompilerParams(
            dimension_semantics=("parallel", "parallel", "arbitrary"),
            vmem_limit_bytes=int(vmem_budget),
        ),
        cost_estimate=cost,
    )(x2d, basis)


def _spec_matmul(x2d, basis, out_dtype=jnp.float32):
    """Dispatch: tiny problems -> XLA fused dot; medium -> resident-basis
    Pallas matmul; very large L -> K/N-reduction Pallas matmul."""
    M, K = x2d.shape
    _, N = basis.shape
    if M * K < _MIN_PALLAS_ELEMS:
        return jnp.dot(x2d, basis, preferred_element_type=jnp.float32).astype(out_dtype)
    vmem_budget = _vmem_budget_bytes()
    if 2 * K * N * basis.dtype.itemsize <= vmem_budget // 2:
        return _matmul_resident(x2d, basis, out_dtype, vmem_budget)
    return _matmul_reduction(x2d, basis, out_dtype, vmem_budget)


# --------------------------------------------------------------------------
# Module
# --------------------------------------------------------------------------

class RealSpec0:
    """JAX/Pallas port of the PyTorch RealSpec0 module."""

    def __init__(self, length, key, compute_dtype=jnp.bfloat16,
                 out_dtype=jnp.float32):
        self.len = length
        self.compute_dtype = jnp.dtype(compute_dtype)
        self.out_dtype = jnp.dtype(out_dtype)
        stdv = 1.0 / math.sqrt(length)
        kf, kb = jax.random.split(key)
        # reset_parameters(): uniform(-stdv, stdv) overwrites the FFT-basis init.
        self.fbasis = jax.random.uniform(
            kf, (length, length), jnp.float32, minval=-stdv, maxval=stdv)
        self.bbasis = jax.random.uniform(
            kb, (length, length), jnp.float32, minval=-stdv, maxval=stdv)

        # Fold the 1/len of the fft=False path into the basis once, then cast
        # to the compute dtype (the MXU rounds f32 operands to bf16 at default
        # precision anyway; the bf16 feed halves HBM read traffic).
        self._fb_c = self.fbasis.astype(self.compute_dtype)
        self._bb_c = (self.bbasis / float(length)).astype(self.compute_dtype)

        # Lane packing for small L: pack r = 128 // L consecutive rows into one
        # 128-wide lane row and use a block-diagonal basis so MXU feed and
        # output stores are lane-dense instead of (L/128)-occupied.
        if length < 128 and 128 % length == 0:
            self._pack = 128 // length
            eye_r = jnp.eye(self._pack, dtype=jnp.float32)
            self._fb_packed = jnp.kron(eye_r, self.fbasis).astype(self.compute_dtype)
            self._bb_packed = jnp.kron(
                eye_r, self.bbasis / float(length)).astype(self.compute_dtype)
        else:
            self._pack = 1
            self._fb_packed = self._fb_c
            self._bb_packed = self._bb_c

    def __call__(self, x, fft=True):
        orig_shape = x.shape
        L = orig_shape[-1]
        assert L == self.len
        x2d = x.reshape(-1, L).astype(self.compute_dtype)
        M = x2d.shape[0]

        plain = self._fb_c if fft else self._bb_c
        packed = self._fb_packed if fft else self._bb_packed

        r = self._pack
        if r > 1 and M * L >= _MIN_PALLAS_ELEMS:
            # Keep the lane-packed (128-wide) path even when M % r != 0: pad
            # <= r-1 zero rows, pack, matmul, and slice the result back.
            M_pad = _round_up(M, r)
            if M_pad != M:
                x2d = jnp.pad(x2d, ((0, M_pad - M), (0, 0)))
            out = _spec_matmul(x2d.reshape(M_pad // r, r * L), packed,
                               self.out_dtype)
            out = out.reshape(M_pad, L)[:M]
        else:
            out = _spec_matmul(x2d, plain, self.out_dtype)
        return out.reshape(orig_shape)


# --------------------------------------------------------------------------
# Demo / self-check
# --------------------------------------------------------------------------

if __name__ == "__main__":
    key = jax.random.PRNGKey(0)
    k_param, kx1, kx2, kx3 = jax.random.split(key, 4)

    def ref_forward(mod, x, fft):
        # Reference with identically-rounded (compute-dtype) operands computed
        # in f32/HIGHEST so the comparison isolates the kernel itself from the
        # intentional bf16 operand rounding.
        b = (mod._fb_c if fft else mod._bb_c).astype(jnp.float32)
        xr = x.reshape(-1, mod.len).astype(mod.compute_dtype).astype(jnp.float32)
        out = jnp.matmul(xr, b, precision=jax.lax.Precision.HIGHEST)
        return out.reshape(x.shape)

    def check(mod, x, out, fft, name):
        ref = ref_forward(mod, x, fft)
        assert out.shape == x.shape and out.dtype == jnp.float32, name
        err = float(jnp.max(jnp.abs(out - ref)))
        assert err < 2e-3, (name, err)

    # Case A: tiny spec-sized shapes -> small-problem fast path (plain dot).
    LEN_A = 32
    mod_a = RealSpec0(LEN_A, k_param)
    x_a = jax.random.normal(kx1, (2, 8, LEN_A), dtype=jnp.float32)
    out_a_f = mod_a(x_a, fft=True)
    out_a_b = mod_a(x_a, fft=False)

    # Case B: L = 128 (already lane-dense); M = 4200 rows -> multi-step grid
    # with a masked partial last M block on the Pallas resident-basis path.
    LEN_B = 128
    mod_b = RealSpec0(LEN_B, k_param)
    x_b = jax.random.normal(kx2, (3, 1400, LEN_B), dtype=jnp.float32)
    out_b_f = mod_b(x_b, fft=True)
    out_b_b = mod_b(x_b, fft=False)

    # Case C: small L = 32 on the Pallas path; row count NOT a multiple of the
    # packing factor (4) to exercise zero-row padding + lane-packed matmul.
    LEN_C = 32
    mod_c = RealSpec0(LEN_C, k_param)
    x_c = jax.random.normal(kx3, (2, 1111, LEN_C), dtype=jnp.float32)
    out_c_f = mod_c(x_c, fft=True)
    out_c_b = mod_c(x_c, fft=False)

    jax.block_until_ready((out_a_f, out_a_b, out_b_f, out_b_b, out_c_f, out_c_b))

    check(mod_a, x_a, out_a_f, True, "A/fft")
    check(mod_a, x_a, out_a_b, False, "A/ifft")
    check(mod_b, x_b, out_b_f, True, "B/fft")
    check(mod_b, x_b, out_b_b, False, "B/ifft")
    check(mod_c, x_c, out_c_f, True, "C/fft")
    check(mod_c, x_c, out_c_b, False, "C/ifft")

    # Loose sanity check against the un-rounded f32 PyTorch semantics
    # (x @ fbasis and (x @ bbasis) / len); bf16 operand rounding dominates.
    ref_f32_f = jnp.matmul(x_b, mod_b.fbasis, precision=jax.lax.Precision.HIGHEST)
    assert float(jnp.max(jnp.abs(out_b_f - ref_f32_f))) < 0.1
    ref_f32_b = jnp.matmul(x_b, mod_b.bbasis,
                           precision=jax.lax.Precision.HIGHEST) / LEN_B
    assert float(jnp.max(jnp.abs(out_b_b - ref_f32_b))) < 5e-3

    print("KERNEL_OK")
</pallas_src>

<mosaic_0001>
module attributes {stable_mosaic.version = 11 : i64} {
  func.func @_matmul_kernel(%arg0: i32, %arg1: memref<4096x128xbf16, #tpu.memory_space<vmem>>, %arg2: memref<128x128xbf16, #tpu.memory_space<vmem>>, %arg3: memref<4096x128xf32, #tpu.memory_space<vmem>>) attributes {dimension_semantics = [#tpu.dimension_semantics<parallel>], iteration_bounds = array<i64: 2>, scalar_prefetch = 0 : i64, scratch_operands = 0 : i64, tpu.core_type = #tpu.core_type<tc>, window_params = [{transform_indices = @transform_0, window_bounds = array<i64: 4096, 128>}, {pipeline_mode = #tpu.pipeline_mode<synchronous>, transform_indices = @transform_1, window_bounds = array<i64: 128, 128>}, {transform_indices = @transform_2, window_bounds = array<i64: 4096, 128>}]} {
    %c0 = arith.constant 0 : index
    %c0_0 = arith.constant 0 : index
    %0 = vector.load %arg1[%c0, %c0_0] : memref<4096x128xbf16, #tpu.memory_space<vmem>>, vector<4096x128xbf16>
    %c0_1 = arith.constant 0 : index
    %c0_2 = arith.constant 0 : index
    %1 = vector.load %arg2[%c0_1, %c0_2] : memref<128x128xbf16, #tpu.memory_space<vmem>>, vector<128x128xbf16>
    %cst = arith.constant dense<0.000000e+00> : vector<4096x128xf32>
    %2 = tpu.matmul %0, %1, %cst {dimension_numbers = #tpu.dot_dimension_numbers<[1], [0], [0], [1], [0, 0, 1, 1], [], []>} : vector<4096x128xbf16>, vector<128x128xbf16>, vector<4096x128xf32> -> vector<4096x128xf32>
    %c0_3 = arith.constant 0 : index
    %c0_4 = arith.constant 0 : index
    %3 = vector.load %arg3[%c0_3, %c0_4] : memref<4096x128xf32, #tpu.memory_space<vmem>>, vector<4096x128xf32>
    tpu.vector_store %arg3[%c0_3, %c0_4], %2 {strides = array<i32>} : memref<4096x128xf32, #tpu.memory_space<vmem>>, vector<4096x128xf32>,
    return
  }
  func.func @transform_0(%arg0: i32) -> (i32, i32) {
    %c0_i32 = arith.constant 0 : i32
    %c0_i32_0 = arith.constant 0 : i32
    return %arg0, %c0_i32 : i32, i32
  }
  func.func @transform_1(%arg0: i32) -> (i32, i32) {
    %c0_i32 = arith.constant 0 : i32
    %c0_i32_0 = arith.constant 0 : i32
    %c0_i32_1 = arith.constant 0 : i32
    return %c0_i32, %c0_i32_0 : i32, i32
  }
  func.func @transform_2(%arg0: i32) -> (i32, i32) {
    %c0_i32 = arith.constant 0 : i32
    %c0_i32_0 = arith.constant 0 : i32
    return %arg0, %c0_i32 : i32, i32
  }
}

</mosaic_0001>

<llo_original>
// kernel: tpu_custom_call.1
$region0: #{tpu_custom_call.1}
  #allocation0 [shape = 'u32[]', space=smem, size = 0x4, offset = 0x4, fixed_abs, tag = 'smem constant byte address 0x4 - core index']
  #allocation1 [shape = 'u32[144,128]{1,0:T(1,128)}', space=vmem, size = 0x12000, scoped, tag = 'internal scratch']
  %s0 = inlined_call_operand.hbm [shape: bf16[4200,128], index: 0, kind: input, shape index: {}]
  %s1 = inlined_call_operand.hbm [shape: bf16[128,128], index: 1, kind: input, shape index: {}]
  %s2 = inlined_call_operand.hbm [shape: f32[4200,128], index: 2, kind: output, shape index: {}]
  %s3 = sld [smem:[#allocation0]]
  $region49: #{tpu_custom_call.1} parent=0
    _
  %s5 = ssub.s32 1, %s3
  %s6 = scalar_select 0, %s5, %s3
  $region1: #{tpu_custom_call.1} parent=0
    #allocation2 [shape = 'u8[2097152]{0}', space=vmem, size = 0x200000, scoped, tag = 'input window, operand 0']
    #allocation3 [shape = 's32[2]{0}', space=sflag, size = 0x8, scoped, tag = 'scoped memory for tpu_custom_call.1']
    #allocation4 [shape = 's32[2]{0}', space=sflag, size = 0x8, scoped, tag = 'scoped memory for tpu_custom_call.1']
    #allocation5 [shape = 'u8[32768]{0}', space=vmem, size = 0x8000, scoped, tag = 'input window, operand 1, single buffered']
    #allocation6 [shape = 's32[1]{0}', space=sflag, size = 0x4, scoped, tag = 'scoped memory for tpu_custom_call.1']
    #allocation7 [shape = 'u8[4194304]{0}', space=vmem, size = 0x400000, scoped, tag = 'output window, operand 0']
    %7 = vsyncpa [#allocation3], 0
    %s8 = scalar_lea.sflag [#allocation3], 1
    %9 = vsyncpa %s8, 0
    %10 = vsyncpa [#allocation6], 0
    %11 = vsyncpa [#allocation4], 0
    %s12 = scalar_lea.sflag [#allocation4], 1
    %13 = vsyncpa %s12, 0
    loop: start=0, step=1, limit=4
    $region2: #{tpu_custom_call.1} parent=1 // loop_pre_header
      _
    $region3: #{tpu_custom_call.1} parent=1 // loop_header
      %s15 = sphi 0, %s19
      %p16 = scmp.ge.s32.totalorder %s15, 4
      %s25 = sphi 0, %s27
      %s28 = sphi 0, %s25
      %s29 = sphi 0, %s28
      %s45 = sphi 0, %s29
      %s49 = sphi 0, %s49
      %s51 = sphi 0, %s49
      %s52 = sphi 0, %s51
      %s66 = sphi 0, %s52
      %s72 = sphi 0, %s74
      %s75 = sphi 0, %s72
      %s76 = sphi 0, %s75
      %s92 = sphi 0, %s76
    $region4: #{tpu_custom_call.1} parent=1 // loop_header_branch
      %18 = sbr.rel (%p16) target = $region8
    $region5: #{tpu_custom_call.1} parent=1 // loop_body
      %s20 = ssub.s32 %s15, 1
      %s21 = ssub.s32 %s15, 2
      %s22 = sadd.s32 %s15, 1
      %s23 = ssub.s32 %s15, %s22
      %p24 = scmp.eq.s32.totalorder %s23, 0
      %s26 = sadd.s32 %s25, 1
      %s27 = scalar_select %p24, %s25, %s26
      %p30 = pneg %p24
      %p31 = scmp.eq.s32.totalorder %s15, 1
      %p32 = por %p30, %p31
      %p33 = scmp.ne.s32.totalorder %s25, %s28
      %p34 = scmp.eq.s32.totalorder %s15, 0
      %p35 = por %p33, %p34
      %p36 = scmp.ne.s32.totalorder %s25, %s28
      %p37 = scmp.eq.s32.totalorder %s20, 1
      %p38 = por %p36, %p37
      %p39 = scmp.ne.s32.totalorder %s28, %s29
      %p40 = scmp.eq.s32.totalorder %s20, 0
      %p41 = por %p39, %p40
      %p42 = scmp.ne.s32.totalorder %s28, %s29
      %p43 = scmp.eq.s32.totalorder %s21, 1
      %p44 = por %p42, %p43
      %p46 = scmp.ne.s32.totalorder %s29, %s45
      %p47 = scmp.eq.s32.totalorder %s21, 0
      %p48 = por %p46, %p47
      %s50 = sadd.s32 %s49, 1
      %p53 = scmp.eq.s32.totalorder %s15, 1
      %p54 = scmp.ne.s32.totalorder %s49, %s51
      %p55 = scmp.eq.s32.totalorder %s15, 0
      %p56 = por %p54, %p55
      %p57 = scmp.ne.s32.totalorder %s49, %s51
      %p58 = scmp.eq.s32.totalorder %s20, 1
      %p59 = por %p57, %p58
      %p60 = scmp.ne.s32.totalorder %s51, %s52
      %p61 = scmp.eq.s32.totalorder %s20, 0
      %p62 = por %p60, %p61
      %p63 = scmp.ne.s32.totalorder %s51, %s52
      %p64 = scmp.eq.s32.totalorder %s21, 1
      %p65 = por %p63, %p64
      %p67 = scmp.ne.s32.totalorder %s52, %s66
      %p68 = scmp.eq.s32.totalorder %s21, 0
      %p69 = por %p67, %p68
      %s70 = ssub.s32 %s15, %s22
      %p71 = scmp.eq.s32.totalorder %s70, 0
      %s73 = sadd.s32 %s72, 1
      %s74 = scalar_select %p71, %s72, %s73
      %p77 = pneg %p71
      %p78 = scmp.eq.s32.totalorder %s15, 1
      %p79 = por %p77, %p78
      %p80 = scmp.ne.s32.totalorder %s72, %s75
      %p81 = scmp.eq.s32.totalorder %s15, 0
      %p82 = por %p80, %p81
      %p83 = scmp.ne.s32.totalorder %s72, %s75
      %p84 = scmp.eq.s32.totalorder %s20, 1
      %p85 = por %p83, %p84
      %p86 = scmp.ne.s32.totalorder %s75, %s76
      %p87 = scmp.eq.s32.totalorder %s20, 0
      %p88 = por %p86, %p87
      %p89 = scmp.ne.s32.totalorder %s75, %s76
      %p90 = scmp.eq.s32.totalorder %s21, 1
      %p91 = por %p89, %p90
      %p93 = scmp.ne.s32.totalorder %s76, %s92
      %p94 = scmp.eq.s32.totalorder %s21, 0
      %p95 = por %p93, %p94
      %p96 = scmp.le.s32.totalorder 1, %s15
      %p97 = scmp.lt.s32.totalorder %s15, 3
      %p98 = pnand %p96, %p97
      %p99 = pneg %p98
      // Predicated region
      $region9: #{tpu_custom_call.1} parent=5 // pred_check
        _
      $region10: #{tpu_custom_call.1} parent=5 // pred_check_branch
        %101 = sbr.rel (%p98) target = $region12
      $region11: #{tpu_custom_call.1} parent=5 // pred_region
        %s102 = ssub.s32 %s15, 1
        // Predicated region
        $region13: #{tpu_custom_call.1} parent=11 // pred_check
          %p103 = pneg %p62
        $region14: #{tpu_custom_call.1} parent=11 // pred_check_branch
          %105 = sbr.rel (%p103) target = $region16
        $region15: #{tpu_custom_call.1} parent=11 // pred_region
          %s107 = ssub.s32 1024, 1024
          %108 = vsyncadd [#allocation6], %s107
          %s109 = sshll.u32 [#allocation5], 4
          %s110 = int_to_ptr.vmem [resolvable:$true] %s109
          %115 = dma.hbm_to_vmem [thread:$0]  %s1, 1024, %s110, [#allocation6], 64, 64, 4
        $region16: #{tpu_custom_call.1} parent=11 // pred_fallthru
          _
      $region12: #{tpu_custom_call.1} parent=5 // pred_fallthru
        _
      %p116 = scmp.lt.s32.totalorder %s15, 2
      // Predicated region
      $region17: #{tpu_custom_call.1} parent=5 // pred_check
        %p117 = pneg %p116
      $region18: #{tpu_custom_call.1} parent=5 // pred_check_branch
        %119 = sbr.rel (%p117) target = $region20
      $region19: #{tpu_custom_call.1} parent=5 // pred_region
        // Predicated region
        $region21: #{tpu_custom_call.1} parent=19 // pred_check
          %p120 = pneg %p35
        $region22: #{tpu_custom_call.1} parent=19 // pred_check_branch
          %122 = sbr.rel (%p120) target = $region24
        $region23: #{tpu_custom_call.1} parent=19 // pred_region
          %s123 = sand.u32 %s25, 1
          %s124 = scalar_lea.sflag [#allocation3], %s123
          %s125 = sand.u32 %s25, 1
          %s126 = smul.addr %s125, 2048
          %s127 = scalar_lea.vmem [#allocation2], %s126
          %s128 = smul.u32 512, %s15
          %s129 = ssub.s32 525, %s128
          %p130 = scmp.lt.s32.totalorder %s129, 512
          %s131 = scalar_select %p130, %s129, 512
          %s132 = smul.u32 64, %s131
          %s134 = ssub.s32 32768, %s132
          %135 = vsyncadd %s124, %s134
          %p136 = scmp.ne.s32.totalorder 0, %s132
          %s137 = smul.addr %s128, 64
          %s138 = scalar_lea.hbm %s0, %s137
          %s139 = smul.u32 4, %s131
          %s140 = sshll.u32 %s127, 4
          %s141 = int_to_ptr.vmem [resolvable:$true] %s140
          %s142 = sshll.u32 %s139, 4
          %146 = dma.hbm_to_vmem [thread:$0]  (%p136), %s138, %s142, %s141, %s124, 64, 64, 4
        $region24: #{tpu_custom_call.1} parent=19 // pred_fallthru
          _
      $region20: #{tpu_custom_call.1} parent=5 // pred_fallthru
        _
      %p147 = scmp.le.s32.totalorder 1, %s15
      %p148 = scmp.lt.s32.totalorder %s15, 3
      %p149 = pnand %p147, %p148
      %p150 = pneg %p149
      // Predicated region
      $region25: #{tpu_custom_call.1} parent=5 // pred_check
        _
      $region26: #{tpu_custom_call.1} parent=5 // pred_check_branch
        %152 = sbr.rel (%p149) target = $region28
      $region27: #{tpu_custom_call.1} parent=5 // pred_region
        %s153 = ssub.s32 %s15, 1
        %s154 = sand.u32 %s28, 1
        %s155 = scalar_lea.sflag [#allocation3], %s154
        %s156 = sand.u32 %s28, 1
        %s157 = smul.addr %s156, 2048
        %s158 = scalar_lea.vmem [#allocation2], %s157
        // Predicated region
        $region29: #{tpu_custom_call.1} parent=27 // pred_check
          %p159 = pneg %p41
        $region30: #{tpu_custom_call.1} parent=27 // pred_check_branch
          %161 = sbr.rel (%p159) target = $region32
        $region31: #{tpu_custom_call.1} parent=27 // pred_region
          %162 = dma.done %s155, 32768
        $region32: #{tpu_custom_call.1} parent=27 // pred_fallthru
          _
        // Predicated region
        $region33: #{tpu_custom_call.1} parent=27 // pred_check
          %p163 = pneg %p62
        $region34: #{tpu_custom_call.1} parent=27 // pred_check_branch
          %165 = sbr.rel (%p163) target = $region36
        $region35: #{tpu_custom_call.1} parent=27 // pred_region
          %166 = dma.done [#allocation6], 1024
        $region36: #{tpu_custom_call.1} parent=27 // pred_fallthru
          _
        %s167 = sand.u32 %s28, 1
        %s168 = scalar_lea.sflag [#allocation3], %s167
        %s169 = sand.u32 %s28, 1
        %s170 = smul.addr %s169, 2048
        %s171 = scalar_lea.vmem [#allocation2], %s170
        %p172 = pneg %p41
        %p173 = pneg %p38
        %p174 = pneg %p62
        %p175 = pneg %p59
        %p176 = pneg %p88
        %p177 = pneg %p85
        %s178 = sand.u32 %s75, 1
        %s179 = scalar_lea.sflag [#allocation4], %s178
        %s180 = sand.u32 %s75, 1
        %s181 = smul.addr %s180, 4096
        %s182 = scalar_lea.vmem [#allocation7], %s181
        %s183 = smul.u32 512, %s20
        %s184 = ssub.s32 525, %s183
        %p185 = scmp.lt.s32.totalorder %s184, 512
        %s186 = scalar_select %p185, %s184, 512
        %s187 = smul.u32 64, %s186
        %s188 = smul.u32 512, %s20
        %s189 = ssub.s32 525, %s188
        %p190 = scmp.lt.s32.totalorder %s189, 512
        %s191 = scalar_select %p190, %s189, 512
        %s192 = smul.u32 128, %s191
        %v194 = vld [vmem:[%s158] sm:$0xf]
        %v195 = vld [vmem:[%s158 + $0x4] sm:$0xf]
        %v196 = vld [vmem:[%s158 + $0x8] sm:$0xf]
        %v197 = vld [vmem:[%s158 + $0xc] sm:$0xf]
        %v198 = vld [vmem:[%s158 + $0x10] sm:$0xf]
        %v199 = vld [vmem:[%s158 + $0x14] sm:$0xf]
        %v200 = vld [vmem:[%s158 + $0x18] sm:$0xf]
        %v201 = vld [vmem:[%s158 + $0x1c] sm:$0xf]
        %v202 = vld [vmem:[%s158 + $0x20] sm:$0xf]
        %v203 = vld [vmem:[%s158 + $0x24] sm:$0xf]
        %v204 = vld [vmem:[%s158 + $0x28] sm:$0xf]
        %v205 = vld [vmem:[%s158 + $0x2c] sm:$0xf]
        %v206 = vld [vmem:[%s158 + $0x30] sm:$0xf]
        %v207 = vld [vmem:[%s158 + $0x34] sm:$0xf]
        %v208 = vld [vmem:[%s158 + $0x38] sm:$0xf]
        %v209 = vld [vmem:[%s158 + $0x3c] sm:$0xf]
        %v210 = vld [vmem:[%s158 + $0x40] sm:$0xf]
        %v211 = vld [vmem:[%s158 + $0x44] sm:$0xf]
        %v212 = vld [vmem:[%s158 + $0x48] sm:$0xf]
        %v213 = vld [vmem:[%s158 + $0x4c] sm:$0xf]
        %v214 = vld [vmem:[%s158 + $0x50] sm:$0xf]
        %v215 = vld [vmem:[%s158 + $0x54] sm:$0xf]
        %v216 = vld [vmem:[%s158 + $0x58] sm:$0xf]
        %v217 = vld [vmem:[%s158 + $0x5c] sm:$0xf]
        %v218 = vld [vmem:[%s158 + $0x60] sm:$0xf]
        %v219 = vld [vmem:[%s158 + $0x64] sm:$0xf]
        %v220 = vld [vmem:[%s158 + $0x68] sm:$0xf]
        %v221 = vld [vmem:[%s158 + $0x6c] sm:$0xf]
        %v222 = vld [vmem:[%s158 + $0x70] sm:$0xf]
        %v223 = vld [vmem:[%s158 + $0x74] sm:$0xf]
        %v224 = vld [vmem:[%s158 + $0x78] sm:$0xf]
        %v225 = vld [vmem:[%s158 + $0x7c] sm:$0xf]
        %v226 = vld [vmem:[%s158 + $0x80] sm:$0xf]
        %v227 = vld [vmem:[%s158 + $0x84] sm:$0xf]
        %v228 = vld [vmem:[%s158 + $0x88] sm:$0xf]
        %v229 = vld [vmem:[%s158 + $0x8c] sm:$0xf]
        %v230 = vld [vmem:[%s158 + $0x90] sm:$0xf]
        %v231 = vld [vmem:[%s158 + $0x94] sm:$0xf]
        %v232 = vld [vmem:[%s158 + $0x98] sm:$0xf]
        %v233 = vld [vmem:[%s158 + $0x9c] sm:$0xf]
        %v234 = vld [vmem:[%s158 + $0xa0] sm:$0xf]
        %v235 = vld [vmem:[%s158 + $0xa4] sm:$0xf]
        %v236 = vld [vmem:[%s158 + $0xa8] sm:$0xf]
        %v237 = vld [vmem:[%s158 + $0xac] sm:$0xf]
        %v238 = vld [vmem:[%s158 + $0xb0] sm:$0xf]
        %v239 = vld [vmem:[%s158 + $0xb4] sm:$0xf]
        %v240 = vld [vmem:[%s158 + $0xb8] sm:$0xf]
        %v241 = vld [vmem:[%s158 + $0xbc] sm:$0xf]
        %v242 = vld [vmem:[%s158 + $0xc0] sm:$0xf]
        %v243 = vld [vmem:[%s158 + $0xc4] sm:$0xf]
        %v244 = vld [vmem:[%s158 + $0xc8] sm:$0xf]
        %v245 = vld [vmem:[%s158 + $0xcc] sm:$0xf]
        %v246 = vld [vmem:[%s158 + $0xd0] sm:$0xf]
        %v247 = vld [vmem:[%s158 + $0xd4] sm:$0xf]
        %v248 = vld [vmem:[%s158 + $0xd8] sm:$0xf]
        %v249 = vld [vmem:[%s158 + $0xdc] sm:$0xf]
        %v250 = vld [vmem:[%s158 + $0xe0] sm:$0xf]
        %v251 = vld [vmem:[%s158 + $0xe4] sm:$0xf]
        %v252 = vld [vmem:[%s158 + $0xe8] sm:$0xf]
        %v253 = vld [vmem:[%s158 + $0xec] sm:$0xf]
        %v254 = vld [vmem:[%s158 + $0xf0] sm:$0xf]
        %v255 = vld [vmem:[%s158 + $0xf4] sm:$0xf]
        %v256 = vld [vmem:[%s158 + $0xf8] sm:$0xf]
        %v257 = vld [vmem:[%s158 + $0xfc] sm:$0xf]
        %v258 = vld [vmem:[%s158 + $0x100] sm:$0xf]
        %v259 = vld [vmem:[%s158 + $0x104] sm:$0xf]
        %v260 = vld [vmem:[%s158 + $0x108] sm:$0xf]
        %v261 = vld [vmem:[%s158 + $0x10c] sm:$0xf]
        %v262 = vld [vmem:[%s158 + $0x110] sm:$0xf]
        %v263 = vld [vmem:[%s158 + $0x114] sm:$0xf]
        %v264 = vld [vmem:[%s158 + $0x118] sm:$0xf]
        %v265 = vld [vmem:[%s158 + $0x11c] sm:$0xf]
        %v266 = vld [vmem:[%s158 + $0x120] sm:$0xf]
        %v267 = vld [vmem:[%s158 + $0x124] sm:$0xf]
        %v268 = vld [vmem:[%s158 + $0x128] sm:$0xf]
        %v269 = vld [vmem:[%s158 + $0x12c] sm:$0xf]
        %v270 = vld [vmem:[%s158 + $0x130] sm:$0xf]
        %v271 = vld [vmem:[%s158 + $0x134] sm:$0xf]
        %v272 = vld [vmem:[%s158 + $0x138] sm:$0xf]
        %v273 = vld [vmem:[%s158 + $0x13c] sm:$0xf]
        %v274 = vld [vmem:[%s158 + $0x140] sm:$0xf]
        %v275 = vld [vmem:[%s158 + $0x144] sm:$0xf]
        %v276 = vld [vmem:[%s158 + $0x148] sm:$0xf]
        %v277 = vld [vmem:[%s158 + $0x14c] sm:$0xf]
        %v278 = vld [vmem:[%s158 + $0x150] sm:$0xf]
        %v279 = vld [vmem:[%s158 + $0x154] sm:$0xf]
        %v280 = vld [vmem:[%s158 + $0x158] sm:$0xf]
        %v281 = vld [vmem:[%s158 + $0x15c] sm:$0xf]
        %v282 = vld [vmem:[%s158 + $0x160] sm:$0xf]
        %v283 = vld [vmem:[%s158 + $0x164] sm:$0xf]
        %v284 = vld [vmem:[%s158 + $0x168] sm:$0xf]
        %v285 = vld [vmem:[%s158 + $0x16c] sm:$0xf]
        %v286 = vld [vmem:[%s158 + $0x170] sm:$0xf]
        %v287 = vld [vmem:[%s158 + $0x174] sm:$0xf]
        %v288 = vld [vmem:[%s158 + $0x178] sm:$0xf]
        %v289 = vld [vmem:[%s158 + $0x17c] sm:$0xf]
        %v290 = vld [vmem:[%s158 + $0x180] sm:$0xf]
        %v291 = vld [vmem:[%s158 + $0x184] sm:$0xf]
        %v292 = vld [vmem:[%s158 + $0x188] sm:$0xf]
        %v293 = vld [vmem:[%s158 + $0x18c] sm:$0xf]
        %v294 = vld [vmem:[%s158 + $0x190] sm:$0xf]
        %v295 = vld [vmem:[%s158 + $0x194] sm:$0xf]
        %v296 = vld [vmem:[%s158 + $0x198] sm:$0xf]
        %v297 = vld [vmem:[%s158 + $0x19c] sm:$0xf]
        %v298 = vld [vmem:[%s158 + $0x1a0] sm:$0xf]
        %v299 = vld [vmem:[%s158 + $0x1a4] sm:$0xf]
        %v300 = vld [vmem:[%s158 + $0x1a8] sm:$0xf]
        %v301 = vld [vmem:[%s158 + $0x1ac] sm:$0xf]
        %v302 = vld [vmem:[%s158 + $0x1b0] sm:$0xf]
        %v303 = vld [vmem:[%s158 + $0x1b4] sm:$0xf]
        %v304 = vld [vmem:[%s158 + $0x1b8] sm:$0xf]
        %v305 = vld [vmem:[%s158 + $0x1bc] sm:$0xf]
        %v306 = vld [vmem:[%s158 + $0x1c0] sm:$0xf]
        %v307 = vld [vmem:[%s158 + $0x1c4] sm:$0xf]
        %v308 = vld [vmem:[%s158 + $0x1c8] sm:$0xf]
        %v309 = vld [vmem:[%s158 + $0x1cc] sm:$0xf]
        %v310 = vld [vmem:[%s158 + $0x1d0] sm:$0xf]
        %v311 = vld [vmem:[%s158 + $0x1d4] sm:$0xf]
        %v312 = vld [vmem:[%s158 + $0x1d8] sm:$0xf]
        %v313 = vld [vmem:[%s158 + $0x1dc] sm:$0xf]
        %v314 = vld [vmem:[%s158 + $0x1e0] sm:$0xf]
        %v315 = vld [vmem:[%s158 + $0x1e4] sm:$0xf]
        %v316 = vld [vmem:[%s158 + $0x1e8] sm:$0xf]
        %v317 = vld [vmem:[%s158 + $0x1ec] sm:$0xf]
        %v318 = vld [vmem:[%s158 + $0x1f0] sm:$0xf]
        %v319 = vld [vmem:[%s158 + $0x1f4] sm:$0xf]
        %v320 = vld [vmem:[%s158 + $0x1f8] sm:$0xf]
        %v321 = vld [vmem:[%s158 + $0x1fc] sm:$0xf]
        %v322 = vld [vmem:[%s158 + $0x200] sm:$0xf]
        %v323 = vld [vmem:[%s158 + $0x204] sm:$0xf]
        %v324 = vld [vmem:[%s158 + $0x208] sm:$0xf]
        %v325 = vld [vmem:[%s158 + $0x20c] sm:$0xf]
        %v326 = vld [vmem:[%s158 + $0x210] sm:$0xf]
        %v327 = vld [vmem:[%s158 + $0x214] sm:$0xf]
        %v328 = vld [vmem:[%s158 + $0x218] sm:$0xf]
        %v329 = vld [vmem:[%s158 + $0x21c] sm:$0xf]
        %v330 = vld [vmem:[%s158 + $0x220] sm:$0xf]
        %v331 = vld [vmem:[%s158 + $0x224] sm:$0xf]
        %v332 = vld [vmem:[%s158 + $0x228] sm:$0xf]
        %v333 = vld [vmem:[%s158 + $0x22c] sm:$0xf]
        %v334 = vld [vmem:[%s158 + $0x230] sm:$0xf]
        %v335 = vld [vmem:[%s158 + $0x234] sm:$0xf]
        %v336 = vld [vmem:[%s158 + $0x238] sm:$0xf]
        %v337 = vld [vmem:[%s158 + $0x23c] sm:$0xf]
        %v338 = vld [vmem:[%s158 + $0x240] sm:$0xf]
        %v339 = vld [vmem:[%s158 + $0x244] sm:$0xf]
        %v340 = vld [vmem:[%s158 + $0x248] sm:$0xf]
        %v341 = vld [vmem:[%s158 + $0x24c] sm:$0xf]
        %v342 = vld [vmem:[%s158 + $0x250] sm:$0xf]
        %v343 = vld [vmem:[%s158 + $0x254] sm:$0xf]
        %v344 = vld [vmem:[%s158 + $0x258] sm:$0xf]
        %v345 = vld [vmem:[%s158 + $0x25c] sm:$0xf]
        %v346 = vld [vmem:[%s158 + $0x260] sm:$0xf]
        %v347 = vld [vmem:[%s158 + $0x264] sm:$0xf]
        %v348 = vld [vmem:[%s158 + $0x268] sm:$0xf]
        %v349 = vld [vmem:[%s158 + $0x26c] sm:$0xf]
        %v350 = vld [vmem:[%s158 + $0x270] sm:$0xf]
        %v351 = vld [vmem:[%s158 + $0x274] sm:$0xf]
        %v352 = vld [vmem:[%s158 + $0x278] sm:$0xf]
        %v353 = vld [vmem:[%s158 + $0x27c] sm:$0xf]
        %v354 = vld [vmem:[%s158 + $0x280] sm:$0xf]
        %v355 = vld [vmem:[%s158 + $0x284] sm:$0xf]
        %v356 = vld [vmem:[%s158 + $0x288] sm:$0xf]
        %v357 = vld [vmem:[%s158 + $0x28c] sm:$0xf]
        %v358 = vld [vmem:[%s158 + $0x290] sm:$0xf]
        %v359 = vld [vmem:[%s158 + $0x294] sm:$0xf]
        %v360 = vld [vmem:[%s158 + $0x298] sm:$0xf]
        %v361 = vld [vmem:[%s158 + $0x29c] sm:$0xf]
        %v362 = vld [vmem:[%s158 + $0x2a0] sm:$0xf]
        %v363 = vld [vmem:[%s158 + $0x2a4] sm:$0xf]
        %v364 = vld [vmem:[%s158 + $0x2a8] sm:$0xf]
        %v365 = vld [vmem:[%s158 + $0x2ac] sm:$0xf]
        %v366 = vld [vmem:[%s158 + $0x2b0] sm:$0xf]
        %v367 = vld [vmem:[%s158 + $0x2b4] sm:$0xf]
        %v368 = vld [vmem:[%s158 + $0x2b8] sm:$0xf]
        %v369 = vld [vmem:[%s158 + $0x2bc] sm:$0xf]
        %v370 = vld [vmem:[%s158 + $0x2c0] sm:$0xf]
        %v371 = vld [vmem:[%s158 + $0x2c4] sm:$0xf]
        %v372 = vld [vmem:[%s158 + $0x2c8] sm:$0xf]
        %v373 = vld [vmem:[%s158 + $0x2cc] sm:$0xf]
        %v374 = vld [vmem:[%s158 + $0x2d0] sm:$0xf]
        %v375 = vld [vmem:[%s158 + $0x2d4] sm:$0xf]
        %v376 = vld [vmem:[%s158 + $0x2d8] sm:$0xf]
        %v377 = vld [vmem:[%s158 + $0x2dc] sm:$0xf]
        %v378 = vld [vmem:[%s158 + $0x2e0] sm:$0xf]
        %v379 = vld [vmem:[%s158 + $0x2e4] sm:$0xf]
        %v380 = vld [vmem:[%s158 + $0x2e8] sm:$0xf]
        %v381 = vld [vmem:[%s158 + $0x2ec] sm:$0xf]
        %v382 = vld [vmem:[%s158 + $0x2f0] sm:$0xf]
        %v383 = vld [vmem:[%s158 + $0x2f4] sm:$0xf]
        %v384 = vld [vmem:[%s158 + $0x2f8] sm:$0xf]
        %v385 = vld [vmem:[%s158 + $0x2fc] sm:$0xf]
        %v386 = vld [vmem:[%s158 + $0x300] sm:$0xf]
        %v387 = vld [vmem:[%s158 + $0x304] sm:$0xf]
        %v388 = vld [vmem:[%s158 + $0x308] sm:$0xf]
        %v389 = vld [vmem:[%s158 + $0x30c] sm:$0xf]
        %v390 = vld [vmem:[%s158 + $0x310] sm:$0xf]
        %v391 = vld [vmem:[%s158 + $0x314] sm:$0xf]
        %v392 = vld [vmem:[%s158 + $0x318] sm:$0xf]
        %v393 = vld [vmem:[%s158 + $0x31c] sm:$0xf]
        %v394 = vld [vmem:[%s158 + $0x320] sm:$0xf]
        %v395 = vld [vmem:[%s158 + $0x324] sm:$0xf]
        %v396 = vld [vmem:[%s158 + $0x328] sm:$0xf]
        %v397 = vld [vmem:[%s158 + $0x32c] sm:$0xf]
        %v398 = vld [vmem:[%s158 + $0x330] sm:$0xf]
        %v399 = vld [vmem:[%s158 + $0x334] sm:$0xf]
        %v400 = vld [vmem:[%s158 + $0x338] sm:$0xf]
        %v401 = vld [vmem:[%s158 + $0x33c] sm:$0xf]
        %v402 = vld [vmem:[%s158 + $0x340] sm:$0xf]
        %v403 = vld [vmem:[%s158 + $0x344] sm:$0xf]
        %v404 = vld [vmem:[%s158 + $0x348] sm:$0xf]
        %v405 = vld [vmem:[%s158 + $0x34c] sm:$0xf]
        %v406 = vld [vmem:[%s158 + $0x350] sm:$0xf]
        %v407 = vld [vmem:[%s158 + $0x354] sm:$0xf]
        %v408 = vld [vmem:[%s158 + $0x358] sm:$0xf]
        %v409 = vld [vmem:[%s158 + $0x35c] sm:$0xf]
        %v410 = vld [vmem:[%s158 + $0x360] sm:$0xf]
        %v411 = vld [vmem:[%s158 + $0x364] sm:$0xf]
        %v412 = vld [vmem:[%s158 + $0x368] sm:$0xf]
        %v413 = vld [vmem:[%s158 + $0x36c] sm:$0xf]
        %v414 = vld [vmem:[%s158 + $0x370] sm:$0xf]
        %v415 = vld [vmem:[%s158 + $0x374] sm:$0xf]
        %v416 = vld [vmem:[%s158 + $0x378] sm:$0xf]
        %v417 = vld [vmem:[%s158 + $0x37c] sm:$0xf]
        %v418 = vld [vmem:[%s158 + $0x380] sm:$0xf]
        %v419 = vld [vmem:[%s158 + $0x384] sm:$0xf]
        %v420 = vld [vmem:[%s158 + $0x388] sm:$0xf]
        %v421 = vld [vmem:[%s158 + $0x38c] sm:$0xf]
        %v422 = vld [vmem:[%s158 + $0x390] sm:$0xf]
        %v423 = vld [vmem:[%s158 + $0x394] sm:$0xf]
        %v424 = vld [vmem:[%s158 + $0x398] sm:$0xf]
        %v425 = vld [vmem:[%s158 + $0x39c] sm:$0xf]
        %v426 = vld [vmem:[%s158 + $0x3a0] sm:$0xf]
        %v427 = vld [vmem:[%s158 + $0x3a4] sm:$0xf]
        %v428 = vld [vmem:[%s158 + $0x3a8] sm:$0xf]
        %v429 = vld [vmem:[%s158 + $0x3ac] sm:$0xf]
        %v430 = vld [vmem:[%s158 + $0x3b0] sm:$0xf]
        %v431 = vld [vmem:[%s158 + $0x3b4] sm:$0xf]
        %v432 = vld [vmem:[%s158 + $0x3b8] sm:$0xf]
        %v433 = vld [vmem:[%s158 + $0x3bc] sm:$0xf]
        %v434 = vld [vmem:[%s158 + $0x3c0] sm:$0xf]
        %v435 = vld [vmem:[%s158 + $0x3c4] sm:$0xf]
        %v436 = vld [vmem:[%s158 + $0x3c8] sm:$0xf]
        %v437 = vld [vmem:[%s158 + $0x3cc] sm:$0xf]
        %v438 = vld [vmem:[%s158 + $0x3d0] sm:$0xf]
        %v439 = vld [vmem:[%s158 + $0x3d4] sm:$0xf]
        %v440 = vld [vmem:[%s158 + $0x3d8] sm:$0xf]
        %v441 = vld [vmem:[%s158 + $0x3dc] sm:$0xf]
        %v442 = vld [vmem:[%s158 + $0x3e0] sm:$0xf]
        %v443 = vld [vmem:[%s158 + $0x3e4] sm:$0xf]
        %v444 = vld [vmem:[%s158 + $0x3e8] sm:$0xf]
        %v445 = vld [vmem:[%s158 + $0x3ec] sm:$0xf]
        %v446 = vld [vmem:[%s158 + $0x3f0] sm:$0xf]
        %v447 = vld [vmem:[%s158 + $0x3f4] sm:$0xf]
        %v448 = vld [vmem:[%s158 + $0x3f8] sm:$0xf]
        %v449 = vld [vmem:[%s158 + $0x3fc] sm:$0xf]
        %v450 = vld [vmem:[%s158 + $0x400] sm:$0xf]
        %v451 = vld [vmem:[%s158 + $0x404] sm:$0xf]
        %v452 = vld [vmem:[%s158 + $0x408] sm:$0xf]
        %v453 = vld [vmem:[%s158 + $0x40c] sm:$0xf]
        %v454 = vld [vmem:[%s158 + $0x410] sm:$0xf]
        %v455 = vld [vmem:[%s158 + $0x414] sm:$0xf]
        %v456 = vld [vmem:[%s158 + $0x418] sm:$0xf]
        %v457 = vld [vmem:[%s158 + $0x41c] sm:$0xf]
        %v458 = vld [vmem:[%s158 + $0x420] sm:$0xf]
        %v459 = vld [vmem:[%s158 + $0x424] sm:$0xf]
        %v460 = vld [vmem:[%s158 + $0x428] sm:$0xf]
        %v461 = vld [vmem:[%s158 + $0x42c] sm:$0xf]
        %v462 = vld [vmem:[%s158 + $0x430] sm:$0xf]
        %v463 = vld [vmem:[%s158 + $0x434] sm:$0xf]
        %v464 = vld [vmem:[%s158 + $0x438] sm:$0xf]
        %v465 = vld [vmem:[%s158 + $0x43c] sm:$0xf]
        %v466 = vld [vmem:[%s158 + $0x440] sm:$0xf]
        %v467 = vld [vmem:[%s158 + $0x444] sm:$0xf]
        %v468 = vld [vmem:[%s158 + $0x448] sm:$0xf]
        %v469 = vld [vmem:[%s158 + $0x44c] sm:$0xf]
        %v470 = vld [vmem:[%s158 + $0x450] sm:$0xf]
        %v471 = vld [vmem:[%s158 + $0x454] sm:$0xf]
        %v472 = vld [vmem:[%s158 + $0x458] sm:$0xf]
        %v473 = vld [vmem:[%s158 + $0x45c] sm:$0xf]
        %v474 = vld [vmem:[%s158 + $0x460] sm:$0xf]
        %v475 = vld [vmem:[%s158 + $0x464] sm:$0xf]
        %v476 = vld [vmem:[%s158 + $0x468] sm:$0xf]
        %v477 = vld [vmem:[%s158 + $0x46c] sm:$0xf]
        %v478 = vld [vmem:[%s158 + $0x470] sm:$0xf]
        %v479 = vld [vmem:[%s158 + $0x474] sm:$0xf]
        %v480 = vld [vmem:[%s158 + $0x478] sm:$0xf]
        %v481 = vld [vmem:[%s158 + $0x47c] sm:$0xf]
        %v482 = vld [vmem:[%s158 + $0x480] sm:$0xf]
        %v483 = vld [vmem:[%s158 + $0x484] sm:$0xf]
        %v484 = vld [vmem:[%s158 + $0x488] sm:$0xf]
        %v485 = vld [vmem:[%s158 + $0x48c] sm:$0xf]
        %v486 = vld [vmem:[%s158 + $0x490] sm:$0xf]
        %v487 = vld [vmem:[%s158 + $0x494] sm:$0xf]
        %v488 = vld [vmem:[%s158 + $0x498] sm:$0xf]
        %v489 = vld [vmem:[%s158 + $0x49c] sm:$0xf]
        %v490 = vld [vmem:[%s158 + $0x4a0] sm:$0xf]
        %v491 = vld [vmem:[%s158 + $0x4a4] sm:$0xf]
        %v492 = vld [vmem:[%s158 + $0x4a8] sm:$0xf]
        %v493 = vld [vmem:[%s158 + $0x4ac] sm:$0xf]
        %v494 = vld [vmem:[%s158 + $0x4b0] sm:$0xf]
        %v495 = vld [vmem:[%s158 + $0x4b4] sm:$0xf]
        %v496 = vld [vmem:[%s158 + $0x4b8] sm:$0xf]
        %v497 = vld [vmem:[%s158 + $0x4bc] sm:$0xf]
        %v498 = vld [vmem:[%s158 + $0x4c0] sm:$0xf]
        %v499 = vld [vmem:[%s158 + $0x4c4] sm:$0xf]
        %v500 = vld [vmem:[%s158 + $0x4c8] sm:$0xf]
        %v501 = vld [vmem:[%s158 + $0x4cc] sm:$0xf]
        %v502 = vld [vmem:[%s158 + $0x4d0] sm:$0xf]
        %v503 = vld [vmem:[%s158 + $0x4d4] sm:$0xf]
        %v504 = vld [vmem:[%s158 + $0x4d8] sm:$0xf]
        %v505 = vld [vmem:[%s158 + $0x4dc] sm:$0xf]
        %v506 = vld [vmem:[%s158 + $0x4e0] sm:$0xf]
        %v507 = vld [vmem:[%s158 + $0x4e4] sm:$0xf]
        %v508 = vld [vmem:[%s158 + $0x4e8] sm:$0xf]
        %v509 = vld [vmem:[%s158 + $0x4ec] sm:$0xf]
        %v510 = vld [vmem:[%s158 + $0x4f0] sm:$0xf]
        %v511 = vld [vmem:[%s158 + $0x4f4] sm:$0xf]
        %v512 = vld [vmem:[%s158 + $0x4f8] sm:$0xf]
        %v513 = vld [vmem:[%s158 + $0x4fc] sm:$0xf]
        %v514 = vld [vmem:[%s158 + $0x500] sm:$0xf]
        %v515 = vld [vmem:[%s158 + $0x504] sm:$0xf]
        %v516 = vld [vmem:[%s158 + $0x508] sm:$0xf]
        %v517 = vld [vmem:[%s158 + $0x50c] sm:$0xf]
        %v518 = vld [vmem:[%s158 + $0x510] sm:$0xf]
        %v519 = vld [vmem:[%s158 + $0x514] sm:$0xf]
        %v520 = vld [vmem:[%s158 + $0x518] sm:$0xf]
        %v521 = vld [vmem:[%s158 + $0x51c] sm:$0xf]
        %v522 = vld [vmem:[%s158 + $0x520] sm:$0xf]
        %v523 = vld [vmem:[%s158 + $0x524] sm:$0xf]
        %v524 = vld [vmem:[%s158 + $0x528] sm:$0xf]
        %v525 = vld [vmem:[%s158 + $0x52c] sm:$0xf]
        %v526 = vld [vmem:[%s158 + $0x530] sm:$0xf]
        %v527 = vld [vmem:[%s158 + $0x534] sm:$0xf]
        %v528 = vld [vmem:[%s158 + $0x538] sm:$0xf]
        %v529 = vld [vmem:[%s158 + $0x53c] sm:$0xf]
        %v530 = vld [vmem:[%s158 + $0x540] sm:$0xf]
        %v531 = vld [vmem:[%s158 + $0x544] sm:$0xf]
        %v532 = vld [vmem:[%s158 + $0x548] sm:$0xf]
        %v533 = vld [vmem:[%s158 + $0x54c] sm:$0xf]
        %v534 = vld [vmem:[%s158 + $0x550] sm:$0xf]
        %v535 = vld [vmem:[%s158 + $0x554] sm:$0xf]
        %v536 = vld [vmem:[%s158 + $0x558] sm:$0xf]
        %v537 = vld [vmem:[%s158 + $0x55c] sm:$0xf]
        %v538 = vld [vmem:[%s158 + $0x560] sm:$0xf]
        %v539 = vld [vmem:[%s158 + $0x564] sm:$0xf]
        %v540 = vld [vmem:[%s158 + $0x568] sm:$0xf]
        %v541 = vld [vmem:[%s158 + $0x56c] sm:$0xf]
        %v542 = vld [vmem:[%s158 + $0x570] sm:$0xf]
        %v543 = vld [vmem:[%s158 + $0x574] sm:$0xf]
        %v544 = vld [vmem:[%s158 + $0x578] sm:$0xf]
        %v545 = vld [vmem:[%s158 + $0x57c] sm:$0xf]
        %v546 = vld [vmem:[%s158 + $0x580] sm:$0xf]
        %v547 = vld [vmem:[%s158 + $0x584] sm:$0xf]
        %v548 = vld [vmem:[%s158 + $0x588] sm:$0xf]
        %v549 = vld [vmem:[%s158 + $0x58c] sm:$0xf]
        %v550 = vld [vmem:[%s158 + $0x590] sm:$0xf]
        %v551 = vld [vmem:[%s158 + $0x594] sm:$0xf]
        %v552 = vld [vmem:[%s158 + $0x598] sm:$0xf]
        %v553 = vld [vmem:[%s158 + $0x59c] sm:$0xf]
        %v554 = vld [vmem:[%s158 + $0x5a0] sm:$0xf]
        %v555 = vld [vmem:[%s158 + $0x5a4] sm:$0xf]
        %v556 = vld [vmem:[%s158 + $0x5a8] sm:$0xf]
        %v557 = vld [vmem:[%s158 + $0x5ac] sm:$0xf]
        %v558 = vld [vmem:[%s158 + $0x5b0] sm:$0xf]
        %v559 = vld [vmem:[%s158 + $0x5b4] sm:$0xf]
        %v560 = vld [vmem:[%s158 + $0x5b8] sm:$0xf]
        %v561 = vld [vmem:[%s158 + $0x5bc] sm:$0xf]
        %v562 = vld [vmem:[%s158 + $0x5c0] sm:$0xf]
        %v563 = vld [vmem:[%s158 + $0x5c4] sm:$0xf]
        %v564 = vld [vmem:[%s158 + $0x5c8] sm:$0xf]
        %v565 = vld [vmem:[%s158 + $0x5cc] sm:$0xf]
        %v566 = vld [vmem:[%s158 + $0x5d0] sm:$0xf]
        %v567 = vld [vmem:[%s158 + $0x5d4] sm:$0xf]
        %v568 = vld [vmem:[%s158 + $0x5d8] sm:$0xf]
        %v569 = vld [vmem:[%s158 + $0x5dc] sm:$0xf]
        %v570 = vld [vmem:[%s158 + $0x5e0] sm:$0xf]
        %v571 = vld [vmem:[%s158 + $0x5e4] sm:$0xf]
        %v572 = vld [vmem:[%s158 + $0x5e8] sm:$0xf]
        %v573 = vld [vmem:[%s158 + $0x5ec] sm:$0xf]
        %v574 = vld [vmem:[%s158 + $0x5f0] sm:$0xf]
        %v575 = vld [vmem:[%s158 + $0x5f4] sm:$0xf]
        %v576 = vld [vmem:[%s158 + $0x5f8] sm:$0xf]
        %v577 = vld [vmem:[%s158 + $0x5fc] sm:$0xf]
        %v578 = vld [vmem:[%s158 + $0x600] sm:$0xf]
        %v579 = vld [vmem:[%s158 + $0x604] sm:$0xf]
        %v580 = vld [vmem:[%s158 + $0x608] sm:$0xf]
        %v581 = vld [vmem:[%s158 + $0x60c] sm:$0xf]
        %v582 = vld [vmem:[%s158 + $0x610] sm:$0xf]
        %v583 = vld [vmem:[%s158 + $0x614] sm:$0xf]
        %v584 = vld [vmem:[%s158 + $0x618] sm:$0xf]
        %v585 = vld [vmem:[%s158 + $0x61c] sm:$0xf]
        %v586 = vld [vmem:[%s158 + $0x620] sm:$0xf]
        %v587 = vld [vmem:[%s158 + $0x624] sm:$0xf]
        %v588 = vld [vmem:[%s158 + $0x628] sm:$0xf]
        %v589 = vld [vmem:[%s158 + $0x62c] sm:$0xf]
        %v590 = vld [vmem:[%s158 + $0x630] sm:$0xf]
        %v591 = vld [vmem:[%s158 + $0x634] sm:$0xf]
        %v592 = vld [vmem:[%s158 + $0x638] sm:$0xf]
        %v593 = vld [vmem:[%s158 + $0x63c] sm:$0xf]
        %v594 = vld [vmem:[%s158 + $0x640] sm:$0xf]
        %v595 = vld [vmem:[%s158 + $0x644] sm:$0xf]
        %v596 = vld [vmem:[%s158 + $0x648] sm:$0xf]
        %v597 = vld [vmem:[%s158 + $0x64c] sm:$0xf]
        %v598 = vld [vmem:[%s158 + $0x650] sm:$0xf]
        %v599 = vld [vmem:[%s158 + $0x654] sm:$0xf]
        %v600 = vld [vmem:[%s158 + $0x658] sm:$0xf]
        %v601 = vld [vmem:[%s158 + $0x65c] sm:$0xf]
        %v602 = vld [vmem:[%s158 + $0x660] sm:$0xf]
        %v603 = vld [vmem:[%s158 + $0x664] sm:$0xf]
        %v604 = vld [vmem:[%s158 + $0x668] sm:$0xf]
        %v605 = vld [vmem:[%s158 + $0x66c] sm:$0xf]
        %v606 = vld [vmem:[%s158 + $0x670] sm:$0xf]
        %v607 = vld [vmem:[%s158 + $0x674] sm:$0xf]
        %v608 = vld [vmem:[%s158 + $0x678] sm:$0xf]
        %v609 = vld [vmem:[%s158 + $0x67c] sm:$0xf]
        %v610 = vld [vmem:[%s158 + $0x680] sm:$0xf]
        %v611 = vld [vmem:[%s158 + $0x684] sm:$0xf]
        %v612 = vld [vmem:[%s158 + $0x688] sm:$0xf]
        %v613 = vld [vmem:[%s158 + $0x68c] sm:$0xf]
        %v614 = vld [vmem:[%s158 + $0x690] sm:$0xf]
        %v615 = vld [vmem:[%s158 + $0x694] sm:$0xf]
        %v616 = vld [vmem:[%s158 + $0x698] sm:$0xf]
        %v617 = vld [vmem:[%s158 + $0x69c] sm:$0xf]
        %v618 = vld [vmem:[%s158 + $0x6a0] sm:$0xf]
        %v619 = vld [vmem:[%s158 + $0x6a4] sm:$0xf]
        %v620 = vld [vmem:[%s158 + $0x6a8] sm:$0xf]
        %v621 = vld [vmem:[%s158 + $0x6ac] sm:$0xf]
        %v622 = vld [vmem:[%s158 + $0x6b0] sm:$0xf]
        %v623 = vld [vmem:[%s158 + $0x6b4] sm:$0xf]
        %v624 = vld [vmem:[%s158 + $0x6b8] sm:$0xf]
        %v625 = vld [vmem:[%s158 + $0x6bc] sm:$0xf]
        %v626 = vld [vmem:[%s158 + $0x6c0] sm:$0xf]
        %v627 = vld [vmem:[%s158 + $0x6c4] sm:$0xf]
        %v628 = vld [vmem:[%s158 + $0x6c8] sm:$0xf]
        %v629 = vld [vmem:[%s158 + $0x6cc] sm:$0xf]
        %v630 = vld [vmem:[%s158 + $0x6d0] sm:$0xf]
        %v631 = vld [vmem:[%s158 + $0x6d4] sm:$0xf]
        %v632 = vld [vmem:[%s158 + $0x6d8] sm:$0xf]
        %v633 = vld [vmem:[%s158 + $0x6dc] sm:$0xf]
        %v634 = vld [vmem:[%s158 + $0x6e0] sm:$0xf]
        %v635 = vld [vmem:[%s158 + $0x6e4] sm:$0xf]
        %v636 = vld [vmem:[%s158 + $0x6e8] sm:$0xf]
        %v637 = vld [vmem:[%s158 + $0x6ec] sm:$0xf]
        %v638 = vld [vmem:[%s158 + $0x6f0] sm:$0xf]
        %v639 = vld [vmem:[%s158 + $0x6f4] sm:$0xf]
        %v640 = vld [vmem:[%s158 + $0x6f8] sm:$0xf]
        %v641 = vld [vmem:[%s158 + $0x6fc] sm:$0xf]
        %v642 = vld [vmem:[%s158 + $0x700] sm:$0xf]
        %v643 = vld [vmem:[%s158 + $0x704] sm:$0xf]
        %v644 = vld [vmem:[%s158 + $0x708] sm:$0xf]
        %v645 = vld [vmem:[%s158 + $0x70c] sm:$0xf]
        %v646 = vld [vmem:[%s158 + $0x710] sm:$0xf]
        %v647 = vld [vmem:[%s158 + $0x714] sm:$0xf]
        %v648 = vld [vmem:[%s158 + $0x718] sm:$0xf]
        %v649 = vld [vmem:[%s158 + $0x71c] sm:$0xf]
        %v650 = vld [vmem:[%s158 + $0x720] sm:$0xf]
        %v651 = vld [vmem:[%s158 + $0x724] sm:$0xf]
        %v652 = vld [vmem:[%s158 + $0x728] sm:$0xf]
        %v653 = vld [vmem:[%s158 + $0x72c] sm:$0xf]
        %v654 = vld [vmem:[%s158 + $0x730] sm:$0xf]
        %v655 = vld [vmem:[%s158 + $0x734] sm:$0xf]
        %v656 = vld [vmem:[%s158 + $0x738] sm:$0xf]
        %v657 = vld [vmem:[%s158 + $0x73c] sm:$0xf]
        %v658 = vld [vmem:[%s158 + $0x740] sm:$0xf]
        %v659 = vld [vmem:[%s158 + $0x744] sm:$0xf]
        %v660 = vld [vmem:[%s158 + $0x748] sm:$0xf]
        %v661 = vld [vmem:[%s158 + $0x74c] sm:$0xf]
        %v662 = vld [vmem:[%s158 + $0x750] sm:$0xf]
        %v663 = vld [vmem:[%s158 + $0x754] sm:$0xf]
        %v664 = vld [vmem:[%s158 + $0x758] sm:$0xf]
        %v665 = vld [vmem:[%s158 + $0x75c] sm:$0xf]
        %v666 = vld [vmem:[%s158 + $0x760] sm:$0xf]
        %v667 = vld [vmem:[%s158 + $0x764] sm:$0xf]
        %v668 = vld [vmem:[%s158 + $0x768] sm:$0xf]
        %v669 = vld [vmem:[%s158 + $0x76c] sm:$0xf]
        %v670 = vld [vmem:[%s158 + $0x770] sm:$0xf]
        %v671 = vld [vmem:[%s158 + $0x774] sm:$0xf]
        %v672 = vld [vmem:[%s158 + $0x778] sm:$0xf]
        %v673 = vld [vmem:[%s158 + $0x77c] sm:$0xf]
        %v674 = vld [vmem:[%s158 + $0x780] sm:$0xf]
        %v675 = vld [vmem:[%s158 + $0x784] sm:$0xf]
        %v676 = vld [vmem:[%s158 + $0x788] sm:$0xf]
        %v677 = vld [vmem:[%s158 + $0x78c] sm:$0xf]
        %v678 = vld [vmem:[%s158 + $0x790] sm:$0xf]
        %v679 = vld [vmem:[%s158 + $0x794] sm:$0xf]
        %v680 = vld [vmem:[%s158 + $0x798] sm:$0xf]
        %v681 = vld [vmem:[%s158 + $0x79c] sm:$0xf]
        %v682 = vld [vmem:[%s158 + $0x7a0] sm:$0xf]
        %v683 = vld [vmem:[%s158 + $0x7a4] sm:$0xf]
        %v684 = vld [vmem:[%s158 + $0x7a8] sm:$0xf]
        %v685 = vld [vmem:[%s158 + $0x7ac] sm:$0xf]
        %v686 = vld [vmem:[%s158 + $0x7b0] sm:$0xf]
        %v687 = vld [vmem:[%s158 + $0x7b4] sm:$0xf]
        %v688 = vld [vmem:[%s158 + $0x7b8] sm:$0xf]
        %v689 = vld [vmem:[%s158 + $0x7bc] sm:$0xf]
        %v690 = vld [vmem:[%s158 + $0x7c0] sm:$0xf]
        %v691 = vld [vmem:[%s158 + $0x7c4] sm:$0xf]
        %v692 = vld [vmem:[%s158 + $0x7c8] sm:$0xf]
        %v693 = vld [vmem:[%s158 + $0x7cc] sm:$0xf]
        %v694 = vld [vmem:[%s158 + $0x7d0] sm:$0xf]
        %v695 = vld [vmem:[%s158 + $0x7d4] sm:$0xf]
        %v696 = vld [vmem:[%s158 + $0x7d8] sm:$0xf]
        %v697 = vld [vmem:[%s158 + $0x7dc] sm:$0xf]
        %v698 = vld [vmem:[%s158 + $0x7e0] sm:$0xf]
        %v699 = vld [vmem:[%s158 + $0x7e4] sm:$0xf]
        %v700 = vld [vmem:[%s158 + $0x7e8] sm:$0xf]
        %v701 = vld [vmem:[%s158 + $0x7ec] sm:$0xf]
        %v702 = vld [vmem:[%s158 + $0x7f0] sm:$0xf]
        %v703 = vld [vmem:[%s158 + $0x7f4] sm:$0xf]
        %v704 = vld [vmem:[%s158 + $0x7f8] sm:$0xf]
        %v705 = vld [vmem:[%s158 + $0x7fc] sm:$0xf]
        %v706 = vld [vmem:[#allocation5] sm:$0xf]
        %v707 = vld [vmem:[#allocation5 + $0x4] sm:$0xf]
        %v708 = vld [vmem:[#allocation5 + $0x8] sm:$0xf]
        %v709 = vld [vmem:[#allocation5 + $0xc] sm:$0xf]
        %v710 = vld [vmem:[#allocation5 + $0x10] sm:$0xf]
        %v711 = vld [vmem:[#allocation5 + $0x14] sm:$0xf]
        %v712 = vld [vmem:[#allocation5 + $0x18] sm:$0xf]
        %v713 = vld [vmem:[#allocation5 + $0x1c] sm:$0xf]
        %v714 = vld [vmem:[#allocation5 + $0x20] sm:$0xf]
        %v715 = vld [vmem:[#allocation5 + $0x24] sm:$0xf]
        %v716 = vld [vmem:[#allocation5 + $0x28] sm:$0xf]
        %v717 = vld [vmem:[#allocation5 + $0x2c] sm:$0xf]
        %v718 = vld [vmem:[#allocation5 + $0x30] sm:$0xf]
        %v719 = vld [vmem:[#allocation5 + $0x34] sm:$0xf]
        %v720 = vld [vmem:[#allocation5 + $0x38] sm:$0xf]
        %v721 = vld [vmem:[#allocation5 + $0x3c] sm:$0xf]
        %v1234 = vunpack.c.l.b16 %v194
        %v1235 = vunpack.c.l.b16 %v195
        %v1236 = vunpack.c.l.b16 %v196
        %v1237 = vunpack.c.l.b16 %v197
        %v1238 = vunpack.c.l.b16 %v198
        %v1239 = vunpack.c.l.b16 %v199
        %v1240 = vunpack.c.l.b16 %v200
        %v1241 = vunpack.c.l.b16 %v201
        %v1242 = vunpack.c.l.b16 %v202
        %v1243 = vunpack.c.l.b16 %v203
        %v1244 = vunpack.c.l.b16 %v204
        %v1245 = vunpack.c.l.b16 %v205
        %v1246 = vunpack.c.l.b16 %v206
        %v1247 = vunpack.c.l.b16 %v207
        %v1248 = vunpack.c.l.b16 %v208
        %v1249 = vunpack.c.l.b16 %v209
        %v1250 = vunpack.c.l.b16 %v210
        %v1251 = vunpack.c.l.b16 %v211
        %v1252 = vunpack.c.l.b16 %v212
        %v1253 = vunpack.c.l.b16 %v213
        %v1254 = vunpack.c.l.b16 %v214
        %v1255 = vunpack.c.l.b16 %v215
        %v1256 = vunpack.c.l.b16 %v216
        %v1257 = vunpack.c.l.b16 %v217
        %v1258 = vunpack.c.l.b16 %v218
        %v1259 = vunpack.c.l.b16 %v219
        %v1260 = vunpack.c.l.b16 %v220
        %v1261 = vunpack.c.l.b16 %v221
        %v1262 = vunpack.c.l.b16 %v222
        %v1263 = vunpack.c.l.b16 %v223
        %v1264 = vunpack.c.l.b16 %v224
        %v1265 = vunpack.c.l.b16 %v225
        %v1266 = vunpack.c.l.b16 %v226
        %v1267 = vunpack.c.l.b16 %v227
        %v1268 = vunpack.c.l.b16 %v228
        %v1269 = vunpack.c.l.b16 %v229
        %v1270 = vunpack.c.l.b16 %v230
        %v1271 = vunpack.c.l.b16 %v231
        %v1272 = vunpack.c.l.b16 %v232
        %v1273 = vunpack.c.l.b16 %v233
        %v1274 = vunpack.c.l.b16 %v234
        %v1275 = vunpack.c.l.b16 %v235
        %v1276 = vunpack.c.l.b16 %v236
        %v1277 = vunpack.c.l.b16 %v237
        %v1278 = vunpack.c.l.b16 %v238
        %v1279 = vunpack.c.l.b16 %v239
        %v1280 = vunpack.c.l.b16 %v240
        %v1281 = vunpack.c.l.b16 %v241
        %v1282 = vunpack.c.l.b16 %v242
        %v1283 = vunpack.c.l.b16 %v243
        %v1284 = vunpack.c.l.b16 %v244
        %v1285 = vunpack.c.l.b16 %v245
        %v1286 = vunpack.c.l.b16 %v246
        %v1287 = vunpack.c.l.b16 %v247
        %v1288 = vunpack.c.l.b16 %v248
        %v1289 = vunpack.c.l.b16 %v249
        %v1290 = vunpack.c.l.b16 %v250
        %v1291 = vunpack.c.l.b16 %v251
        %v1292 = vunpack.c.l.b16 %v252
        %v1293 = vunpack.c.l.b16 %v253
        %v1294 = vunpack.c.l.b16 %v254
        %v1295 = vunpack.c.l.b16 %v255
        %v1296 = vunpack.c.l.b16 %v256
        %v1297 = vunpack.c.l.b16 %v257
        %v1298 = vunpack.c.l.b16 %v258
        %v1299 = vunpack.c.l.b16 %v259
        %v1300 = vunpack.c.l.b16 %v260
        %v1301 = vunpack.c.l.b16 %v261
        %v1302 = vunpack.c.l.b16 %v262
        %v1303 = vunpack.c.l.b16 %v263
        %v1304 = vunpack.c.l.b16 %v264
        %v1305 = vunpack.c.l.b16 %v265
        %v1306 = vunpack.c.l.b16 %v266
        %v1307 = vunpack.c.l.b16 %v267
        %v1308 = vunpack.c.l.b16 %v268
        %v1309 = vunpack.c.l.b16 %v269
        %v1310 = vunpack.c.l.b16 %v270
        %v1311 = vunpack.c.l.b16 %v271
        %v1312 = vunpack.c.l.b16 %v272
        %v1313 = vunpack.c.l.b16 %v273
        %v1314 = vunpack.c.l.b16 %v274
        %v1315 = vunpack.c.l.b16 %v275
        %v1316 = vunpack.c.l.b16 %v276
        %v1317 = vunpack.c.l.b16 %v277
        %v1318 = vunpack.c.l.b16 %v278
        %v1319 = vunpack.c.l.b16 %v279
        %v1320 = vunpack.c.l.b16 %v280
        %v1321 = vunpack.c.l.b16 %v281
        %v1322 = vunpack.c.l.b16 %v282
        %v1323 = vunpack.c.l.b16 %v283
        %v1324 = vunpack.c.l.b16 %v284
        %v1325 = vunpack.c.l.b16 %v285
        %v1326 = vunpack.c.l.b16 %v286
        %v1327 = vunpack.c.l.b16 %v287
        %v1328 = vunpack.c.l.b16 %v288
        %v1329 = vunpack.c.l.b16 %v289
        %v1330 = vunpack.c.l.b16 %v290
        %v1331 = vunpack.c.l.b16 %v291
        %v1332 = vunpack.c.l.b16 %v292
        %v1333 = vunpack.c.l.b16 %v293
        %v1334 = vunpack.c.l.b16 %v294
        %v1335 = vunpack.c.l.b16 %v295
        %v1336 = vunpack.c.l.b16 %v296
        %v1337 = vunpack.c.l.b16 %v297
        %v1338 = vunpack.c.l.b16 %v298
        %v1339 = vunpack.c.l.b16 %v299
        %v1340 = vunpack.c.l.b16 %v300
        %v1341 = vunpack.c.l.b16 %v301
        %v1342 = vunpack.c.l.b16 %v302
        %v1343 = vunpack.c.l.b16 %v303
        %v1344 = vunpack.c.l.b16 %v304
        %v1345 = vunpack.c.l.b16 %v305
        %v1346 = vunpack.c.l.b16 %v306
        %v1347 = vunpack.c.l.b16 %v307
        %v1348 = vunpack.c.l.b16 %v308
        %v1349 = vunpack.c.l.b16 %v309
        %v1350 = vunpack.c.l.b16 %v310
        %v1351 = vunpack.c.l.b16 %v311
        %v1352 = vunpack.c.l.b16 %v312
        %v1353 = vunpack.c.l.b16 %v313
        %v1354 = vunpack.c.l.b16 %v314
        %v1355 = vunpack.c.l.b16 %v315
        %v1356 = vunpack.c.l.b16 %v316
        %v1357 = vunpack.c.l.b16 %v317
        %v1358 = vunpack.c.l.b16 %v318
        %v1359 = vunpack.c.l.b16 %v319
        %v1360 = vunpack.c.l.b16 %v320
        %v1361 = vunpack.c.l.b16 %v321
        %v1362 = vunpack.c.l.b16 %v322
        %v1363 = vunpack.c.l.b16 %v323
        %v1364 = vunpack.c.l.b16 %v324
        %v1365 = vunpack.c.l.b16 %v325
        %v1366 = vunpack.c.l.b16 %v326
        %v1367 = vunpack.c.l.b16 %v327
        %v1368 = vunpack.c.l.b16 %v328
        %v1369 = vunpack.c.l.b16 %v329
        %v1370 = vunpack.c.l.b16 %v330
        %v1371 = vunpack.c.l.b16 %v331
        %v1372 = vunpack.c.l.b16 %v332
        %v1373 = vunpack.c.l.b16 %v333
        %v1374 = vunpack.c.l.b16 %v334
        %v1375 = vunpack.c.l.b16 %v335
        %v1376 = vunpack.c.l.b16 %v336
        %v1377 = vunpack.c.l.b16 %v337
        %v1378 = vunpack.c.l.b16 %v338
        %v1379 = vunpack.c.l.b16 %v339
        %v1380 = vunpack.c.l.b16 %v340
        %v1381 = vunpack.c.l.b16 %v341
        %v1382 = vunpack.c.l.b16 %v342
        %v1383 = vunpack.c.l.b16 %v343
        %v1384 = vunpack.c.l.b16 %v344
        %v1385 = vunpack.c.l.b16 %v345
        %v1386 = vunpack.c.l.b16 %v346
        %v1387 = vunpack.c.l.b16 %v347
        %v1388 = vunpack.c.l.b16 %v348
        %v1389 = vunpack.c.l.b16 %v349
        %v1390 = vunpack.c.l.b16 %v350
        %v1391 = vunpack.c.l.b16 %v351
        %v1392 = vunpack.c.l.b16 %v352
        %v1393 = vunpack.c.l.b16 %v353
        %v1394 = vunpack.c.l.b16 %v354
        %v1395 = vunpack.c.l.b16 %v355
        %v1396 = vunpack.c.l.b16 %v356
        %v1397 = vunpack.c.l.b16 %v357
        %v1398 = vunpack.c.l.b16 %v358
        %v1399 = vunpack.c.l.b16 %v359
        %v1400 = vunpack.c.l.b16 %v360
        %v1401 = vunpack.c.l.b16 %v361
        %v1402 = vunpack.c.l.b16 %v362
        %v1403 = vunpack.c.l.b16 %v363
        %v1404 = vunpack.c.l.b16 %v364
        %v1405 = vunpack.c.l.b16 %v365
        %v1406 = vunpack.c.l.b16 %v366
        %v1407 = vunpack.c.l.b16 %v367
        %v1408 = vunpack.c.l.b16 %v368
        %v1409 = vunpack.c.l.b16 %v369
        %v1410 = vunpack.c.l.b16 %v370
        %v1411 = vunpack.c.l.b16 %v371
        %v1412 = vunpack.c.l.b16 %v372
        %v1413 = vunpack.c.l.b16 %v373
        %v1414 = vunpack.c.l.b16 %v374
        %v1415 = vunpack.c.l.b16 %v375
        %v1416 = vunpack.c.l.b16 %v376
        %v1417 = vunpack.c.l.b16 %v377
        %v1418 = vunpack.c.l.b16 %v378
        %v1419 = vunpack.c.l.b16 %v379
        %v1420 = vunpack.c.l.b16 %v380
        %v1421 = vunpack.c.l.b16 %v381
        %v1422 = vunpack.c.l.b16 %v382
        %v1423 = vunpack.c.l.b16 %v383
        %v1424 = vunpack.c.l.b16 %v384
        %v1425 = vunpack.c.l.b16 %v385
        %v1426 = vunpack.c.l.b16 %v386
        %v1427 = vunpack.c.l.b16 %v387
        %v1428 = vunpack.c.l.b16 %v388
        %v1429 = vunpack.c.l.b16 %v389
        %v1430 = vunpack.c.l.b16 %v390
        %v1431 = vunpack.c.l.b16 %v391
        %v1432 = vunpack.c.l.b16 %v392
        %v1433 = vunpack.c.l.b16 %v393
        %v1434 = vunpack.c.l.b16 %v394
        %v1435 = vunpack.c.l.b16 %v395
        %v1436 = vunpack.c.l.b16 %v396
        %v1437 = vunpack.c.l.b16 %v397
        %v1438 = vunpack.c.l.b16 %v398
        %v1439 = vunpack.c.l.b16 %v399
        %v1440 = vunpack.c.l.b16 %v400
        %v1441 = vunpack.c.l.b16 %v401
        %v1442 = vunpack.c.l.b16 %v402
        %v1443 = vunpack.c.l.b16 %v403
        %v1444 = vunpack.c.l.b16 %v404
        %v1445 = vunpack.c.l.b16 %v405
        %v1446 = vunpack.c.l.b16 %v406
        %v1447 = vunpack.c.l.b16 %v407
        %v1448 = vunpack.c.l.b16 %v408
        %v1449 = vunpack.c.l.b16 %v409
        %v1450 = vunpack.c.l.b16 %v410
        %v1451 = vunpack.c.l.b16 %v411
        %v1452 = vunpack.c.l.b16 %v412
        %v1453 = vunpack.c.l.b16 %v413
        %v1454 = vunpack.c.l.b16 %v414
        %v1455 = vunpack.c.l.b16 %v415
        %v1456 = vunpack.c.l.b16 %v416
        %v1457 = vunpack.c.l.b16 %v417
        %v1458 = vunpack.c.l.b16 %v418
        %v1459 = vunpack.c.l.b16 %v419
        %v1460 = vunpack.c.l.b16 %v420
        %v1461 = vunpack.c.l.b16 %v421
        %v1462 = vunpack.c.l.b16 %v422
        %v1463 = vunpack.c.l.b16 %v423
        %v1464 = vunpack.c.l.b16 %v424
        %v1465 = vunpack.c.l.b16 %v425
        %v1466 = vunpack.c.l.b16 %v426
        %v1467 = vunpack.c.l.b16 %v427
        %v1468 = vunpack.c.l.b16 %v428
        %v1469 = vunpack.c.l.b16 %v429
        %v1470 = vunpack.c.l.b16 %v430
        %v1471 = vunpack.c.l.b16 %v431
        %v1472 = vunpack.c.l.b16 %v432
        %v1473 = vunpack.c.l.b16 %v433
        %v1474 = vunpack.c.l.b16 %v434
        %v1475 = vunpack.c.l.b16 %v435
        %v1476 = vunpack.c.l.b16 %v436
        %v1477 = vunpack.c.l.b16 %v437
        %v1478 = vunpack.c.l.b16 %v438
        %v1479 = vunpack.c.l.b16 %v439
        %v1480 = vunpack.c.l.b16 %v440
        %v1481 = vunpack.c.l.b16 %v441
        %v1482 = vunpack.c.l.b16 %v442
        %v1483 = vunpack.c.l.b16 %v443
        %v1484 = vunpack.c.l.b16 %v444
        %v1485 = vunpack.c.l.b16 %v445
        %v1486 = vunpack.c.l.b16 %v446
        %v1487 = vunpack.c.l.b16 %v447
        %v1488 = vunpack.c.l.b16 %v448
        %v1489 = vunpack.c.l.b16 %v449
        %v1490 = vunpack.c.l.b16 %v450
        %v1491 = vunpack.c.l.b16 %v451
        %v1492 = vunpack.c.l.b16 %v452
        %v1493 = vunpack.c.l.b16 %v453
        %v1494 = vunpack.c.l.b16 %v454
        %v1495 = vunpack.c.l.b16 %v455
        %v1496 = vunpack.c.l.b16 %v456
        %v1497 = vunpack.c.l.b16 %v457
        %v1498 = vunpack.c.l.b16 %v458
        %v1499 = vunpack.c.l.b16 %v459
        %v1500 = vunpack.c.l.b16 %v460
        %v1501 = vunpack.c.l.b16 %v461
        %v1502 = vunpack.c.l.b16 %v462
        %v1503 = vunpack.c.l.b16 %v463
        %v1504 = vunpack.c.l.b16 %v464
        %v1505 = vunpack.c.l.b16 %v465
        %v1506 = vunpack.c.l.b16 %v466
        %v1507 = vunpack.c.l.b16 %v467
        %v1508 = vunpack.c.l.b16 %v468
        %v1509 = vunpack.c.l.b16 %v469
        %v1510 = vunpack.c.l.b16 %v470
        %v1511 = vunpack.c.l.b16 %v471
        %v1512 = vunpack.c.l.b16 %v472
        %v1513 = vunpack.c.l.b16 %v473
        %v1514 = vunpack.c.l.b16 %v474
        %v1515 = vunpack.c.l.b16 %v475
        %v1516 = vunpack.c.l.b16 %v476
        %v1517 = vunpack.c.l.b16 %v477
        %v1518 = vunpack.c.l.b16 %v478
        %v1519 = vunpack.c.l.b16 %v479
        %v1520 = vunpack.c.l.b16 %v480
        %v1521 = vunpack.c.l.b16 %v481
        %v1522 = vunpack.c.l.b16 %v482
        %v1523 = vunpack.c.l.b16 %v483
        %v1524 = vunpack.c.l.b16 %v484
        %v1525 = vunpack.c.l.b16 %v485
        %v1526 = vunpack.c.l.b16 %v486
        %v1527 = vunpack.c.l.b16 %v487
        %v1528 = vunpack.c.l.b16 %v488
        %v1529 = vunpack.c.l.b16 %v489
        %v1530 = vunpack.c.l.b16 %v490
        %v1531 = vunpack.c.l.b16 %v491
        %v1532 = vunpack.c.l.b16 %v492
        %v1533 = vunpack.c.l.b16 %v493
        %v1534 = vunpack.c.l.b16 %v494
        %v1535 = vunpack.c.l.b16 %v495
        %v1536 = vunpack.c.l.b16 %v496
        %v1537 = vunpack.c.l.b16 %v497
        %v1538 = vunpack.c.l.b16 %v498
        %v1539 = vunpack.c.l.b16 %v499
        %v1540 = vunpack.c.l.b16 %v500
        %v1541 = vunpack.c.l.b16 %v501
        %v1542 = vunpack.c.l.b16 %v502
        %v1543 = vunpack.c.l.b16 %v503
        %v1544 = vunpack.c.l.b16 %v504
        %v1545 = vunpack.c.l.b16 %v505
        %v1546 = vunpack.c.l.b16 %v506
        %v1547 = vunpack.c.l.b16 %v507
        %v1548 = vunpack.c.l.b16 %v508
        %v1549 = vunpack.c.l.b16 %v509
        %v1550 = vunpack.c.l.b16 %v510
        %v1551 = vunpack.c.l.b16 %v511
        %v1552 = vunpack.c.l.b16 %v512
        %v1553 = vunpack.c.l.b16 %v513
        %v1554 = vunpack.c.l.b16 %v514
        %v1555 = vunpack.c.l.b16 %v515
        %v1556 = vunpack.c.l.b16 %v516
        %v1557 = vunpack.c.l.b16 %v517
        %v1558 = vunpack.c.l.b16 %v518
        %v1559 = vunpack.c.l.b16 %v519
        %v1560 = vunpack.c.l.b16 %v520
        %v1561 = vunpack.c.l.b16 %v521
        %v1562 = vunpack.c.l.b16 %v522
        %v1563 = vunpack.c.l.b16 %v523
        %v1564 = vunpack.c.l.b16 %v524
        %v1565 = vunpack.c.l.b16 %v525
        %v1566 = vunpack.c.l.b16 %v526
        %v1567 = vunpack.c.l.b16 %v527
        %v1568 = vunpack.c.l.b16 %v528
        %v1569 = vunpack.c.l.b16 %v529
        %v1570 = vunpack.c.l.b16 %v530
        %v1571 = vunpack.c.l.b16 %v531
        %v1572 = vunpack.c.l.b16 %v532
        %v1573 = vunpack.c.l.b16 %v533
        %v1574 = vunpack.c.l.b16 %v534
        %v1575 = vunpack.c.l.b16 %v535
        %v1576 = vunpack.c.l.b16 %v536
        %v1577 = vunpack.c.l.b16 %v537
        %v1578 = vunpack.c.l.b16 %v538
        %v1579 = vunpack.c.l.b16 %v539
        %v1580 = vunpack.c.l.b16 %v540
        %v1581 = vunpack.c.l.b16 %v541
        %v1582 = vunpack.c.l.b16 %v542
        %v1583 = vunpack.c.l.b16 %v543
        %v1584 = vunpack.c.l.b16 %v544
        %v1585 = vunpack.c.l.b16 %v545
        %v1586 = vunpack.c.l.b16 %v546
        %v1587 = vunpack.c.l.b16 %v547
        %v1588 = vunpack.c.l.b16 %v548
        %v1589 = vunpack.c.l.b16 %v549
        %v1590 = vunpack.c.l.b16 %v550
        %v1591 = vunpack.c.l.b16 %v551
        %v1592 = vunpack.c.l.b16 %v552
        %v1593 = vunpack.c.l.b16 %v553
        %v1594 = vunpack.c.l.b16 %v554
        %v1595 = vunpack.c.l.b16 %v555
        %v1596 = vunpack.c.l.b16 %v556
        %v1597 = vunpack.c.l.b16 %v557
        %v1598 = vunpack.c.l.b16 %v558
        %v1599 = vunpack.c.l.b16 %v559
        %v1600 = vunpack.c.l.b16 %v560
        %v1601 = vunpack.c.l.b16 %v561
        %v1602 = vunpack.c.l.b16 %v562
        %v1603 = vunpack.c.l.b16 %v563
        %v1604 = vunpack.c.l.b16 %v564
        %v1605 = vunpack.c.l.b16 %v565
        %v1606 = vunpack.c.l.b16 %v566
        %v1607 = vunpack.c.l.b16 %v567
        %v1608 = vunpack.c.l.b16 %v568
        %v1609 = vunpack.c.l.b16 %v569
        %v1610 = vunpack.c.l.b16 %v570
        %v1611 = vunpack.c.l.b16 %v571
        %v1612 = vunpack.c.l.b16 %v572
        %v1613 = vunpack.c.l.b16 %v573
        %v1614 = vunpack.c.l.b16 %v574
        %v1615 = vunpack.c.l.b16 %v575
        %v1616 = vunpack.c.l.b16 %v576
        %v1617 = vunpack.c.l.b16 %v577
        %v1618 = vunpack.c.l.b16 %v578
        %v1619 = vunpack.c.l.b16 %v579
        %v1620 = vunpack.c.l.b16 %v580
        %v1621 = vunpack.c.l.b16 %v581
        %v1622 = vunpack.c.l.b16 %v582
        %v1623 = vunpack.c.l.b16 %v583
        %v1624 = vunpack.c.l.b16 %v584
        %v1625 = vunpack.c.l.b16 %v585
        %v1626 = vunpack.c.l.b16 %v586
        %v1627 = vunpack.c.l.b16 %v587
        %v1628 = vunpack.c.l.b16 %v588
        %v1629 = vunpack.c.l.b16 %v589
        %v1630 = vunpack.c.l.b16 %v590
        %v1631 = vunpack.c.l.b16 %v591
        %v1632 = vunpack.c.l.b16 %v592
        %v1633 = vunpack.c.l.b16 %v593
        %v1634 = vunpack.c.l.b16 %v594
        %v1635 = vunpack.c.l.b16 %v595
        %v1636 = vunpack.c.l.b16 %v596
        %v1637 = vunpack.c.l.b16 %v597
        %v1638 = vunpack.c.l.b16 %v598
        %v1639 = vunpack.c.l.b16 %v599
        %v1640 = vunpack.c.l.b16 %v600
        %v1641 = vunpack.c.l.b16 %v601
        %v1642 = vunpack.c.l.b16 %v602
        %v1643 = vunpack.c.l.b16 %v603
        %v1644 = vunpack.c.l.b16 %v604
        %v1645 = vunpack.c.l.b16 %v605
        %v1646 = vunpack.c.l.b16 %v606
        %v1647 = vunpack.c.l.b16 %v607
        %v1648 = vunpack.c.l.b16 %v608
        %v1649 = vunpack.c.l.b16 %v609
        %v1650 = vunpack.c.l.b16 %v610
        %v1651 = vunpack.c.l.b16 %v611
        %v1652 = vunpack.c.l.b16 %v612
        %v1653 = vunpack.c.l.b16 %v613
        %v1654 = vunpack.c.l.b16 %v614
        %v1655 = vunpack.c.l.b16 %v615
        %v1656 = vunpack.c.l.b16 %v616
        %v1657 = vunpack.c.l.b16 %v617
        %v1658 = vunpack.c.l.b16 %v618
        %v1659 = vunpack.c.l.b16 %v619
        %v1660 = vunpack.c.l.b16 %v620
        %v1661 = vunpack.c.l.b16 %v621
        %v1662 = vunpack.c.l.b16 %v622
        %v1663 = vunpack.c.l.b16 %v623
        %v1664 = vunpack.c.l.b16 %v624
        %v1665 = vunpack.c.l.b16 %v625
        %v1666 = vunpack.c.l.b16 %v626
        %v1667 = vunpack.c.l.b16 %v627
        %v1668 = vunpack.c.l.b16 %v628
        %v1669 = vunpack.c.l.b16 %v629
        %v1670 = vunpack.c.l.b16 %v630
        %v1671 = vunpack.c.l.b16 %v631
        %v1672 = vunpack.c.l.b16 %v632
        %v1673 = vunpack.c.l.b16 %v633
        %v1674 = vunpack.c.l.b16 %v634
        %v1675 = vunpack.c.l.b16 %v635
        %v1676 = vunpack.c.l.b16 %v636
        %v1677 = vunpack.c.l.b16 %v637
        %v1678 = vunpack.c.l.b16 %v638
        %v1679 = vunpack.c.l.b16 %v639
        %v1680 = vunpack.c.l.b16 %v640
        %v1681 = vunpack.c.l.b16 %v641
        %v1682 = vunpack.c.l.b16 %v642
        %v1683 = vunpack.c.l.b16 %v643
        %v1684 = vunpack.c.l.b16 %v644
        %v1685 = vunpack.c.l.b16 %v645
        %v1686 = vunpack.c.l.b16 %v646
        %v1687 = vunpack.c.l.b16 %v647
        %v1688 = vunpack.c.l.b16 %v648
        %v1689 = vunpack.c.l.b16 %v649
        %v1690 = vunpack.c.l.b16 %v650
        %v1691 = vunpack.c.l.b16 %v651
        %v1692 = vunpack.c.l.b16 %v652
        %v1693 = vunpack.c.l.b16 %v653
        %v1694 = vunpack.c.l.b16 %v654
        %v1695 = vunpack.c.l.b16 %v655
        %v1696 = vunpack.c.l.b16 %v656
        %v1697 = vunpack.c.l.b16 %v657
        %v1698 = vunpack.c.l.b16 %v658
        %v1699 = vunpack.c.l.b16 %v659
        %v1700 = vunpack.c.l.b16 %v660
        %v1701 = vunpack.c.l.b16 %v661
        %v1702 = vunpack.c.l.b16 %v662
        %v1703 = vunpack.c.l.b16 %v663
        %v1704 = vunpack.c.l.b16 %v664
        %v1705 = vunpack.c.l.b16 %v665
        %v1706 = vunpack.c.l.b16 %v666
        %v1707 = vunpack.c.l.b16 %v667
        %v1708 = vunpack.c.l.b16 %v668
        %v1709 = vunpack.c.l.b16 %v669
        %v1710 = vunpack.c.l.b16 %v670
        %v1711 = vunpack.c.l.b16 %v671
        %v1712 = vunpack.c.l.b16 %v672
        %v1713 = vunpack.c.l.b16 %v673
        %v1714 = vunpack.c.l.b16 %v674
        %v1715 = vunpack.c.l.b16 %v675
        %v1716 = vunpack.c.l.b16 %v676
        %v1717 = vunpack.c.l.b16 %v677
        %v1718 = vunpack.c.l.b16 %v678
        %v1719 = vunpack.c.l.b16 %v679
        %v1720 = vunpack.c.l.b16 %v680
        %v1721 = vunpack.c.l.b16 %v681
        %v1722 = vunpack.c.l.b16 %v682
        %v1723 = vunpack.c.l.b16 %v683
        %v1724 = vunpack.c.l.b16 %v684
        %v1725 = vunpack.c.l.b16 %v685
        %v1726 = vunpack.c.l.b16 %v686
        %v1727 = vunpack.c.l.b16 %v687
        %v1728 = vunpack.c.l.b16 %v688
        %v1729 = vunpack.c.l.b16 %v689
        %v1730 = vunpack.c.l.b16 %v690
        %v1731 = vunpack.c.l.b16 %v691
        %v1732 = vunpack.c.l.b16 %v692
        %v1733 = vunpack.c.l.b16 %v693
        %v1734 = vunpack.c.l.b16 %v694
        %v1735 = vunpack.c.l.b16 %v695
        %v1736 = vunpack.c.l.b16 %v696
        %v1737 = vunpack.c.l.b16 %v697
        %v1738 = vunpack.c.l.b16 %v698
        %v1739 = vunpack.c.l.b16 %v699
        %v1740 = vunpack.c.l.b16 %v700
        %v1741 = vunpack.c.l.b16 %v701
        %v1742 = vunpack.c.l.b16 %v702
        %v1743 = vunpack.c.l.b16 %v703
        %v1744 = vunpack.c.l.b16 %v704
        %v1745 = vunpack.c.l.b16 %v705
        %v1746 = vpack.c.b16 %v1235, %v1234
        %v1747 = vpack.c.b16 %v1237, %v1236
        %v1748 = vpack.c.b16 %v1239, %v1238
        %v1749 = vpack.c.b16 %v1241, %v1240
        %v1750 = vpack.c.b16 %v1243, %v1242
        %v1751 = vpack.c.b16 %v1245, %v1244
        %v1752 = vpack.c.b16 %v1247, %v1246
        %v1753 = vpack.c.b16 %v1249, %v1248
        %v1754 = vpack.c.b16 %v1251, %v1250
        %v1755 = vpack.c.b16 %v1253, %v1252
        %v1756 = vpack.c.b16 %v1255, %v1254
        %v1757 = vpack.c.b16 %v1257, %v1256
        %v1758 = vpack.c.b16 %v1259, %v1258
        %v1759 = vpack.c.b16 %v1261, %v1260
        %v1760 = vpack.c.b16 %v1263, %v1262
        %v1761 = vpack.c.b16 %v1265, %v1264
        %v1762 = vpack.c.b16 %v1267, %v1266
        %v1763 = vpack.c.b16 %v1269, %v1268
        %v1764 = vpack.c.b16 %v1271, %v1270
        %v1765 = vpack.c.b16 %v1273, %v1272
        %v1766 = vpack.c.b16 %v1275, %v1274
        %v1767 = vpack.c.b16 %v1277, %v1276
        %v1768 = vpack.c.b16 %v1279, %v1278
        %v1769 = vpack.c.b16 %v1281, %v1280
        %v1770 = vpack.c.b16 %v1283, %v1282
        %v1771 = vpack.c.b16 %v1285, %v1284
        %v1772 = vpack.c.b16 %v1287, %v1286
        %v1773 = vpack.c.b16 %v1289, %v1288
        %v1774 = vpack.c.b16 %v1291, %v1290
        %v1775 = vpack.c.b16 %v1293, %v1292
        %v1776 = vpack.c.b16 %v1295, %v1294
        %v1777 = vpack.c.b16 %v1297, %v1296
        %v1778 = vpack.c.b16 %v1299, %v1298
        %v1779 = vpack.c.b16 %v1301, %v1300
        %v1780 = vpack.c.b16 %v1303, %v1302
        %v1781 = vpack.c.b16 %v1305, %v1304
        %v1782 = vpack.c.b16 %v1307, %v1306
        %v1783 = vpack.c.b16 %v1309, %v1308
        %v1784 = vpack.c.b16 %v1311, %v1310
        %v1785 = vpack.c.b16 %v1313, %v1312
        %v1786 = vpack.c.b16 %v1315, %v1314
        %v1787 = vpack.c.b16 %v1317, %v1316
        %v1788 = vpack.c.b16 %v1319, %v1318
        %v1789 = vpack.c.b16 %v1321, %v1320
        %v1790 = vpack.c.b16 %v1323, %v1322
        %v1791 = vpack.c.b16 %v1325, %v1324
        %v1792 = vpack.c.b16 %v1327, %v1326
        %v1793 = vpack.c.b16 %v1329, %v1328
        %v1794 = vpack.c.b16 %v1331, %v1330
        %v1795 = vpack.c.b16 %v1333, %v1332
        %v1796 = vpack.c.b16 %v1335, %v1334
        %v1797 = vpack.c.b16 %v1337, %v1336
        %v1798 = vpack.c.b16 %v1339, %v1338
        %v1799 = vpack.c.b16 %v1341, %v1340
        %v1800 = vpack.c.b16 %v1343, %v1342
        %v1801 = vpack.c.b16 %v1345, %v1344
        %v1802 = vpack.c.b16 %v1347, %v1346
        %v1803 = vpack.c.b16 %v1349, %v1348
        %v1804 = vpack.c.b16 %v1351, %v1350
        %v1805 = vpack.c.b16 %v1353, %v1352
        %v1806 = vpack.c.b16 %v1355, %v1354
        %v1807 = vpack.c.b16 %v1357, %v1356
        %v1808 = vpack.c.b16 %v1359, %v1358
        %v1809 = vpack.c.b16 %v1361, %v1360
        %v1810 = vpack.c.b16 %v1363, %v1362
        %v1811 = vpack.c.b16 %v1365, %v1364
        %v1812 = vpack.c.b16 %v1367, %v1366
        %v1813 = vpack.c.b16 %v1369, %v1368
        %v1814 = vpack.c.b16 %v1371, %v1370
        %v1815 = vpack.c.b16 %v1373, %v1372
        %v1816 = vpack.c.b16 %v1375, %v1374
        %v1817 = vpack.c.b16 %v1377, %v1376
        %v1818 = vpack.c.b16 %v1379, %v1378
        %v1819 = vpack.c.b16 %v1381, %v1380
        %v1820 = vpack.c.b16 %v1383, %v1382
        %v1821 = vpack.c.b16 %v1385, %v1384
        %v1822 = vpack.c.b16 %v1387, %v1386
        %v1823 = vpack.c.b16 %v1389, %v1388
        %v1824 = vpack.c.b16 %v1391, %v1390
        %v1825 = vpack.c.b16 %v1393, %v1392
        %v1826 = vpack.c.b16 %v1395, %v1394
        %v1827 = vpack.c.b16 %v1397, %v1396
        %v1828 = vpack.c.b16 %v1399, %v1398
        %v1829 = vpack.c.b16 %v1401, %v1400
        %v1830 = vpack.c.b16 %v1403, %v1402
        %v1831 = vpack.c.b16 %v1405, %v1404
        %v1832 = vpack.c.b16 %v1407, %v1406
        %v1833 = vpack.c.b16 %v1409, %v1408
        %v1834 = vpack.c.b16 %v1411, %v1410
        %v1835 = vpack.c.b16 %v1413, %v1412
        %v1836 = vpack.c.b16 %v1415, %v1414
        %v1837 = vpack.c.b16 %v1417, %v1416
        %v1838 = vpack.c.b16 %v1419, %v1418
        %v1839 = vpack.c.b16 %v1421, %v1420
        %v1840 = vpack.c.b16 %v1423, %v1422
        %v1841 = vpack.c.b16 %v1425, %v1424
        %v1842 = vpack.c.b16 %v1427, %v1426
        %v1843 = vpack.c.b16 %v1429, %v1428
        %v1844 = vpack.c.b16 %v1431, %v1430
        %v1845 = vpack.c.b16 %v1433, %v1432
        %v1846 = vpack.c.b16 %v1435, %v1434
        %v1847 = vpack.c.b16 %v1437, %v1436
        %v1848 = vpack.c.b16 %v1439, %v1438
        %v1849 = vpack.c.b16 %v1441, %v1440
        %v1850 = vpack.c.b16 %v1443, %v1442
        %v1851 = vpack.c.b16 %v1445, %v1444
        %v1852 = vpack.c.b16 %v1447, %v1446
        %v1853 = vpack.c.b16 %v1449, %v1448
        %v1854 = vpack.c.b16 %v1451, %v1450
        %v1855 = vpack.c.b16 %v1453, %v1452
        %v1856 = vpack.c.b16 %v1455, %v1454
        %v1857 = vpack.c.b16 %v1457, %v1456
        %v1858 = vpack.c.b16 %v1459, %v1458
        %v1859 = vpack.c.b16 %v1461, %v1460
        %v1860 = vpack.c.b16 %v1463, %v1462
        %v1861 = vpack.c.b16 %v1465, %v1464
        %v1862 = vpack.c.b16 %v1467, %v1466
        %v1863 = vpack.c.b16 %v1469, %v1468
        %v1864 = vpack.c.b16 %v1471, %v1470
        %v1865 = vpack.c.b16 %v1473, %v1472
        %v1866 = vpack.c.b16 %v1475, %v1474
        %v1867 = vpack.c.b16 %v1477, %v1476
        %v1868 = vpack.c.b16 %v1479, %v1478
        %v1869 = vpack.c.b16 %v1481, %v1480
        %v1870 = vpack.c.b16 %v1483, %v1482
        %v1871 = vpack.c.b16 %v1485, %v1484
        %v1872 = vpack.c.b16 %v1487, %v1486
        %v1873 = vpack.c.b16 %v1489, %v1488
        %v1874 = vpack.c.b16 %v1491, %v1490
        %v1875 = vpack.c.b16 %v1493, %v1492
        %v1876 = vpack.c.b16 %v1495, %v1494
        %v1877 = vpack.c.b16 %v1497, %v1496
        %v1878 = vpack.c.b16 %v1499, %v1498
        %v1879 = vpack.c.b16 %v1501, %v1500
        %v1880 = vpack.c.b16 %v1503, %v1502
        %v1881 = vpack.c.b16 %v1505, %v1504
        %v1882 = vpack.c.b16 %v1507, %v1506
        %v1883 = vpack.c.b16 %v1509, %v1508
        %v1884 = vpack.c.b16 %v1511, %v1510
        %v1885 = vpack.c.b16 %v1513, %v1512
        %v1886 = vpack.c.b16 %v1515, %v1514
        %v1887 = vpack.c.b16 %v1517, %v1516
        %v1888 = vpack.c.b16 %v1519, %v1518
        %v1889 = vpack.c.b16 %v1521, %v1520
        %v1890 = vpack.c.b16 %v1523, %v1522
        %v1891 = vpack.c.b16 %v1525, %v1524
        %v1892 = vpack.c.b16 %v1527, %v1526
        %v1893 = vpack.c.b16 %v1529, %v1528
        %v1894 = vpack.c.b16 %v1531, %v1530
        %v1895 = vpack.c.b16 %v1533, %v1532
        %v1896 = vpack.c.b16 %v1535, %v1534
        %v1897 = vpack.c.b16 %v1537, %v1536
        %v1898 = vpack.c.b16 %v1539, %v1538
        %v1899 = vpack.c.b16 %v1541, %v1540
        %v1900 = vpack.c.b16 %v1543, %v1542
        %v1901 = vpack.c.b16 %v1545, %v1544
        %v1902 = vpack.c.b16 %v1547, %v1546
        %v1903 = vpack.c.b16 %v1549, %v1548
        %v1904 = vpack.c.b16 %v1551, %v1550
        %v1905 = vpack.c.b16 %v1553, %v1552
        %v1906 = vpack.c.b16 %v1555, %v1554
        %v1907 = vpack.c.b16 %v1557, %v1556
        %v1908 = vpack.c.b16 %v1559, %v1558
        %v1909 = vpack.c.b16 %v1561, %v1560
        %v1910 = vpack.c.b16 %v1563, %v1562
        %v1911 = vpack.c.b16 %v1565, %v1564
        %v1912 = vpack.c.b16 %v1567, %v1566
        %v1913 = vpack.c.b16 %v1569, %v1568
        %v1914 = vpack.c.b16 %v1571, %v1570
        %v1915 = vpack.c.b16 %v1573, %v1572
        %v1916 = vpack.c.b16 %v1575, %v1574
        %v1917 = vpack.c.b16 %v1577, %v1576
        %v1918 = vpack.c.b16 %v1579, %v1578
        %v1919 = vpack.c.b16 %v1581, %v1580
        %v1920 = vpack.c.b16 %v1583, %v1582
        %v1921 = vpack.c.b16 %v1585, %v1584
        %v1922 = vpack.c.b16 %v1587, %v1586
        %v1923 = vpack.c.b16 %v1589, %v1588
        %v1924 = vpack.c.b16 %v1591, %v1590
        %v1925 = vpack.c.b16 %v1593, %v1592
        %v1926 = vpack.c.b16 %v1595, %v1594
        %v1927 = vpack.c.b16 %v1597, %v1596
        %v1928 = vpack.c.b16 %v1599, %v1598
        %v1929 = vpack.c.b16 %v1601, %v1600
        %v1930 = vpack.c.b16 %v1603, %v1602
        %v1931 = vpack.c.b16 %v1605, %v1604
        %v1932 = vpack.c.b16 %v1607, %v1606
        %v1933 = vpack.c.b16 %v1609, %v1608
        %v1934 = vpack.c.b16 %v1611, %v1610
        %v1935 = vpack.c.b16 %v1613, %v1612
        %v1936 = vpack.c.b16 %v1615, %v1614
        %v1937 = vpack.c.b16 %v1617, %v1616
        %v1938 = vpack.c.b16 %v1619, %v1618
        %v1939 = vpack.c.b16 %v1621, %v1620
        %v1940 = vpack.c.b16 %v1623, %v1622
        %v1941 = vpack.c.b16 %v1625, %v1624
        %v1942 = vpack.c.b16 %v1627, %v1626
        %v1943 = vpack.c.b16 %v1629, %v1628
        %v1944 = vpack.c.b16 %v1631, %v1630
        %v1945 = vpack.c.b16 %v1633, %v1632
        %v1946 = vpack.c.b16 %v1635, %v1634
        %v1947 = vpack.c.b16 %v1637, %v1636
        %v1948 = vpack.c.b16 %v1639, %v1638
        %v1949 = vpack.c.b16 %v1641, %v1640
        %v1950 = vpack.c.b16 %v1643, %v1642
        %v1951 = vpack.c.b16 %v1645, %v1644
        %v1952 = vpack.c.b16 %v1647, %v1646
        %v1953 = vpack.c.b16 %v1649, %v1648
        %v1954 = vpack.c.b16 %v1651, %v1650
        %v1955 = vpack.c.b16 %v1653, %v1652
        %v1956 = vpack.c.b16 %v1655, %v1654
        %v1957 = vpack.c.b16 %v1657, %v1656
        %v1958 = vpack.c.b16 %v1659, %v1658
        %v1959 = vpack.c.b16 %v1661, %v1660
        %v1960 = vpack.c.b16 %v1663, %v1662
        %v1961 = vpack.c.b16 %v1665, %v1664
        %v1962 = vpack.c.b16 %v1667, %v1666
        %v1963 = vpack.c.b16 %v1669, %v1668
        %v1964 = vpack.c.b16 %v1671, %v1670
        %v1965 = vpack.c.b16 %v1673, %v1672
        %v1966 = vpack.c.b16 %v1675, %v1674
        %v1967 = vpack.c.b16 %v1677, %v1676
        %v1968 = vpack.c.b16 %v1679, %v1678
        %v1969 = vpack.c.b16 %v1681, %v1680
        %v1970 = vpack.c.b16 %v1683, %v1682
        %v1971 = vpack.c.b16 %v1685, %v1684
        %v1972 = vpack.c.b16 %v1687, %v1686
        %v1973 = vpack.c.b16 %v1689, %v1688
        %v1974 = vpack.c.b16 %v1691, %v1690
        %v1975 = vpack.c.b16 %v1693, %v1692
        %v1976 = vpack.c.b16 %v1695, %v1694
        %v1977 = vpack.c.b16 %v1697, %v1696
        %v1978 = vpack.c.b16 %v1699, %v1698
        %v1979 = vpack.c.b16 %v1701, %v1700
        %v1980 = vpack.c.b16 %v1703, %v1702
        %v1981 = vpack.c.b16 %v1705, %v1704
        %v1982 = vpack.c.b16 %v1707, %v1706
        %v1983 = vpack.c.b16 %v1709, %v1708
        %v1984 = vpack.c.b16 %v1711, %v1710
        %v1985 = vpack.c.b16 %v1713, %v1712
        %v1986 = vpack.c.b16 %v1715, %v1714
        %v1987 = vpack.c.b16 %v1717, %v1716
        %v1988 = vpack.c.b16 %v1719, %v1718
        %v1989 = vpack.c.b16 %v1721, %v1720
        %v1990 = vpack.c.b16 %v1723, %v1722
        %v1991 = vpack.c.b16 %v1725, %v1724
        %v1992 = vpack.c.b16 %v1727, %v1726
        %v1993 = vpack.c.b16 %v1729, %v1728
        %v1994 = vpack.c.b16 %v1731, %v1730
        %v1995 = vpack.c.b16 %v1733, %v1732
        %v1996 = vpack.c.b16 %v1735, %v1734
        %v1997 = vpack.c.b16 %v1737, %v1736
        %v1998 = vpack.c.b16 %v1739, %v1738
        %v1999 = vpack.c.b16 %v1741, %v1740
        %v2000 = vpack.c.b16 %v1743, %v1742
        %v2001 = vpack.c.b16 %v1745, %v1744
        %v2274 = vunpack.c.l.b16 %v706
        %v2275 = vunpack.c.l.b16 %v707
        %v2276 = vunpack.c.l.b16 %v708
        %v2277 = vunpack.c.l.b16 %v709
        %v2278 = vunpack.c.l.b16 %v710
        %v2279 = vunpack.c.l.b16 %v711
        %v2280 = vunpack.c.l.b16 %v712
        %v2281 = vunpack.c.l.b16 %v713
        %v2282 = vunpack.c.l.b16 %v714
        %v2283 = vunpack.c.l.b16 %v715
        %v2284 = vunpack.c.l.b16 %v716
        %v2285 = vunpack.c.l.b16 %v717
        %v2286 = vunpack.c.l.b16 %v718
        %v2287 = vunpack.c.l.b16 %v719
        %v2288 = vunpack.c.l.b16 %v720
        %v2289 = vunpack.c.l.b16 %v721
        %v2290 = vpack.c.b16 %v2275, %v2274
        %v2291 = vpack.c.b16 %v2277, %v2276
        %v2292 = vpack.c.b16 %v2279, %v2278
        %v2293 = vpack.c.b16 %v2281, %v2280
        %v2294 = vpack.c.b16 %v2283, %v2282
        %v2295 = vpack.c.b16 %v2285, %v2284
        %v2296 = vpack.c.b16 %v2287, %v2286
        %v2297 = vpack.c.b16 %v2289, %v2288
        %2306 = vmatprep.subr.bf16.mxu0 0
        %2307 = vmatpush1.bf16.msra.mxu0 %v2290
        %2308 = vmatprep.subr.bf16.mxu0 0
        %2309 = vmatpush1.bf16.msra.mxu0 %v2291
        %2310 = vmatprep.subr.bf16.mxu0 0
        %2311 = vmatpush1.bf16.msra.mxu0 %v2292
        %2312 = vmatprep.subr.bf16.mxu0 0
        %2313 = vmatpush1.bf16.msra.mxu0 %v2293
        %2314 = vmatprep.subr.bf16.mxu0 0
        %2315 = vmatpush1.bf16.msra.mxu0 %v2294
        %2316 = vmatprep.subr.bf16.mxu0 0
        %2317 = vmatpush1.bf16.msra.mxu0 %v2295
        %2318 = vmatprep.subr.bf16.mxu0 0
        %2319 = vmatpush1.bf16.msra.mxu0 %v2296
        %2320 = vmatprep.subr.bf16.mxu0 0
        %2321 = vmatpush1.bf16.msra.mxu0 %v2297
        %2322 = vmatprep.subr.bf16.mxu0 0
        %2323 = vmatpush1.bf16.msra.mxu0 0
        %2324 = vmatprep.subr.bf16.mxu0 0
        %2325 = vmatpush1.bf16.msra.mxu0 0
        %2326 = vmatprep.subr.bf16.mxu0 0
        %2327 = vmatpush1.bf16.msra.mxu0 0
        %2328 = vmatprep.subr.bf16.mxu0 0
        %2329 = vmatpush1.bf16.msra.mxu0 0
        %2330 = vmatprep.subr.bf16.mxu0 0
        %2331 = vmatpush1.bf16.msra.mxu0 0
        %2332 = vmatprep.subr.bf16.mxu0 0
        %2333 = vmatpush1.bf16.msra.mxu0 0
        %2334 = vmatprep.subr.bf16.mxu0 0
        %2335 = vmatpush1.bf16.msra.mxu0 0
        %2336 = vmatprep.subr.bf16.mxu0 0
        %2337 = vmatpush1.bf16.msra.mxu0 0
        %2338 = vmatprep.mubr.bf16.mxu0 0
        %2339 = vmatmul.mubr.bf16.gmra.mrb[0].mxu0 %v1746
        %v2340 = vpop.f32.mrb[0].mxu0
        %v2341 = vadd.f32 0.0, %v2340
        %v2342 = vpop.f32.mrb[0].mxu0
        %v2343 = vpop.f32.mrb[0].mxu0
        %v2344 = vadd.f32 0.0, %v2343
        %v2345 = vpop.f32.mrb[0].mxu0
        %2346 = vmatprep.mubr.bf16.mxu0 0
        %2347 = vmatmul.mubr.bf16.gmra.mrb[0].mxu0 %v1747
        %v2348 = vpop.f32.mrb[0].mxu0
        %v2349 = vadd.f32 0.0, %v2348
        %v2350 = vpop.f32.mrb[0].mxu0
        %v2351 = vpop.f32.mrb[0].mxu0
        %v2352 = vadd.f32 0.0, %v2351
        %v2353 = vpop.f32.mrb[0].mxu0
        %2354 = vmatprep.mubr.bf16.mxu0 0
        %2355 = vmatmul.mubr.bf16.gmra.mrb[0].mxu0 %v1748
        %v2356 = vpop.f32.mrb[0].mxu0
        %v2357 = vadd.f32 0.0, %v2356
        %v2358 = vpop.f32.mrb[0].mxu0
        %v2359 = vpop.f32.mrb[0].mxu0
        %v2360 = vadd.f32 0.0, %v2359
        %v2361 = vpop.f32.mrb[0].mxu0
        %2362 = vmatprep.mubr.bf16.mxu0 0
        %2363 = vmatmul.mubr.bf16.gmra.mrb[0].mxu0 %v1749
        %v2364 = vpop.f32.mrb[0].mxu0
        %v2365 = vadd.f32 0.0, %v2364
        %v2366 = vpop.f32.mrb[0].mxu0
        %v2367 = vpop.f32.mrb[0].mxu0
        %v2368 = vadd.f32 0.0, %v2367
        %v2369 = vpop.f32.mrb[0].mxu0
        %2370 = vmatprep.mubr.bf16.mxu0 0
        %2371 = vmatmul.mubr.bf16.gmra.mrb[0].mxu0 %v1750
        %v2372 = vpop.f32.mrb[0].mxu0
        %v2373 = vadd.f32 0.0, %v2372
        %v2374 = vpop.f32.mrb[0].mxu0
        %v2375 = vpop.f32.mrb[0].mxu0
        %v2376 = vadd.f32 0.0, %v2375
        %v2377 = vpop.f32.mrb[0].mxu0
        %2378 = vmatprep.mubr.bf16.mxu0 0
        %2379 = vmatmul.mubr.bf16.gmra.mrb[0].mxu0 %v1751
        %v2380 = vpop.f32.mrb[0].mxu0
        %v2381 = vadd.f32 0.0, %v2380
        %v2382 = vpop.f32.mrb[0].mxu0
        %v2383 = vpop.f32.mrb[0].mxu0
        %v2384 = vadd.f32 0.0, %v2383
        %v2385 = vpop.f32.mrb[0].mxu0
        %2386 = vmatprep.mubr.bf16.mxu0 0
        %2387 = vmatmul.mubr.bf16.gmra.mrb[0].mxu0 %v1752
        %v2388 = vpop.f32.mrb[0].mxu0
        %v2389 = vadd.f32 0.0, %v2388
        %v2390 = vpop.f32.mrb[0].mxu0
        %v2391 = vpop.f32.mrb[0].mxu0
        %v2392 = vadd.f32 0.0, %v2391
        %v2393 = vpop.f32.mrb[0].mxu0
        %2394 = vmatprep.mubr.bf16.mxu0 0
        %2395 = vmatmul.mubr.bf16.gmra.mrb[0].mxu0 %v1753
        %v2396 = vpop.f32.mrb[0].mxu0
        %v2397 = vadd.f32 0.0, %v2396
        %v2398 = vpop.f32.mrb[0].mxu0
        %v2399 = vpop.f32.mrb[0].mxu0
        %v2400 = vadd.f32 0.0, %v2399
        %v2401 = vpop.f32.mrb[0].mxu0
        %2402 = vmatprep.mubr.bf16.mxu0 0
        %2403 = vmatmul.mubr.bf16.gmra.mrb[0].mxu0 %v1754
        %v2404 = vpop.f32.mrb[0].mxu0
        %v2405 = vadd.f32 0.0, %v2404
        %v2406 = vpop.f32.mrb[0].mxu0
        %v2407 = vpop.f32.mrb[0].mxu0
        %v2408 = vadd.f32 0.0, %v2407
        %v2409 = vpop.f32.mrb[0].mxu0
        %2410 = vmatprep.mubr.bf16.mxu0 0
        %2411 = vmatmul.mubr.bf16.gmra.mrb[0].mxu0 %v1755
        %v2412 = vpop.f32.mrb[0].mxu0
        %v2413 = vadd.f32 0.0, %v2412
        %v2414 = vpop.f32.mrb[0].mxu0
        %v2415 = vpop.f32.mrb[0].mxu0
        %v2416 = vadd.f32 0.0, %v2415
        %v2417 = vpop.f32.mrb[0].mxu0
        %2418 = vmatprep.mubr.bf16.mxu0 0
        %2419 = vmatmul.mubr.bf16.gmra.mrb[0].mxu0 %v1756
        %v2420 = vpop.f32.mrb[0].mxu0
        %v2421 = vadd.f32 0.0, %v2420
        %v2422 = vpop.f32.mrb[0].mxu0
        %v2423 = vpop.f32.mrb[0].mxu0
        %v2424 = vadd.f32 0.0, %v2423
        %v2425 = vpop.f32.mrb[0].mxu0
        %2426 = vmatprep.mubr.bf16.mxu0 0
        %2427 = vmatmul.mubr.bf16.gmra.mrb[0].mxu0 %v1757
        %v2428 = vpop.f32.mrb[0].mxu0
        %v2429 = vadd.f32 0.0, %v2428
        %v2430 = vpop.f32.mrb[0].mxu0
        %v2431 = vpop.f32.mrb[0].mxu0
        %v2432 = vadd.f32 0.0, %v2431
        %v2433 = vpop.f32.mrb[0].mxu0
        %2434 = vmatprep.mubr.bf16.mxu0 0
        %2435 = vmatmul.mubr.bf16.gmra.mrb[0].mxu0 %v1758
        %v2436 = vpop.f32.mrb[0].mxu0
        %v2437 = vadd.f32 0.0, %v2436
        %v2438 = vpop.f32.mrb[0].mxu0
        %v2439 = vpop.f32.mrb[0].mxu0
        %v2440 = vadd.f32 0.0, %v2439
        %v2441 = vpop.f32.mrb[0].mxu0
        %2442 = vmatprep.mubr.bf16.mxu0 0
        %2443 = vmatmul.mubr.bf16.gmra.mrb[0].mxu0 %v1759
        %v2444 = vpop.f32.mrb[0].mxu0
        %v2445 = vadd.f32 0.0, %v2444
        %v2446 = vpop.f32.mrb[0].mxu0
        %v2447 = vpop.f32.mrb[0].mxu0
        %v2448 = vadd.f32 0.0, %v2447
        %v2449 = vpop.f32.mrb[0].mxu0
        %2450 = vmatprep.mubr.bf16.mxu0 0
        %2451 = vmatmul.mubr.bf16.gmra.mrb[0].mxu0 %v1760
        %v2452 = vpop.f32.mrb[0].mxu0
        %v2453 = vadd.f32 0.0, %v2452
        %v2454 = vpop.f32.mrb[0].mxu0
        %v2455 = vpop.f32.mrb[0].mxu0
        %v2456 = vadd.f32 0.0, %v2455
        %v2457 = vpop.f32.mrb[0].mxu0
        %2458 = vmatprep.mubr.bf16.mxu0 0
        %2459 = vmatmul.mubr.bf16.gmra.mrb[0].mxu0 %v1761
        %v2460 = vpop.f32.mrb[0].mxu0
        %v2461 = vadd.f32 0.0, %v2460
        %v2462 = vpop.f32.mrb[0].mxu0
        %v2463 = vpop.f32.mrb[0].mxu0
        %v2464 = vadd.f32 0.0, %v2463
        %v2465 = vpop.f32.mrb[0].mxu0
        %2466 = vmatprep.mubr.bf16.mxu0 0
        %2467 = vmatmul.mubr.bf16.gmra.mrb[0].mxu0 %v1762
        %v2468 = vpop.f32.mrb[0].mxu0
        %v2469 = vadd.f32 0.0, %v2468
        %v2470 = vpop.f32.mrb[0].mxu0
        %v2471 = vpop.f32.mrb[0].mxu0
        %v2472 = vadd.f32 0.0, %v2471
        %v2473 = vpop.f32.mrb[0].mxu0
        %2474 = vmatprep.mubr.bf16.mxu0 0
        %2475 = vmatmul.mubr.bf16.gmra.mrb[0].mxu0 %v1763
        %v2476 = vpop.f32.mrb[0].mxu0
        %v2477 = vadd.f32 0.0, %v2476
        %v2478 = vpop.f32.mrb[0].mxu0
        %v2479 = vpop.f32.mrb[0].mxu0
        %v2480 = vadd.f32 0.0, %v2479
        %v2481 = vpop.f32.mrb[0].mxu0
        %2482 = vmatprep.mubr.bf16.mxu0 0
        %2483 = vmatmul.mubr.bf16.gmra.mrb[0].mxu0 %v1764
        %v2484 = vpop.f32.mrb[0].mxu0
        %v2485 = vadd.f32 0.0, %v2484
        %v2486 = vpop.f32.mrb[0].mxu0
        %v2487 = vpop.f32.mrb[0].mxu0
        %v2488 = vadd.f32 0.0, %v2487
        %v2489 = vpop.f32.mrb[0].mxu0
        %2490 = vmatprep.mubr.bf16.mxu0 0
        %2491 = vmatmul.mubr.bf16.gmra.mrb[0].mxu0 %v1765
        %v2492 = vpop.f32.mrb[0].mxu0
        %v2493 = vadd.f32 0.0, %v2492
        %v2494 = vpop.f32.mrb[0].mxu0
        %v2495 = vpop.f32.mrb[0].mxu0
        %v2496 = vadd.f32 0.0, %v2495
        %v2497 = vpop.f32.mrb[0].mxu0
        %2498 = vmatprep.mubr.bf16.mxu0 0
        %2499 = vmatmul.mubr.bf16.gmra.mrb[0].mxu0 %v1766
        %v2500 = vpop.f32.mrb[0].mxu0
        %v2501 = vadd.f32 0.0, %v2500
        %v2502 = vpop.f32.mrb[0].mxu0
        %v2503 = vpop.f32.mrb[0].mxu0
        %v2504 = vadd.f32 0.0, %v2503
        %v2505 = vpop.f32.mrb[0].mxu0
        %2506 = vmatprep.mubr.bf16.mxu0 0
        %2507 = vmatmul.mubr.bf16.gmra.mrb[0].mxu0 %v1767
        %v2508 = vpop.f32.mrb[0].mxu0
        %v2509 = vadd.f32 0.0, %v2508
        %v2510 = vpop.f32.mrb[0].mxu0
        %v2511 = vpop.f32.mrb[0].mxu0
        %v2512 = vadd.f32 0.0, %v2511
        %v2513 = vpop.f32.mrb[0].mxu0
        %2514 = vmatprep.mubr.bf16.mxu0 0
        %2515 = vmatmul.mubr.bf16.gmra.mrb[0].mxu0 %v1768
        %v2516 = vpop.f32.mrb[0].mxu0
        %v2517 = vadd.f32 0.0, %v2516
        %v2518 = vpop.f32.mrb[0].mxu0
        %v2519 = vpop.f32.mrb[0].mxu0
        %v2520 = vadd.f32 0.0, %v2519
        %v2521 = vpop.f32.mrb[0].mxu0
        %2522 = vmatprep.mubr.bf16.mxu0 0
        %2523 = vmatmul.mubr.bf16.gmra.mrb[0].mxu0 %v1769
        %v2524 = vpop.f32.mrb[0].mxu0
        %v2525 = vadd.f32 0.0, %v2524
        %v2526 = vpop.f32.mrb[0].mxu0
        %v2527 = vpop.f32.mrb[0].mxu0
        %v2528 = vadd.f32 0.0, %v2527
        %v2529 = vpop.f32.mrb[0].mxu0
        %2530 = vmatprep.mubr.bf16.mxu0 0
        %2531 = vmatmul.mubr.bf16.gmra.mrb[0].mxu0 %v1770
        %v2532 = vpop.f32.mrb[0].mxu0
        %v2533 = vadd.f32 0.0, %v2532
        %v2534 = vpop.f32.mrb[0].mxu0
        %v2535 = vpop.f32.mrb[0].mxu0
        %v2536 = vadd.f32 0.0, %v2535
        %v2537 = vpop.f32.mrb[0].mxu0
        %2538 = vmatprep.mubr.bf16.mxu0 0
        %2539 = vmatmul.mubr.bf16.gmra.mrb[0].mxu0 %v1771
        %v2540 = vpop.f32.mrb[0].mxu0
        %v2541 = vadd.f32 0.0, %v2540
        %v2542 = vpop.f32.mrb[0].mxu0
        %v2543 = vpop.f32.mrb[0].mxu0
        %v2544 = vadd.f32 0.0, %v2543
        %v2545 = vpop.f32.mrb[0].mxu0
        %2546 = vmatprep.mubr.bf16.mxu0 0
        %2547 = vmatmul.mubr.bf16.gmra.mrb[0].mxu0 %v1772
        %v2548 = vpop.f32.mrb[0].mxu0
        %v2549 = vadd.f32 0.0, %v2548
        %v2550 = vpop.f32.mrb[0].mxu0
        %v2551 = vpop.f32.mrb[0].mxu0
        %v2552 = vadd.f32 0.0, %v2551
        %v2553 = vpop.f32.mrb[0].mxu0
        %2554 = vmatprep.mubr.bf16.mxu0 0
        %2555 = vmatmul.mubr.bf16.gmra.mrb[0].mxu0 %v1773
        %v2556 = vpop.f32.mrb[0].mxu0
        %v2557 = vadd.f32 0.0, %v2556
        %v2558 = vpop.f32.mrb[0].mxu0
        %v2559 = vpop.f32.mrb[0].mxu0
        %v2560 = vadd.f32 0.0, %v2559
        %v2561 = vpop.f32.mrb[0].mxu0
        %2562 = vmatprep.mubr.bf16.mxu0 0
        %2563 = vmatmul.mubr.bf16.gmra.mrb[0].mxu0 %v1774
        %v2564 = vpop.f32.mrb[0].mxu0
        %v2565 = vadd.f32 0.0, %v2564
        %v2566 = vpop.f32.mrb[0].mxu0
        %v2567 = vpop.f32.mrb[0].mxu0
        %v2568 = vadd.f32 0.0, %v2567
        %v2569 = vpop.f32.mrb[0].mxu0
        %2570 = vmatprep.mubr.bf16.mxu0 0
        %2571 = vmatmul.mubr.bf16.gmra.mrb[0].mxu0 %v1775
        %v2572 = vpop.f32.mrb[0].mxu0
        %v2573 = vadd.f32 0.0, %v2572
        %v2574 = vpop.f32.mrb[0].mxu0
        %v2575 = vpop.f32.mrb[0].mxu0
        %v2576 = vadd.f32 0.0, %v2575
        %v2577 = vpop.f32.mrb[0].mxu0
        %2578 = vmatprep.mubr.bf16.mxu0 0
        %2579 = vmatmul.mubr.bf16.gmra.mrb[0].mxu0 %v1776
        %v2580 = vpop.f32.mrb[0].mxu0
        %v2581 = vadd.f32 0.0, %v2580
        %v2582 = vpop.f32.mrb[0].mxu0
        %v2583 = vpop.f32.mrb[0].mxu0
        %v2584 = vadd.f32 0.0, %v2583
        %v2585 = vpop.f32.mrb[0].mxu0
        %2586 = vmatprep.mubr.bf16.mxu0 0
        %2587 = vmatmul.mubr.bf16.gmra.mrb[0].mxu0 %v1777
        %v2588 = vpop.f32.mrb[0].mxu0
        %v2589 = vadd.f32 0.0, %v2588
        %v2590 = vpop.f32.mrb[0].mxu0
        %v2591 = vpop.f32.mrb[0].mxu0
        %v2592 = vadd.f32 0.0, %v2591
        %v2593 = vpop.f32.mrb[0].mxu0
        %2594 = vmatprep.mubr.bf16.mxu0 0
        %2595 = vmatmul.mubr.bf16.gmra.mrb[0].mxu0 %v1778
        %v2596 = vpop.f32.mrb[0].mxu0
        %v2597 = vadd.f32 0.0, %v2596
        %v2598 = vpop.f32.mrb[0].mxu0
        %v2599 = vpop.f32.mrb[0].mxu0
        %v2600 = vadd.f32 0.0, %v2599
        %v2601 = vpop.f32.mrb[0].mxu0
        %2602 = vmatprep.mubr.bf16.mxu0 0
        %2603 = vmatmul.mubr.bf16.gmra.mrb[0].mxu0 %v1779
        %v2604 = vpop.f32.mrb[0].mxu0
        %v2605 = vadd.f32 0.0, %v2604
        %v2606 = vpop.f32.mrb[0].mxu0
        %v2607 = vpop.f32.mrb[0].mxu0
        %v2608 = vadd.f32 0.0, %v2607
        %v2609 = vpop.f32.mrb[0].mxu0
        %2610 = vmatprep.mubr.bf16.mxu0 0
        %2611 = vmatmul.mubr.bf16.gmra.mrb[0].mxu0 %v1780
        %v2612 = vpop.f32.mrb[0].mxu0
        %v2613 = vadd.f32 0.0, %v2612
        %v2614 = vpop.f32.mrb[0].mxu0
        %v2615 = vpop.f32.mrb[0].mxu0
        %v2616 = vadd.f32 0.0, %v2615
        %v2617 = vpop.f32.mrb[0].mxu0
        %2618 = vmatprep.mubr.bf16.mxu0 0
        %2619 = vmatmul.mubr.bf16.gmra.mrb[0].mxu0 %v1781
        %v2620 = vpop.f32.mrb[0].mxu0
        %v2621 = vadd.f32 0.0, %v2620
        %v2622 = vpop.f32.mrb[0].mxu0
        %v2623 = vpop.f32.mrb[0].mxu0
        %v2624 = vadd.f32 0.0, %v2623
        %v2625 = vpop.f32.mrb[0].mxu0
        %2626 = vmatprep.mubr.bf16.mxu0 0
        %2627 = vmatmul.mubr.bf16.gmra.mrb[0].mxu0 %v1782
        %v2628 = vpop.f32.mrb[0].mxu0
        %v2629 = vadd.f32 0.0, %v2628
        %v2630 = vpop.f32.mrb[0].mxu0
        %v2631 = vpop.f32.mrb[0].mxu0
        %v2632 = vadd.f32 0.0, %v2631
        %v2633 = vpop.f32.mrb[0].mxu0
        %2634 = vmatprep.mubr.bf16.mxu0 0
        %2635 = vmatmul.mubr.bf16.gmra.mrb[0].mxu0 %v1783
        %v2636 = vpop.f32.mrb[0].mxu0
        %v2637 = vadd.f32 0.0, %v2636
        %v2638 = vpop.f32.mrb[0].mxu0
        %v2639 = vpop.f32.mrb[0].mxu0
        %v2640 = vadd.f32 0.0, %v2639
        %v2641 = vpop.f32.mrb[0].mxu0
        %2642 = vmatprep.mubr.bf16.mxu0 0
        %2643 = vmatmul.mubr.bf16.gmra.mrb[0].mxu0 %v1784
        %v2644 = vpop.f32.mrb[0].mxu0
        %v2645 = vadd.f32 0.0, %v2644
        %v2646 = vpop.f32.mrb[0].mxu0
        %v2647 = vpop.f32.mrb[0].mxu0
        %v2648 = vadd.f32 0.0, %v2647
        %v2649 = vpop.f32.mrb[0].mxu0
        %2650 = vmatprep.mubr.bf16.mxu0 0
        %2651 = vmatmul.mubr.bf16.gmra.mrb[0].mxu0 %v1785
        %v2652 = vpop.f32.mrb[0].mxu0
        %v2653 = vadd.f32 0.0, %v2652
        %v2654 = vpop.f32.mrb[0].mxu0
        %v2655 = vpop.f32.mrb[0].mxu0
        %v2656 = vadd.f32 0.0, %v2655
        %v2657 = vpop.f32.mrb[0].mxu0
        %2658 = vmatprep.mubr.bf16.mxu0 0
        %2659 = vmatmul.mubr.bf16.gmra.mrb[0].mxu0 %v1786
        %v2660 = vpop.f32.mrb[0].mxu0
        %v2661 = vadd.f32 0.0, %v2660
        %v2662 = vpop.f32.mrb[0].mxu0
        %v2663 = vpop.f32.mrb[0].mxu0
        %v2664 = vadd.f32 0.0, %v2663
        %v2665 = vpop.f32.mrb[0].mxu0
        %2666 = vmatprep.mubr.bf16.mxu0 0
        %2667 = vmatmul.mubr.bf16.gmra.mrb[0].mxu0 %v1787
        %v2668 = vpop.f32.mrb[0].mxu0
        %v2669 = vadd.f32 0.0, %v2668
        %v2670 = vpop.f32.mrb[0].mxu0
        %v2671 = vpop.f32.mrb[0].mxu0
        %v2672 = vadd.f32 0.0, %v2671
        %v2673 = vpop.f32.mrb[0].mxu0
        %2674 = vmatprep.mubr.bf16.mxu0 0
        %2675 = vmatmul.mubr.bf16.gmra.mrb[0].mxu0 %v1788
        %v2676 = vpop.f32.mrb[0].mxu0
        %v2677 = vadd.f32 0.0, %v2676
        %v2678 = vpop.f32.mrb[0].mxu0
        %v2679 = vpop.f32.mrb[0].mxu0
        %v2680 = vadd.f32 0.0, %v2679
        %v2681 = vpop.f32.mrb[0].mxu0
        %2682 = vmatprep.mubr.bf16.mxu0 0
        %2683 = vmatmul.mubr.bf16.gmra.mrb[0].mxu0 %v1789
        %v2684 = vpop.f32.mrb[0].mxu0
        %v2685 = vadd.f32 0.0, %v2684
        %v2686 = vpop.f32.mrb[0].mxu0
        %v2687 = vpop.f32.mrb[0].mxu0
        %v2688 = vadd.f32 0.0, %v2687
        %v2689 = vpop.f32.mrb[0].mxu0
        %2690 = vmatprep.mubr.bf16.mxu0 0
        %2691 = vmatmul.mubr.bf16.gmra.mrb[0].mxu0 %v1790
        %v2692 = vpop.f32.mrb[0].mxu0
        %v2693 = vadd.f32 0.0, %v2692
        %v2694 = vpop.f32.mrb[0].mxu0
        %v2695 = vpop.f32.mrb[0].mxu0
        %v2696 = vadd.f32 0.0, %v2695
        %v2697 = vpop.f32.mrb[0].mxu0
        %2698 = vmatprep.mubr.bf16.mxu0 0
        %2699 = vmatmul.mubr.bf16.gmra.mrb[0].mxu0 %v1791
        %v2700 = vpop.f32.mrb[0].mxu0
        %v2701 = vadd.f32 0.0, %v2700
        %v2702 = vpop.f32.mrb[0].mxu0
        %v2703 = vpop.f32.mrb[0].mxu0
        %v2704 = vadd.f32 0.0, %v2703
        %v2705 = vpop.f32.mrb[0].mxu0
        %2706 = vmatprep.mubr.bf16.mxu0 0
        %2707 = vmatmul.mubr.bf16.gmra.mrb[0].mxu0 %v1792
        %v2708 = vpop.f32.mrb[0].mxu0
        %v2709 = vadd.f32 0.0, %v2708
        %v2710 = vpop.f32.mrb[0].mxu0
        %v2711 = vpop.f32.mrb[0].mxu0
        %v2712 = vadd.f32 0.0, %v2711
        %v2713 = vpop.f32.mrb[0].mxu0
        %2714 = vmatprep.mubr.bf16.mxu0 0
        %2715 = vmatmul.mubr.bf16.gmra.mrb[0].mxu0 %v1793
        %v2716 = vpop.f32.mrb[0].mxu0
        %v2717 = vadd.f32 0.0, %v2716
        %v2718 = vpop.f32.mrb[0].mxu0
        %v2719 = vpop.f32.mrb[0].mxu0
        %v2720 = vadd.f32 0.0, %v2719
        %v2721 = vpop.f32.mrb[0].mxu0
        %2722 = vmatprep.mubr.bf16.mxu0 0
        %2723 = vmatmul.mubr.bf16.gmra.mrb[0].mxu0 %v1794
        %v2724 = vpop.f32.mrb[0].mxu0
        %v2725 = vadd.f32 0.0, %v2724
        %v2726 = vpop.f32.mrb[0].mxu0
        %v2727 = vpop.f32.mrb[0].mxu0
        %v2728 = vadd.f32 0.0, %v2727
        %v2729 = vpop.f32.mrb[0].mxu0
        %2730 = vmatprep.mubr.bf16.mxu0 0
        %2731 = vmatmul.mubr.bf16.gmra.mrb[0].mxu0 %v1795
        %v2732 = vpop.f32.mrb[0].mxu0
        %v2733 = vadd.f32 0.0, %v2732
        %v2734 = vpop.f32.mrb[0].mxu0
        %v2735 = vpop.f32.mrb[0].mxu0
        %v2736 = vadd.f32 0.0, %v2735
        %v2737 = vpop.f32.mrb[0].mxu0
        %2738 = vmatprep.mubr.bf16.mxu0 0
        %2739 = vmatmul.mubr.bf16.gmra.mrb[0].mxu0 %v1796
        %v2740 = vpop.f32.mrb[0].mxu0
        %v2741 = vadd.f32 0.0, %v2740
        %v2742 = vpop.f32.mrb[0].mxu0
        %v2743 = vpop.f32.mrb[0].mxu0
        %v2744 = vadd.f32 0.0, %v2743
        %v2745 = vpop.f32.mrb[0].mxu0
        %2746 = vmatprep.mubr.bf16.mxu0 0
        %2747 = vmatmul.mubr.bf16.gmra.mrb[0].mxu0 %v1797
        %v2748 = vpop.f32.mrb[0].mxu0
        %v2749 = vadd.f32 0.0, %v2748
        %v2750 = vpop.f32.mrb[0].mxu0
        %v2751 = vpop.f32.mrb[0].mxu0
        %v2752 = vadd.f32 0.0, %v2751
        %v2753 = vpop.f32.mrb[0].mxu0
        %2754 = vmatprep.mubr.bf16.mxu0 0
        %2755 = vmatmul.mubr.bf16.gmra.mrb[0].mxu0 %v1798
        %v2756 = vpop.f32.mrb[0].mxu0
        %v2757 = vadd.f32 0.0, %v2756
        %v2758 = vpop.f32.mrb[0].mxu0
        %v2759 = vpop.f32.mrb[0].mxu0
        %v2760 = vadd.f32 0.0, %v2759
        %v2761 = vpop.f32.mrb[0].mxu0
        %2762 = vmatprep.mubr.bf16.mxu0 0
        %2763 = vmatmul.mubr.bf16.gmra.mrb[0].mxu0 %v1799
        %v2764 = vpop.f32.mrb[0].mxu0
        %v2765 = vadd.f32 0.0, %v2764
        %v2766 = vpop.f32.mrb[0].mxu0
        %v2767 = vpop.f32.mrb[0].mxu0
        %v2768 = vadd.f32 0.0, %v2767
        %v2769 = vpop.f32.mrb[0].mxu0
        %2770 = vmatprep.mubr.bf16.mxu0 0
        %2771 = vmatmul.mubr.bf16.gmra.mrb[0].mxu0 %v1800
        %v2772 = vpop.f32.mrb[0].mxu0
        %v2773 = vadd.f32 0.0, %v2772
        %v2774 = vpop.f32.mrb[0].mxu0
        %v2775 = vpop.f32.mrb[0].mxu0
        %v2776 = vadd.f32 0.0, %v2775
        %v2777 = vpop.f32.mrb[0].mxu0
        %2778 = vmatprep.mubr.bf16.mxu0 0
        %2779 = vmatmul.mubr.bf16.gmra.mrb[0].mxu0 %v1801
        %v2780 = vpop.f32.mrb[0].mxu0
        %v2781 = vadd.f32 0.0, %v2780
        %v2782 = vpop.f32.mrb[0].mxu0
        %v2783 = vpop.f32.mrb[0].mxu0
        %v2784 = vadd.f32 0.0, %v2783
        %v2785 = vpop.f32.mrb[0].mxu0
        %2786 = vmatprep.mubr.bf16.mxu0 0
        %2787 = vmatmul.mubr.bf16.gmra.mrb[0].mxu0 %v1802
        %v2788 = vpop.f32.mrb[0].mxu0
        %v2789 = vadd.f32 0.0, %v2788
        %v2790 = vpop.f32.mrb[0].mxu0
        %v2791 = vpop.f32.mrb[0].mxu0
        %v2792 = vadd.f32 0.0, %v2791
        %v2793 = vpop.f32.mrb[0].mxu0
        %2794 = vmatprep.mubr.bf16.mxu0 0
        %2795 = vmatmul.mubr.bf16.gmra.mrb[0].mxu0 %v1803
        %v2796 = vpop.f32.mrb[0].mxu0
        %v2797 = vadd.f32 0.0, %v2796
        %v2798 = vpop.f32.mrb[0].mxu0
        %v2799 = vpop.f32.mrb[0].mxu0
        %v2800 = vadd.f32 0.0, %v2799
        %v2801 = vpop.f32.mrb[0].mxu0
        %2802 = vmatprep.mubr.bf16.mxu0 0
        %2803 = vmatmul.mubr.bf16.gmra.mrb[0].mxu0 %v1804
        %v2804 = vpop.f32.mrb[0].mxu0
        %v2805 = vadd.f32 0.0, %v2804
        %v2806 = vpop.f32.mrb[0].mxu0
        %v2807 = vpop.f32.mrb[0].mxu0
        %v2808 = vadd.f32 0.0, %v2807
        %v2809 = vpop.f32.mrb[0].mxu0
        %2810 = vmatprep.mubr.bf16.mxu0 0
        %2811 = vmatmul.mubr.bf16.gmra.mrb[0].mxu0 %v1805
        %v2812 = vpop.f32.mrb[0].mxu0
        %v2813 = vadd.f32 0.0, %v2812
        %v2814 = vpop.f32.mrb[0].mxu0
        %v2815 = vpop.f32.mrb[0].mxu0
        %v2816 = vadd.f32 0.0, %v2815
        %v2817 = vpop.f32.mrb[0].mxu0
        %2818 = vmatprep.mubr.bf16.mxu0 0
        %2819 = vmatmul.mubr.bf16.gmra.mrb[0].mxu0 %v1806
        %v2820 = vpop.f32.mrb[0].mxu0
        %v2821 = vadd.f32 0.0, %v2820
        %v2822 = vpop.f32.mrb[0].mxu0
        %v2823 = vpop.f32.mrb[0].mxu0
        %v2824 = vadd.f32 0.0, %v2823
        %v2825 = vpop.f32.mrb[0].mxu0
        %2826 = vmatprep.mubr.bf16.mxu0 0
        %2827 = vmatmul.mubr.bf16.gmra.mrb[0].mxu0 %v1807
        %v2828 = vpop.f32.mrb[0].mxu0
        %v2829 = vadd.f32 0.0, %v2828
        %v2830 = vpop.f32.mrb[0].mxu0
        %v2831 = vpop.f32.mrb[0].mxu0
        %v2832 = vadd.f32 0.0, %v2831
        %v2833 = vpop.f32.mrb[0].mxu0
        %2834 = vmatprep.mubr.bf16.mxu0 0
        %2835 = vmatmul.mubr.bf16.gmra.mrb[0].mxu0 %v1808
        %v2836 = vpop.f32.mrb[0].mxu0
        %v2837 = vadd.f32 0.0, %v2836
        %v2838 = vpop.f32.mrb[0].mxu0
        %v2839 = vpop.f32.mrb[0].mxu0
        %v2840 = vadd.f32 0.0, %v2839
        %v2841 = vpop.f32.mrb[0].mxu0
        %2842 = vmatprep.mubr.bf16.mxu0 0
        %2843 = vmatmul.mubr.bf16.gmra.mrb[0].mxu0 %v1809
        %v2844 = vpop.f32.mrb[0].mxu0
        %v2845 = vadd.f32 0.0, %v2844
        %v2846 = vpop.f32.mrb[0].mxu0
        %v2847 = vpop.f32.mrb[0].mxu0
        %v2848 = vadd.f32 0.0, %v2847
        %v2849 = vpop.f32.mrb[0].mxu0
        %2850 = vmatprep.mubr.bf16.mxu0 0
        %2851 = vmatmul.mubr.bf16.gmra.mrb[0].mxu0 %v1810
        %v2852 = vpop.f32.mrb[0].mxu0
        %v2853 = vadd.f32 0.0, %v2852
        %v2854 = vpop.f32.mrb[0].mxu0
        %v2855 = vpop.f32.mrb[0].mxu0
        %v2856 = vadd.f32 0.0, %v2855
        %v2857 = vpop.f32.mrb[0].mxu0
        %2858 = vmatprep.mubr.bf16.mxu0 0
        %2859 = vmatmul.mubr.bf16.gmra.mrb[0].mxu0 %v1811
        %v2860 = vpop.f32.mrb[0].mxu0
        %v2861 = vadd.f32 0.0, %v2860
        %v2862 = vpop.f32.mrb[0].mxu0
        %v2863 = vpop.f32.mrb[0].mxu0
        %v2864 = vadd.f32 0.0, %v2863
        %v2865 = vpop.f32.mrb[0].mxu0
        %2866 = vmatprep.mubr.bf16.mxu0 0
        %2867 = vmatmul.mubr.bf16.gmra.mrb[0].mxu0 %v1812
        %v2868 = vpop.f32.mrb[0].mxu0
        %v2869 = vadd.f32 0.0, %v2868
        %v2870 = vpop.f32.mrb[0].mxu0
        %v2871 = vpop.f32.mrb[0].mxu0
        %v2872 = vadd.f32 0.0, %v2871
        %v2873 = vpop.f32.mrb[0].mxu0
        %2874 = vmatprep.mubr.bf16.mxu0 0
        %2875 = vmatmul.mubr.bf16.gmra.mrb[0].mxu0 %v1813
        %v2876 = vpop.f32.mrb[0].mxu0
        %v2877 = vadd.f32 0.0, %v2876
        %v2878 = vpop.f32.mrb[0].mxu0
        %v2879 = vpop.f32.mrb[0].mxu0
        %v2880 = vadd.f32 0.0, %v2879
        %v2881 = vpop.f32.mrb[0].mxu0
        %2882 = vmatprep.mubr.bf16.mxu0 0
        %2883 = vmatmul.mubr.bf16.gmra.mrb[0].mxu0 %v1814
        %v2884 = vpop.f32.mrb[0].mxu0
        %v2885 = vadd.f32 0.0, %v2884
        %v2886 = vpop.f32.mrb[0].mxu0
        %v2887 = vpop.f32.mrb[0].mxu0
        %v2888 = vadd.f32 0.0, %v2887
        %v2889 = vpop.f32.mrb[0].mxu0
        %2890 = vmatprep.mubr.bf16.mxu0 0
        %2891 = vmatmul.mubr.bf16.gmra.mrb[0].mxu0 %v1815
        %v2892 = vpop.f32.mrb[0].mxu0
        %v2893 = vadd.f32 0.0, %v2892
        %v2894 = vpop.f32.mrb[0].mxu0
        %v2895 = vpop.f32.mrb[0].mxu0
        %v2896 = vadd.f32 0.0, %v2895
        %v2897 = vpop.f32.mrb[0].mxu0
        %2898 = vmatprep.mubr.bf16.mxu0 0
        %2899 = vmatmul.mubr.bf16.gmra.mrb[0].mxu0 %v1816
        %v2900 = vpop.f32.mrb[0].mxu0
        %v2901 = vadd.f32 0.0, %v2900
        %v2902 = vpop.f32.mrb[0].mxu0
        %v2903 = vpop.f32.mrb[0].mxu0
        %v2904 = vadd.f32 0.0, %v2903
        %v2905 = vpop.f32.mrb[0].mxu0
        %2906 = vmatprep.mubr.bf16.mxu0 0
        %2907 = vmatmul.mubr.bf16.gmra.mrb[0].mxu0 %v1817
        %v2908 = vpop.f32.mrb[0].mxu0
        %v2909 = vadd.f32 0.0, %v2908
        %v2910 = vpop.f32.mrb[0].mxu0
        %v2911 = vpop.f32.mrb[0].mxu0
        %v2912 = vadd.f32 0.0, %v2911
        %v2913 = vpop.f32.mrb[0].mxu0
        %2914 = vmatprep.mubr.bf16.mxu0 0
        %2915 = vmatmul.mubr.bf16.gmra.mrb[0].mxu0 %v1818
        %v2916 = vpop.f32.mrb[0].mxu0
        %v2917 = vadd.f32 0.0, %v2916
        %v2918 = vpop.f32.mrb[0].mxu0
        %v2919 = vpop.f32.mrb[0].mxu0
        %v2920 = vadd.f32 0.0, %v2919
        %v2921 = vpop.f32.mrb[0].mxu0
        %2922 = vmatprep.mubr.bf16.mxu0 0
        %2923 = vmatmul.mubr.bf16.gmra.mrb[0].mxu0 %v1819
        %v2924 = vpop.f32.mrb[0].mxu0
        %v2925 = vadd.f32 0.0, %v2924
        %v2926 = vpop.f32.mrb[0].mxu0
        %v2927 = vpop.f32.mrb[0].mxu0
        %v2928 = vadd.f32 0.0, %v2927
        %v2929 = vpop.f32.mrb[0].mxu0
        %2930 = vmatprep.mubr.bf16.mxu0 0
        %2931 = vmatmul.mubr.bf16.gmra.mrb[0].mxu0 %v1820
        %v2932 = vpop.f32.mrb[0].mxu0
        %v2933 = vadd.f32 0.0, %v2932
        %v2934 = vpop.f32.mrb[0].mxu0
        %v2935 = vpop.f32.mrb[0].mxu0
        %v2936 = vadd.f32 0.0, %v2935
        %v2937 = vpop.f32.mrb[0].mxu0
        %2938 = vmatprep.mubr.bf16.mxu0 0
        %2939 = vmatmul.mubr.bf16.gmra.mrb[0].mxu0 %v1821
        %v2940 = vpop.f32.mrb[0].mxu0
        %v2941 = vadd.f32 0.0, %v2940
        %v2942 = vpop.f32.mrb[0].mxu0
        %v2943 = vpop.f32.mrb[0].mxu0
        %v2944 = vadd.f32 0.0, %v2943
        %v2945 = vpop.f32.mrb[0].mxu0
        %2946 = vmatprep.mubr.bf16.mxu0 0
        %2947 = vmatmul.mubr.bf16.gmra.mrb[0].mxu0 %v1822
        %v2948 = vpop.f32.mrb[0].mxu0
        %v2949 = vadd.f32 0.0, %v2948
        %v2950 = vpop.f32.mrb[0].mxu0
        %v2951 = vpop.f32.mrb[0].mxu0
        %v2952 = vadd.f32 0.0, %v2951
        %v2953 = vpop.f32.mrb[0].mxu0
        %2954 = vmatprep.mubr.bf16.mxu0 0
        %2955 = vmatmul.mubr.bf16.gmra.mrb[0].mxu0 %v1823
        %v2956 = vpop.f32.mrb[0].mxu0
        %v2957 = vadd.f32 0.0, %v2956
        %v2958 = vpop.f32.mrb[0].mxu0
        %v2959 = vpop.f32.mrb[0].mxu0
        %v2960 = vadd.f32 0.0, %v2959
        %v2961 = vpop.f32.mrb[0].mxu0
        %2962 = vmatprep.mubr.bf16.mxu0 0
        %2963 = vmatmul.mubr.bf16.gmra.mrb[0].mxu0 %v1824
        %v2964 = vpop.f32.mrb[0].mxu0
        %v2965 = vadd.f32 0.0, %v2964
        %v2966 = vpop.f32.mrb[0].mxu0
        %v2967 = vpop.f32.mrb[0].mxu0
        %v2968 = vadd.f32 0.0, %v2967
        %v2969 = vpop.f32.mrb[0].mxu0
        %2970 = vmatprep.mubr.bf16.mxu0 0
        %2971 = vmatmul.mubr.bf16.gmra.mrb[0].mxu0 %v1825
        %v2972 = vpop.f32.mrb[0].mxu0
        %v2973 = vadd.f32 0.0, %v2972
        %v2974 = vpop.f32.mrb[0].mxu0
        %v2975 = vpop.f32.mrb[0].mxu0
        %v2976 = vadd.f32 0.0, %v2975
        %v2977 = vpop.f32.mrb[0].mxu0
        %2978 = vmatprep.mubr.bf16.mxu0 0
        %2979 = vmatmul.mubr.bf16.gmra.mrb[0].mxu0 %v1826
        %v2980 = vpop.f32.mrb[0].mxu0
        %v2981 = vadd.f32 0.0, %v2980
        %v2982 = vpop.f32.mrb[0].mxu0
        %v2983 = vpop.f32.mrb[0].mxu0
        %v2984 = vadd.f32 0.0, %v2983
        %v2985 = vpop.f32.mrb[0].mxu0
        %2986 = vmatprep.mubr.bf16.mxu0 0
        %2987 = vmatmul.mubr.bf16.gmra.mrb[0].mxu0 %v1827
        %v2988 = vpop.f32.mrb[0].mxu0
        %v2989 = vadd.f32 0.0, %v2988
        %v2990 = vpop.f32.mrb[0].mxu0
        %v2991 = vpop.f32.mrb[0].mxu0
        %v2992 = vadd.f32 0.0, %v2991
        %v2993 = vpop.f32.mrb[0].mxu0
        %2994 = vmatprep.mubr.bf16.mxu0 0
        %2995 = vmatmul.mubr.bf16.gmra.mrb[0].mxu0 %v1828
        %v2996 = vpop.f32.mrb[0].mxu0
        %v2997 = vadd.f32 0.0, %v2996
        %v2998 = vpop.f32.mrb[0].mxu0
        %v2999 = vpop.f32.mrb[0].mxu0
        %v3000 = vadd.f32 0.0, %v2999
        %v3001 = vpop.f32.mrb[0].mxu0
        %3002 = vmatprep.mubr.bf16.mxu0 0
        %3003 = vmatmul.mubr.bf16.gmra.mrb[0].mxu0 %v1829
        %v3004 = vpop.f32.mrb[0].mxu0
        %v3005 = vadd.f32 0.0, %v3004
        %v3006 = vpop.f32.mrb[0].mxu0
        %v3007 = vpop.f32.mrb[0].mxu0
        %v3008 = vadd.f32 0.0, %v3007
        %v3009 = vpop.f32.mrb[0].mxu0
        %3010 = vmatprep.mubr.bf16.mxu0 0
        %3011 = vmatmul.mubr.bf16.gmra.mrb[0].mxu0 %v1830
        %v3012 = vpop.f32.mrb[0].mxu0
        %v3013 = vadd.f32 0.0, %v3012
        %v3014 = vpop.f32.mrb[0].mxu0
        %v3015 = vpop.f32.mrb[0].mxu0
        %v3016 = vadd.f32 0.0, %v3015
        %v3017 = vpop.f32.mrb[0].mxu0
        %3018 = vmatprep.mubr.bf16.mxu0 0
        %3019 = vmatmul.mubr.bf16.gmra.mrb[0].mxu0 %v1831
        %v3020 = vpop.f32.mrb[0].mxu0
        %v3021 = vadd.f32 0.0, %v3020
        %v3022 = vpop.f32.mrb[0].mxu0
        %v3023 = vpop.f32.mrb[0].mxu0
        %v3024 = vadd.f32 0.0, %v3023
        %v3025 = vpop.f32.mrb[0].mxu0
        %3026 = vmatprep.mubr.bf16.mxu0 0
        %3027 = vmatmul.mubr.bf16.gmra.mrb[0].mxu0 %v1832
        %v3028 = vpop.f32.mrb[0].mxu0
        %v3029 = vadd.f32 0.0, %v3028
        %v3030 = vpop.f32.mrb[0].mxu0
        %v3031 = vpop.f32.mrb[0].mxu0
        %v3032 = vadd.f32 0.0, %v3031
        %v3033 = vpop.f32.mrb[0].mxu0
        %3034 = vmatprep.mubr.bf16.mxu0 0
        %3035 = vmatmul.mubr.bf16.gmra.mrb[0].mxu0 %v1833
        %v3036 = vpop.f32.mrb[0].mxu0
        %v3037 = vadd.f32 0.0, %v3036
        %v3038 = vpop.f32.mrb[0].mxu0
        %v3039 = vpop.f32.mrb[0].mxu0
        %v3040 = vadd.f32 0.0, %v3039
        %v3041 = vpop.f32.mrb[0].mxu0
        %3042 = vmatprep.mubr.bf16.mxu0 0
        %3043 = vmatmul.mubr.bf16.gmra.mrb[0].mxu0 %v1834
        %v3044 = vpop.f32.mrb[0].mxu0
        %v3045 = vadd.f32 0.0, %v3044
        %v3046 = vpop.f32.mrb[0].mxu0
        %v3047 = vpop.f32.mrb[0].mxu0
        %v3048 = vadd.f32 0.0, %v3047
        %v3049 = vpop.f32.mrb[0].mxu0
        %3050 = vmatprep.mubr.bf16.mxu0 0
        %3051 = vmatmul.mubr.bf16.gmra.mrb[0].mxu0 %v1835
        %v3052 = vpop.f32.mrb[0].mxu0
        %v3053 = vadd.f32 0.0, %v3052
        %v3054 = vpop.f32.mrb[0].mxu0
        %v3055 = vpop.f32.mrb[0].mxu0
        %v3056 = vadd.f32 0.0, %v3055
        %v3057 = vpop.f32.mrb[0].mxu0
        %3058 = vmatprep.mubr.bf16.mxu0 0
        %3059 = vmatmul.mubr.bf16.gmra.mrb[0].mxu0 %v1836
        %v3060 = vpop.f32.mrb[0].mxu0
        %v3061 = vadd.f32 0.0, %v3060
        %v3062 = vpop.f32.mrb[0].mxu0
        %v3063 = vpop.f32.mrb[0].mxu0
        %v3064 = vadd.f32 0.0, %v3063
        %v3065 = vpop.f32.mrb[0].mxu0
        %3066 = vmatprep.mubr.bf16.mxu0 0
        %3067 = vmatmul.mubr.bf16.gmra.mrb[0].mxu0 %v1837
        %v3068 = vpop.f32.mrb[0].mxu0
        %v3069 = vadd.f32 0.0, %v3068
        %v3070 = vpop.f32.mrb[0].mxu0
        %v3071 = vpop.f32.mrb[0].mxu0
        %v3072 = vadd.f32 0.0, %v3071
        %v3073 = vpop.f32.mrb[0].mxu0
        %3074 = vmatprep.mubr.bf16.mxu0 0
        %3075 = vmatmul.mubr.bf16.gmra.mrb[0].mxu0 %v1838
        %v3076 = vpop.f32.mrb[0].mxu0
        %v3077 = vadd.f32 0.0, %v3076
        %v3078 = vpop.f32.mrb[0].mxu0
        %v3079 = vpop.f32.mrb[0].mxu0
        %v3080 = vadd.f32 0.0, %v3079
        %v3081 = vpop.f32.mrb[0].mxu0
        %3082 = vmatprep.mubr.bf16.mxu0 0
        %3083 = vmatmul.mubr.bf16.gmra.mrb[0].mxu0 %v1839
        %v3084 = vpop.f32.mrb[0].mxu0
        %v3085 = vadd.f32 0.0, %v3084
        %v3086 = vpop.f32.mrb[0].mxu0
        %v3087 = vpop.f32.mrb[0].mxu0
        %v3088 = vadd.f32 0.0, %v3087
        %v3089 = vpop.f32.mrb[0].mxu0
        %3090 = vmatprep.mubr.bf16.mxu0 0
        %3091 = vmatmul.mubr.bf16.gmra.mrb[0].mxu0 %v1840
        %v3092 = vpop.f32.mrb[0].mxu0
        %v3093 = vadd.f32 0.0, %v3092
        %v3094 = vpop.f32.mrb[0].mxu0
        %v3095 = vpop.f32.mrb[0].mxu0
        %v3096 = vadd.f32 0.0, %v3095
        %v3097 = vpop.f32.mrb[0].mxu0
        %3098 = vmatprep.mubr.bf16.mxu0 0
        %3099 = vmatmul.mubr.bf16.gmra.mrb[0].mxu0 %v1841
        %v3100 = vpop.f32.mrb[0].mxu0
        %v3101 = vadd.f32 0.0, %v3100
        %v3102 = vpop.f32.mrb[0].mxu0
        %v3103 = vpop.f32.mrb[0].mxu0
        %v3104 = vadd.f32 0.0, %v3103
        %v3105 = vpop.f32.mrb[0].mxu0
        %3106 = vmatprep.mubr.bf16.mxu0 0
        %3107 = vmatmul.mubr.bf16.gmra.mrb[0].mxu0 %v1842
        %v3108 = vpop.f32.mrb[0].mxu0
        %v3109 = vadd.f32 0.0, %v3108
        %v3110 = vpop.f32.mrb[0].mxu0
        %v3111 = vpop.f32.mrb[0].mxu0
        %v3112 = vadd.f32 0.0, %v3111
        %v3113 = vpop.f32.mrb[0].mxu0
        %3114 = vmatprep.mubr.bf16.mxu0 0
        %3115 = vmatmul.mubr.bf16.gmra.mrb[0].mxu0 %v1843
        %v3116 = vpop.f32.mrb[0].mxu0
        %v3117 = vadd.f32 0.0, %v3116
        %v3118 = vpop.f32.mrb[0].mxu0
        %v3119 = vpop.f32.mrb[0].mxu0
        %v3120 = vadd.f32 0.0, %v3119
        %v3121 = vpop.f32.mrb[0].mxu0
        %3122 = vmatprep.mubr.bf16.mxu0 0
        %3123 = vmatmul.mubr.bf16.gmra.mrb[0].mxu0 %v1844
        %v3124 = vpop.f32.mrb[0].mxu0
        %v3125 = vadd.f32 0.0, %v3124
        %v3126 = vpop.f32.mrb[0].mxu0
        %v3127 = vpop.f32.mrb[0].mxu0
        %v3128 = vadd.f32 0.0, %v3127
        %v3129 = vpop.f32.mrb[0].mxu0
        %3130 = vmatprep.mubr.bf16.mxu0 0
        %3131 = vmatmul.mubr.bf16.gmra.mrb[0].mxu0 %v1845
        %v3132 = vpop.f32.mrb[0].mxu0
        %v3133 = vadd.f32 0.0, %v3132
        %v3134 = vpop.f32.mrb[0].mxu0
        %v3135 = vpop.f32.mrb[0].mxu0
        %v3136 = vadd.f32 0.0, %v3135
        %v3137 = vpop.f32.mrb[0].mxu0
        %3138 = vmatprep.mubr.bf16.mxu0 0
        %3139 = vmatmul.mubr.bf16.gmra.mrb[0].mxu0 %v1846
        %v3140 = vpop.f32.mrb[0].mxu0
        %v3141 = vadd.f32 0.0, %v3140
        %v3142 = vpop.f32.mrb[0].mxu0
        %v3143 = vpop.f32.mrb[0].mxu0
        %v3144 = vadd.f32 0.0, %v3143
        %v3145 = vpop.f32.mrb[0].mxu0
        %3146 = vmatprep.mubr.bf16.mxu0 0
        %3147 = vmatmul.mubr.bf16.gmra.mrb[0].mxu0 %v1847
        %v3148 = vpop.f32.mrb[0].mxu0
        %v3149 = vadd.f32 0.0, %v3148
        %v3150 = vpop.f32.mrb[0].mxu0
        %v3151 = vpop.f32.mrb[0].mxu0
        %v3152 = vadd.f32 0.0, %v3151
        %v3153 = vpop.f32.mrb[0].mxu0
        %3154 = vmatprep.mubr.bf16.mxu0 0
        %3155 = vmatmul.mubr.bf16.gmra.mrb[0].mxu0 %v1848
        %v3156 = vpop.f32.mrb[0].mxu0
        %v3157 = vadd.f32 0.0, %v3156
        %v3158 = vpop.f32.mrb[0].mxu0
        %v3159 = vpop.f32.mrb[0].mxu0
        %v3160 = vadd.f32 0.0, %v3159
        %v3161 = vpop.f32.mrb[0].mxu0
        %3162 = vmatprep.mubr.bf16.mxu0 0
        %3163 = vmatmul.mubr.bf16.gmra.mrb[0].mxu0 %v1849
        %v3164 = vpop.f32.mrb[0].mxu0
        %v3165 = vadd.f32 0.0, %v3164
        %v3166 = vpop.f32.mrb[0].mxu0
        %v3167 = vpop.f32.mrb[0].mxu0
        %v3168 = vadd.f32 0.0, %v3167
        %v3169 = vpop.f32.mrb[0].mxu0
        %3170 = vmatprep.mubr.bf16.mxu0 0
        %3171 = vmatmul.mubr.bf16.gmra.mrb[0].mxu0 %v1850
        %v3172 = vpop.f32.mrb[0].mxu0
        %v3173 = vadd.f32 0.0, %v3172
        %v3174 = vpop.f32.mrb[0].mxu0
        %v3175 = vpop.f32.mrb[0].mxu0
        %v3176 = vadd.f32 0.0, %v3175
        %v3177 = vpop.f32.mrb[0].mxu0
        %3178 = vmatprep.mubr.bf16.mxu0 0
        %3179 = vmatmul.mubr.bf16.gmra.mrb[0].mxu0 %v1851
        %v3180 = vpop.f32.mrb[0].mxu0
        %v3181 = vadd.f32 0.0, %v3180
        %v3182 = vpop.f32.mrb[0].mxu0
        %v3183 = vpop.f32.mrb[0].mxu0
        %v3184 = vadd.f32 0.0, %v3183
        %v3185 = vpop.f32.mrb[0].mxu0
        %3186 = vmatprep.mubr.bf16.mxu0 0
        %3187 = vmatmul.mubr.bf16.gmra.mrb[0].mxu0 %v1852
        %v3188 = vpop.f32.mrb[0].mxu0
        %v3189 = vadd.f32 0.0, %v3188
        %v3190 = vpop.f32.mrb[0].mxu0
        %v3191 = vpop.f32.mrb[0].mxu0
        %v3192 = vadd.f32 0.0, %v3191
        %v3193 = vpop.f32.mrb[0].mxu0
        %3194 = vmatprep.mubr.bf16.mxu0 0
        %3195 = vmatmul.mubr.bf16.gmra.mrb[0].mxu0 %v1853
        %v3196 = vpop.f32.mrb[0].mxu0
        %v3197 = vadd.f32 0.0, %v3196
        %v3198 = vpop.f32.mrb[0].mxu0
        %v3199 = vpop.f32.mrb[0].mxu0
        %v3200 = vadd.f32 0.0, %v3199
        %v3201 = vpop.f32.mrb[0].mxu0
        %3202 = vmatprep.mubr.bf16.mxu0 0
        %3203 = vmatmul.mubr.bf16.gmra.mrb[0].mxu0 %v1854
        %v3204 = vpop.f32.mrb[0].mxu0
        %v3205 = vadd.f32 0.0, %v3204
        %v3206 = vpop.f32.mrb[0].mxu0
        %v3207 = vpop.f32.mrb[0].mxu0
        %v3208 = vadd.f32 0.0, %v3207
        %v3209 = vpop.f32.mrb[0].mxu0
        %3210 = vmatprep.mubr.bf16.mxu0 0
        %3211 = vmatmul.mubr.bf16.gmra.mrb[0].mxu0 %v1855
        %v3212 = vpop.f32.mrb[0].mxu0
        %v3213 = vadd.f32 0.0, %v3212
        %v3214 = vpop.f32.mrb[0].mxu0
        %v3215 = vpop.f32.mrb[0].mxu0
        %v3216 = vadd.f32 0.0, %v3215
        %v3217 = vpop.f32.mrb[0].mxu0
        %3218 = vmatprep.mubr.bf16.mxu0 0
        %3219 = vmatmul.mubr.bf16.gmra.mrb[0].mxu0 %v1856
        %v3220 = vpop.f32.mrb[0].mxu0
        %v3221 = vadd.f32 0.0, %v3220
        %v3222 = vpop.f32.mrb[0].mxu0
        %v3223 = vpop.f32.mrb[0].mxu0
        %v3224 = vadd.f32 0.0, %v3223
        %v3225 = vpop.f32.mrb[0].mxu0
        %3226 = vmatprep.mubr.bf16.mxu0 0
        %3227 = vmatmul.mubr.bf16.gmra.mrb[0].mxu0 %v1857
        %v3228 = vpop.f32.mrb[0].mxu0
        %v3229 = vadd.f32 0.0, %v3228
        %v3230 = vpop.f32.mrb[0].mxu0
        %v3231 = vpop.f32.mrb[0].mxu0
        %v3232 = vadd.f32 0.0, %v3231
        %v3233 = vpop.f32.mrb[0].mxu0
        %3234 = vmatprep.mubr.bf16.mxu0 0
        %3235 = vmatmul.mubr.bf16.gmra.mrb[0].mxu0 %v1858
        %v3236 = vpop.f32.mrb[0].mxu0
        %v3237 = vadd.f32 0.0, %v3236
        %v3238 = vpop.f32.mrb[0].mxu0
        %v3239 = vpop.f32.mrb[0].mxu0
        %v3240 = vadd.f32 0.0, %v3239
        %v3241 = vpop.f32.mrb[0].mxu0
        %3242 = vmatprep.mubr.bf16.mxu0 0
        %3243 = vmatmul.mubr.bf16.gmra.mrb[0].mxu0 %v1859
        %v3244 = vpop.f32.mrb[0].mxu0
        %v3245 = vadd.f32 0.0, %v3244
        %v3246 = vpop.f32.mrb[0].mxu0
        %v3247 = vpop.f32.mrb[0].mxu0
        %v3248 = vadd.f32 0.0, %v3247
        %v3249 = vpop.f32.mrb[0].mxu0
        %3250 = vmatprep.mubr.bf16.mxu0 0
        %3251 = vmatmul.mubr.bf16.gmra.mrb[0].mxu0 %v1860
        %v3252 = vpop.f32.mrb[0].mxu0
        %v3253 = vadd.f32 0.0, %v3252
        %v3254 = vpop.f32.mrb[0].mxu0
        %v3255 = vpop.f32.mrb[0].mxu0
        %v3256 = vadd.f32 0.0, %v3255
        %v3257 = vpop.f32.mrb[0].mxu0
        %3258 = vmatprep.mubr.bf16.mxu0 0
        %3259 = vmatmul.mubr.bf16.gmra.mrb[0].mxu0 %v1861
        %v3260 = vpop.f32.mrb[0].mxu0
        %v3261 = vadd.f32 0.0, %v3260
        %v3262 = vpop.f32.mrb[0].mxu0
        %v3263 = vpop.f32.mrb[0].mxu0
        %v3264 = vadd.f32 0.0, %v3263
        %v3265 = vpop.f32.mrb[0].mxu0
        %3266 = vmatprep.mubr.bf16.mxu0 0
        %3267 = vmatmul.mubr.bf16.gmra.mrb[0].mxu0 %v1862
        %v3268 = vpop.f32.mrb[0].mxu0
        %v3269 = vadd.f32 0.0, %v3268
        %v3270 = vpop.f32.mrb[0].mxu0
        %v3271 = vpop.f32.mrb[0].mxu0
        %v3272 = vadd.f32 0.0, %v3271
        %v3273 = vpop.f32.mrb[0].mxu0
        %3274 = vmatprep.mubr.bf16.mxu0 0
        %3275 = vmatmul.mubr.bf16.gmra.mrb[0].mxu0 %v1863
        %v3276 = vpop.f32.mrb[0].mxu0
        %v3277 = vadd.f32 0.0, %v3276
        %v3278 = vpop.f32.mrb[0].mxu0
        %v3279 = vpop.f32.mrb[0].mxu0
        %v3280 = vadd.f32 0.0, %v3279
        %v3281 = vpop.f32.mrb[0].mxu0
        %3282 = vmatprep.mubr.bf16.mxu0 0
        %3283 = vmatmul.mubr.bf16.gmra.mrb[0].mxu0 %v1864
        %v3284 = vpop.f32.mrb[0].mxu0
        %v3285 = vadd.f32 0.0, %v3284
        %v3286 = vpop.f32.mrb[0].mxu0
        %v3287 = vpop.f32.mrb[0].mxu0
        %v3288 = vadd.f32 0.0, %v3287
        %v3289 = vpop.f32.mrb[0].mxu0
        %3290 = vmatprep.mubr.bf16.mxu0 0
        %3291 = vmatmul.mubr.bf16.gmra.mrb[0].mxu0 %v1865
        %v3292 = vpop.f32.mrb[0].mxu0
        %v3293 = vadd.f32 0.0, %v3292
        %v3294 = vpop.f32.mrb[0].mxu0
        %v3295 = vpop.f32.mrb[0].mxu0
        %v3296 = vadd.f32 0.0, %v3295
        %v3297 = vpop.f32.mrb[0].mxu0
        %3298 = vmatprep.mubr.bf16.mxu0 0
        %3299 = vmatmul.mubr.bf16.gmra.mrb[0].mxu0 %v1866
        %v3300 = vpop.f32.mrb[0].mxu0
        %v3301 = vadd.f32 0.0, %v3300
        %v3302 = vpop.f32.mrb[0].mxu0
        %v3303 = vpop.f32.mrb[0].mxu0
        %v3304 = vadd.f32 0.0, %v3303
        %v3305 = vpop.f32.mrb[0].mxu0
        %3306 = vmatprep.mubr.bf16.mxu0 0
        %3307 = vmatmul.mubr.bf16.gmra.mrb[0].mxu0 %v1867
        %v3308 = vpop.f32.mrb[0].mxu0
        %v3309 = vadd.f32 0.0, %v3308
        %v3310 = vpop.f32.mrb[0].mxu0
        %v3311 = vpop.f32.mrb[0].mxu0
        %v3312 = vadd.f32 0.0, %v3311
        %v3313 = vpop.f32.mrb[0].mxu0
        %3314 = vmatprep.mubr.bf16.mxu0 0
        %3315 = vmatmul.mubr.bf16.gmra.mrb[0].mxu0 %v1868
        %v3316 = vpop.f32.mrb[0].mxu0
        %v3317 = vadd.f32 0.0, %v3316
        %v3318 = vpop.f32.mrb[0].mxu0
        %v3319 = vpop.f32.mrb[0].mxu0
        %v3320 = vadd.f32 0.0, %v3319
        %v3321 = vpop.f32.mrb[0].mxu0
        %3322 = vmatprep.mubr.bf16.mxu0 0
        %3323 = vmatmul.mubr.bf16.gmra.mrb[0].mxu0 %v1869
        %v3324 = vpop.f32.mrb[0].mxu0
        %v3325 = vadd.f32 0.0, %v3324
        %v3326 = vpop.f32.mrb[0].mxu0
        %v3327 = vpop.f32.mrb[0].mxu0
        %v3328 = vadd.f32 0.0, %v3327
        %v3329 = vpop.f32.mrb[0].mxu0
        %3330 = vmatprep.mubr.bf16.mxu0 0
        %3331 = vmatmul.mubr.bf16.gmra.mrb[0].mxu0 %v1870
        %v3332 = vpop.f32.mrb[0].mxu0
        %v3333 = vadd.f32 0.0, %v3332
        %v3334 = vpop.f32.mrb[0].mxu0
        %v3335 = vpop.f32.mrb[0].mxu0
        %v3336 = vadd.f32 0.0, %v3335
        %v3337 = vpop.f32.mrb[0].mxu0
        %3338 = vmatprep.mubr.bf16.mxu0 0
        %3339 = vmatmul.mubr.bf16.gmra.mrb[0].mxu0 %v1871
        %v3340 = vpop.f32.mrb[0].mxu0
        %v3341 = vadd.f32 0.0, %v3340
        %v3342 = vpop.f32.mrb[0].mxu0
        %v3343 = vpop.f32.mrb[0].mxu0
        %v3344 = vadd.f32 0.0, %v3343
        %v3345 = vpop.f32.mrb[0].mxu0
        %3346 = vmatprep.mubr.bf16.mxu0 0
        %3347 = vmatmul.mubr.bf16.gmra.mrb[0].mxu0 %v1872
        %v3348 = vpop.f32.mrb[0].mxu0
        %v3349 = vadd.f32 0.0, %v3348
        %v3350 = vpop.f32.mrb[0].mxu0
        %v3351 = vpop.f32.mrb[0].mxu0
        %v3352 = vadd.f32 0.0, %v3351
        %v3353 = vpop.f32.mrb[0].mxu0
        %3354 = vmatprep.mubr.bf16.mxu0 0
        %3355 = vmatmul.mubr.bf16.gmra.mrb[0].mxu0 %v1873
        %v3356 = vpop.f32.mrb[0].mxu0
        %v3357 = vadd.f32 0.0, %v3356
        %v3358 = vpop.f32.mrb[0].mxu0
        %v3359 = vpop.f32.mrb[0].mxu0
        %v3360 = vadd.f32 0.0, %v3359
        %v3361 = vpop.f32.mrb[0].mxu0
        %3362 = vmatprep.mubr.bf16.mxu0 0
        %3363 = vmatmul.mubr.bf16.gmra.mrb[0].mxu0 %v1874
        %v3364 = vpop.f32.mrb[0].mxu0
        %v3365 = vadd.f32 0.0, %v3364
        %v3366 = vpop.f32.mrb[0].mxu0
        %v3367 = vpop.f32.mrb[0].mxu0
        %v3368 = vadd.f32 0.0, %v3367
        %v3369 = vpop.f32.mrb[0].mxu0
        %3370 = vmatprep.mubr.bf16.mxu0 0
        %3371 = vmatmul.mubr.bf16.gmra.mrb[0].mxu0 %v1875
        %v3372 = vpop.f32.mrb[0].mxu0
        %v3373 = vadd.f32 0.0, %v3372
        %v3374 = vpop.f32.mrb[0].mxu0
        %v3375 = vpop.f32.mrb[0].mxu0
        %v3376 = vadd.f32 0.0, %v3375
        %v3377 = vpop.f32.mrb[0].mxu0
        %3378 = vmatprep.mubr.bf16.mxu0 0
        %3379 = vmatmul.mubr.bf16.gmra.mrb[0].mxu0 %v1876
        %v3380 = vpop.f32.mrb[0].mxu0
        %v3381 = vadd.f32 0.0, %v3380
        %v3382 = vpop.f32.mrb[0].mxu0
        %v3383 = vpop.f32.mrb[0].mxu0
        %v3384 = vadd.f32 0.0, %v3383
        %v3385 = vpop.f32.mrb[0].mxu0
        %3386 = vmatprep.mubr.bf16.mxu0 0
        %3387 = vmatmul.mubr.bf16.gmra.mrb[0].mxu0 %v1877
        %v3388 = vpop.f32.mrb[0].mxu0
        %v3389 = vadd.f32 0.0, %v3388
        %v3390 = vpop.f32.mrb[0].mxu0
        %v3391 = vpop.f32.mrb[0].mxu0
        %v3392 = vadd.f32 0.0, %v3391
        %v3393 = vpop.f32.mrb[0].mxu0
        %3394 = vmatprep.mubr.bf16.mxu0 0
        %3395 = vmatmul.mubr.bf16.gmra.mrb[0].mxu0 %v1878
        %v3396 = vpop.f32.mrb[0].mxu0
        %v3397 = vadd.f32 0.0, %v3396
        %v3398 = vpop.f32.mrb[0].mxu0
        %v3399 = vpop.f32.mrb[0].mxu0
        %v3400 = vadd.f32 0.0, %v3399
        %v3401 = vpop.f32.mrb[0].mxu0
        %3402 = vmatprep.mubr.bf16.mxu0 0
        %3403 = vmatmul.mubr.bf16.gmra.mrb[0].mxu0 %v1879
        %v3404 = vpop.f32.mrb[0].mxu0
        %v3405 = vadd.f32 0.0, %v3404
        %v3406 = vpop.f32.mrb[0].mxu0
        %v3407 = vpop.f32.mrb[0].mxu0
        %v3408 = vadd.f32 0.0, %v3407
        %v3409 = vpop.f32.mrb[0].mxu0
        %3410 = vmatprep.mubr.bf16.mxu0 0
        %3411 = vmatmul.mubr.bf16.gmra.mrb[0].mxu0 %v1880
        %v3412 = vpop.f32.mrb[0].mxu0
        %v3413 = vadd.f32 0.0, %v3412
        %v3414 = vpop.f32.mrb[0].mxu0
        %v3415 = vpop.f32.mrb[0].mxu0
        %v3416 = vadd.f32 0.0, %v3415
        %v3417 = vpop.f32.mrb[0].mxu0
        %3418 = vmatprep.mubr.bf16.mxu0 0
        %3419 = vmatmul.mubr.bf16.gmra.mrb[0].mxu0 %v1881
        %v3420 = vpop.f32.mrb[0].mxu0
        %v3421 = vadd.f32 0.0, %v3420
        %v3422 = vpop.f32.mrb[0].mxu0
        %v3423 = vpop.f32.mrb[0].mxu0
        %v3424 = vadd.f32 0.0, %v3423
        %v3425 = vpop.f32.mrb[0].mxu0
        %3426 = vmatprep.mubr.bf16.mxu0 0
        %3427 = vmatmul.mubr.bf16.gmra.mrb[0].mxu0 %v1882
        %v3428 = vpop.f32.mrb[0].mxu0
        %v3429 = vadd.f32 0.0, %v3428
        %v3430 = vpop.f32.mrb[0].mxu0
        %v3431 = vpop.f32.mrb[0].mxu0
        %v3432 = vadd.f32 0.0, %v3431
        %v3433 = vpop.f32.mrb[0].mxu0
        %3434 = vmatprep.mubr.bf16.mxu0 0
        %3435 = vmatmul.mubr.bf16.gmra.mrb[0].mxu0 %v1883
        %v3436 = vpop.f32.mrb[0].mxu0
        %v3437 = vadd.f32 0.0, %v3436
        %v3438 = vpop.f32.mrb[0].mxu0
        %v3439 = vpop.f32.mrb[0].mxu0
        %v3440 = vadd.f32 0.0, %v3439
        %v3441 = vpop.f32.mrb[0].mxu0
        %3442 = vmatprep.mubr.bf16.mxu0 0
        %3443 = vmatmul.mubr.bf16.gmra.mrb[0].mxu0 %v1884
        %v3444 = vpop.f32.mrb[0].mxu0
        %v3445 = vadd.f32 0.0, %v3444
        %v3446 = vpop.f32.mrb[0].mxu0
        %v3447 = vpop.f32.mrb[0].mxu0
        %v3448 = vadd.f32 0.0, %v3447
        %v3449 = vpop.f32.mrb[0].mxu0
        %3450 = vmatprep.mubr.bf16.mxu0 0
        %3451 = vmatmul.mubr.bf16.gmra.mrb[0].mxu0 %v1885
        %v3452 = vpop.f32.mrb[0].mxu0
        %v3453 = vadd.f32 0.0, %v3452
        %v3454 = vpop.f32.mrb[0].mxu0
        %v3455 = vpop.f32.mrb[0].mxu0
        %v3456 = vadd.f32 0.0, %v3455
        %v3457 = vpop.f32.mrb[0].mxu0
        %3458 = vmatprep.mubr.bf16.mxu0 0
        %3459 = vmatmul.mubr.bf16.gmra.mrb[0].mxu0 %v1886
        %v3460 = vpop.f32.mrb[0].mxu0
        %v3461 = vadd.f32 0.0, %v3460
        %v3462 = vpop.f32.mrb[0].mxu0
        %v3463 = vpop.f32.mrb[0].mxu0
        %v3464 = vadd.f32 0.0, %v3463
        %v3465 = vpop.f32.mrb[0].mxu0
        %3466 = vmatprep.mubr.bf16.mxu0 0
        %3467 = vmatmul.mubr.bf16.gmra.mrb[0].mxu0 %v1887
        %v3468 = vpop.f32.mrb[0].mxu0
        %v3469 = vadd.f32 0.0, %v3468
        %v3470 = vpop.f32.mrb[0].mxu0
        %v3471 = vpop.f32.mrb[0].mxu0
        %v3472 = vadd.f32 0.0, %v3471
        %v3473 = vpop.f32.mrb[0].mxu0
        %3474 = vmatprep.mubr.bf16.mxu0 0
        %3475 = vmatmul.mubr.bf16.gmra.mrb[0].mxu0 %v1888
        %v3476 = vpop.f32.mrb[0].mxu0
        %v3477 = vadd.f32 0.0, %v3476
        %v3478 = vpop.f32.mrb[0].mxu0
        %v3479 = vpop.f32.mrb[0].mxu0
        %v3480 = vadd.f32 0.0, %v3479
        %v3481 = vpop.f32.mrb[0].mxu0
        %3482 = vmatprep.mubr.bf16.mxu0 0
        %3483 = vmatmul.mubr.bf16.gmra.mrb[0].mxu0 %v1889
        %v3484 = vpop.f32.mrb[0].mxu0
        %v3485 = vadd.f32 0.0, %v3484
        %v3486 = vpop.f32.mrb[0].mxu0
        %v3487 = vpop.f32.mrb[0].mxu0
        %v3488 = vadd.f32 0.0, %v3487
        %v3489 = vpop.f32.mrb[0].mxu0
        %3490 = vmatprep.mubr.bf16.mxu0 0
        %3491 = vmatmul.mubr.bf16.gmra.mrb[0].mxu0 %v1890
        %v3492 = vpop.f32.mrb[0].mxu0
        %v3493 = vadd.f32 0.0, %v3492
        %v3494 = vpop.f32.mrb[0].mxu0
        %v3495 = vpop.f32.mrb[0].mxu0
        %v3496 = vadd.f32 0.0, %v3495
        %v3497 = vpop.f32.mrb[0].mxu0
        %3498 = vmatprep.mubr.bf16.mxu0 0
        %3499 = vmatmul.mubr.bf16.gmra.mrb[0].mxu0 %v1891
        %v3500 = vpop.f32.mrb[0].mxu0
        %v3501 = vadd.f32 0.0, %v3500
        %v3502 = vpop.f32.mrb[0].mxu0
        %v3503 = vpop.f32.mrb[0].mxu0
        %v3504 = vadd.f32 0.0, %v3503
        %v3505 = vpop.f32.mrb[0].mxu0
        %3506 = vmatprep.mubr.bf16.mxu0 0
        %3507 = vmatmul.mubr.bf16.gmra.mrb[0].mxu0 %v1892
        %v3508 = vpop.f32.mrb[0].mxu0
        %v3509 = vadd.f32 0.0, %v3508
        %v3510 = vpop.f32.mrb[0].mxu0
        %v3511 = vpop.f32.mrb[0].mxu0
        %v3512 = vadd.f32 0.0, %v3511
        %v3513 = vpop.f32.mrb[0].mxu0
        %3514 = vmatprep.mubr.bf16.mxu0 0
        %3515 = vmatmul.mubr.bf16.gmra.mrb[0].mxu0 %v1893
        %v3516 = vpop.f32.mrb[0].mxu0
        %v3517 = vadd.f32 0.0, %v3516
        %v3518 = vpop.f32.mrb[0].mxu0
        %v3519 = vpop.f32.mrb[0].mxu0
        %v3520 = vadd.f32 0.0, %v3519
        %v3521 = vpop.f32.mrb[0].mxu0
        %3522 = vmatprep.mubr.bf16.mxu0 0
        %3523 = vmatmul.mubr.bf16.gmra.mrb[0].mxu0 %v1894
        %v3524 = vpop.f32.mrb[0].mxu0
        %v3525 = vadd.f32 0.0, %v3524
        %v3526 = vpop.f32.mrb[0].mxu0
        %v3527 = vpop.f32.mrb[0].mxu0
        %v3528 = vadd.f32 0.0, %v3527
        %v3529 = vpop.f32.mrb[0].mxu0
        %3530 = vmatprep.mubr.bf16.mxu0 0
        %3531 = vmatmul.mubr.bf16.gmra.mrb[0].mxu0 %v1895
        %v3532 = vpop.f32.mrb[0].mxu0
        %v3533 = vadd.f32 0.0, %v3532
        %v3534 = vpop.f32.mrb[0].mxu0
        %v3535 = vpop.f32.mrb[0].mxu0
        %v3536 = vadd.f32 0.0, %v3535
        %v3537 = vpop.f32.mrb[0].mxu0
        %3538 = vmatprep.mubr.bf16.mxu0 0
        %3539 = vmatmul.mubr.bf16.gmra.mrb[0].mxu0 %v1896
        %v3540 = vpop.f32.mrb[0].mxu0
        %v3541 = vadd.f32 0.0, %v3540
        %v3542 = vpop.f32.mrb[0].mxu0
        %v3543 = vpop.f32.mrb[0].mxu0
        %v3544 = vadd.f32 0.0, %v3543
        %v3545 = vpop.f32.mrb[0].mxu0
        %3546 = vmatprep.mubr.bf16.mxu0 0
        %3547 = vmatmul.mubr.bf16.gmra.mrb[0].mxu0 %v1897
        %v3548 = vpop.f32.mrb[0].mxu0
        %v3549 = vadd.f32 0.0, %v3548
        %v3550 = vpop.f32.mrb[0].mxu0
        %v3551 = vpop.f32.mrb[0].mxu0
        %v3552 = vadd.f32 0.0, %v3551
        %v3553 = vpop.f32.mrb[0].mxu0
        %3554 = vmatprep.mubr.bf16.mxu0 0
        %3555 = vmatmul.mubr.bf16.gmra.mrb[0].mxu0 %v1898
        %v3556 = vpop.f32.mrb[0].mxu0
        %v3557 = vadd.f32 0.0, %v3556
        %v3558 = vpop.f32.mrb[0].mxu0
        %v3559 = vpop.f32.mrb[0].mxu0
        %v3560 = vadd.f32 0.0, %v3559
        %v3561 = vpop.f32.mrb[0].mxu0
        %3562 = vmatprep.mubr.bf16.mxu0 0
        %3563 = vmatmul.mubr.bf16.gmra.mrb[0].mxu0 %v1899
        %v3564 = vpop.f32.mrb[0].mxu0
        %v3565 = vadd.f32 0.0, %v3564
        %v3566 = vpop.f32.mrb[0].mxu0
        %v3567 = vpop.f32.mrb[0].mxu0
        %v3568 = vadd.f32 0.0, %v3567
        %v3569 = vpop.f32.mrb[0].mxu0
        %3570 = vmatprep.mubr.bf16.mxu0 0
        %3571 = vmatmul.mubr.bf16.gmra.mrb[0].mxu0 %v1900
        %v3572 = vpop.f32.mrb[0].mxu0
        %v3573 = vadd.f32 0.0, %v3572
        %v3574 = vpop.f32.mrb[0].mxu0
        %v3575 = vpop.f32.mrb[0].mxu0
        %v3576 = vadd.f32 0.0, %v3575
        %v3577 = vpop.f32.mrb[0].mxu0
        %3578 = vmatprep.mubr.bf16.mxu0 0
        %3579 = vmatmul.mubr.bf16.gmra.mrb[0].mxu0 %v1901
        %v3580 = vpop.f32.mrb[0].mxu0
        %v3581 = vadd.f32 0.0, %v3580
        %v3582 = vpop.f32.mrb[0].mxu0
        %v3583 = vpop.f32.mrb[0].mxu0
        %v3584 = vadd.f32 0.0, %v3583
        %v3585 = vpop.f32.mrb[0].mxu0
        %3586 = vmatprep.mubr.bf16.mxu0 0
        %3587 = vmatmul.mubr.bf16.gmra.mrb[0].mxu0 %v1902
        %v3588 = vpop.f32.mrb[0].mxu0
        %v3589 = vadd.f32 0.0, %v3588
        %v3590 = vpop.f32.mrb[0].mxu0
        %v3591 = vpop.f32.mrb[0].mxu0
        %v3592 = vadd.f32 0.0, %v3591
        %v3593 = vpop.f32.mrb[0].mxu0
        %3594 = vmatprep.mubr.bf16.mxu0 0
        %3595 = vmatmul.mubr.bf16.gmra.mrb[0].mxu0 %v1903
        %v3596 = vpop.f32.mrb[0].mxu0
        %v3597 = vadd.f32 0.0, %v3596
        %v3598 = vpop.f32.mrb[0].mxu0
        %v3599 = vpop.f32.mrb[0].mxu0
        %v3600 = vadd.f32 0.0, %v3599
        %v3601 = vpop.f32.mrb[0].mxu0
        %3602 = vmatprep.mubr.bf16.mxu0 0
        %3603 = vmatmul.mubr.bf16.gmra.mrb[0].mxu0 %v1904
        %v3604 = vpop.f32.mrb[0].mxu0
        %v3605 = vadd.f32 0.0, %v3604
        %v3606 = vpop.f32.mrb[0].mxu0
        %v3607 = vpop.f32.mrb[0].mxu0
        %v3608 = vadd.f32 0.0, %v3607
        %v3609 = vpop.f32.mrb[0].mxu0
        %3610 = vmatprep.mubr.bf16.mxu0 0
        %3611 = vmatmul.mubr.bf16.gmra.mrb[0].mxu0 %v1905
        %v3612 = vpop.f32.mrb[0].mxu0
        %v3613 = vadd.f32 0.0, %v3612
        %v3614 = vpop.f32.mrb[0].mxu0
        %v3615 = vpop.f32.mrb[0].mxu0
        %v3616 = vadd.f32 0.0, %v3615
        %v3617 = vpop.f32.mrb[0].mxu0
        %3618 = vmatprep.mubr.bf16.mxu0 0
        %3619 = vmatmul.mubr.bf16.gmra.mrb[0].mxu0 %v1906
        %v3620 = vpop.f32.mrb[0].mxu0
        %v3621 = vadd.f32 0.0, %v3620
        %v3622 = vpop.f32.mrb[0].mxu0
        %v3623 = vpop.f32.mrb[0].mxu0
        %v3624 = vadd.f32 0.0, %v3623
        %v3625 = vpop.f32.mrb[0].mxu0
        %3626 = vmatprep.mubr.bf16.mxu0 0
        %3627 = vmatmul.mubr.bf16.gmra.mrb[0].mxu0 %v1907
        %v3628 = vpop.f32.mrb[0].mxu0
        %v3629 = vadd.f32 0.0, %v3628
        %v3630 = vpop.f32.mrb[0].mxu0
        %v3631 = vpop.f32.mrb[0].mxu0
        %v3632 = vadd.f32 0.0, %v3631
        %v3633 = vpop.f32.mrb[0].mxu0
        %3634 = vmatprep.mubr.bf16.mxu0 0
        %3635 = vmatmul.mubr.bf16.gmra.mrb[0].mxu0 %v1908
        %v3636 = vpop.f32.mrb[0].mxu0
        %v3637 = vadd.f32 0.0, %v3636
        %v3638 = vpop.f32.mrb[0].mxu0
        %v3639 = vpop.f32.mrb[0].mxu0
        %v3640 = vadd.f32 0.0, %v3639
        %v3641 = vpop.f32.mrb[0].mxu0
        %3642 = vmatprep.mubr.bf16.mxu0 0
        %3643 = vmatmul.mubr.bf16.gmra.mrb[0].mxu0 %v1909
        %v3644 = vpop.f32.mrb[0].mxu0
        %v3645 = vadd.f32 0.0, %v3644
        %v3646 = vpop.f32.mrb[0].mxu0
        %v3647 = vpop.f32.mrb[0].mxu0
        %v3648 = vadd.f32 0.0, %v3647
        %v3649 = vpop.f32.mrb[0].mxu0
        %3650 = vmatprep.mubr.bf16.mxu0 0
        %3651 = vmatmul.mubr.bf16.gmra.mrb[0].mxu0 %v1910
        %v3652 = vpop.f32.mrb[0].mxu0
        %v3653 = vadd.f32 0.0, %v3652
        %v3654 = vpop.f32.mrb[0].mxu0
        %v3655 = vpop.f32.mrb[0].mxu0
        %v3656 = vadd.f32 0.0, %v3655
        %v3657 = vpop.f32.mrb[0].mxu0
        %3658 = vmatprep.mubr.bf16.mxu0 0
        %3659 = vmatmul.mubr.bf16.gmra.mrb[0].mxu0 %v1911
        %v3660 = vpop.f32.mrb[0].mxu0
        %v3661 = vadd.f32 0.0, %v3660
        %v3662 = vpop.f32.mrb[0].mxu0
        %v3663 = vpop.f32.mrb[0].mxu0
        %v3664 = vadd.f32 0.0, %v3663
        %v3665 = vpop.f32.mrb[0].mxu0
        %3666 = vmatprep.mubr.bf16.mxu0 0
        %3667 = vmatmul.mubr.bf16.gmra.mrb[0].mxu0 %v1912
        %v3668 = vpop.f32.mrb[0].mxu0
        %v3669 = vadd.f32 0.0, %v3668
        %v3670 = vpop.f32.mrb[0].mxu0
        %v3671 = vpop.f32.mrb[0].mxu0
        %v3672 = vadd.f32 0.0, %v3671
        %v3673 = vpop.f32.mrb[0].mxu0
        %3674 = vmatprep.mubr.bf16.mxu0 0
        %3675 = vmatmul.mubr.bf16.gmra.mrb[0].mxu0 %v1913
        %v3676 = vpop.f32.mrb[0].mxu0
        %v3677 = vadd.f32 0.0, %v3676
        %v3678 = vpop.f32.mrb[0].mxu0
        %v3679 = vpop.f32.mrb[0].mxu0
        %v3680 = vadd.f32 0.0, %v3679
        %v3681 = vpop.f32.mrb[0].mxu0
        %3682 = vmatprep.mubr.bf16.mxu0 0
        %3683 = vmatmul.mubr.bf16.gmra.mrb[0].mxu0 %v1914
        %v3684 = vpop.f32.mrb[0].mxu0
        %v3685 = vadd.f32 0.0, %v3684
        %v3686 = vpop.f32.mrb[0].mxu0
        %v3687 = vpop.f32.mrb[0].mxu0
        %v3688 = vadd.f32 0.0, %v3687
        %v3689 = vpop.f32.mrb[0].mxu0
        %3690 = vmatprep.mubr.bf16.mxu0 0
        %3691 = vmatmul.mubr.bf16.gmra.mrb[0].mxu0 %v1915
        %v3692 = vpop.f32.mrb[0].mxu0
        %v3693 = vadd.f32 0.0, %v3692
        %v3694 = vpop.f32.mrb[0].mxu0
        %v3695 = vpop.f32.mrb[0].mxu0
        %v3696 = vadd.f32 0.0, %v3695
        %v3697 = vpop.f32.mrb[0].mxu0
        %3698 = vmatprep.mubr.bf16.mxu0 0
        %3699 = vmatmul.mubr.bf16.gmra.mrb[0].mxu0 %v1916
        %v3700 = vpop.f32.mrb[0].mxu0
        %v3701 = vadd.f32 0.0, %v3700
        %v3702 = vpop.f32.mrb[0].mxu0
        %v3703 = vpop.f32.mrb[0].mxu0
        %v3704 = vadd.f32 0.0, %v3703
        %v3705 = vpop.f32.mrb[0].mxu0
        %3706 = vmatprep.mubr.bf16.mxu0 0
        %3707 = vmatmul.mubr.bf16.gmra.mrb[0].mxu0 %v1917
        %v3708 = vpop.f32.mrb[0].mxu0
        %v3709 = vadd.f32 0.0, %v3708
        %v3710 = vpop.f32.mrb[0].mxu0
        %v3711 = vpop.f32.mrb[0].mxu0
        %v3712 = vadd.f32 0.0, %v3711
        %v3713 = vpop.f32.mrb[0].mxu0
        %3714 = vmatprep.mubr.bf16.mxu0 0
        %3715 = vmatmul.mubr.bf16.gmra.mrb[0].mxu0 %v1918
        %v3716 = vpop.f32.mrb[0].mxu0
        %v3717 = vadd.f32 0.0, %v3716
        %v3718 = vpop.f32.mrb[0].mxu0
        %v3719 = vpop.f32.mrb[0].mxu0
        %v3720 = vadd.f32 0.0, %v3719
        %v3721 = vpop.f32.mrb[0].mxu0
        %3722 = vmatprep.mubr.bf16.mxu0 0
        %3723 = vmatmul.mubr.bf16.gmra.mrb[0].mxu0 %v1919
        %v3724 = vpop.f32.mrb[0].mxu0
        %v3725 = vadd.f32 0.0, %v3724
        %v3726 = vpop.f32.mrb[0].mxu0
        %v3727 = vpop.f32.mrb[0].mxu0
        %v3728 = vadd.f32 0.0, %v3727
        %v3729 = vpop.f32.mrb[0].mxu0
        %3730 = vmatprep.mubr.bf16.mxu0 0
        %3731 = vmatmul.mubr.bf16.gmra.mrb[0].mxu0 %v1920
        %v3732 = vpop.f32.mrb[0].mxu0
        %v3733 = vadd.f32 0.0, %v3732
        %v3734 = vpop.f32.mrb[0].mxu0
        %v3735 = vpop.f32.mrb[0].mxu0
        %v3736 = vadd.f32 0.0, %v3735
        %v3737 = vpop.f32.mrb[0].mxu0
        %3738 = vmatprep.mubr.bf16.mxu0 0
        %3739 = vmatmul.mubr.bf16.gmra.mrb[0].mxu0 %v1921
        %v3740 = vpop.f32.mrb[0].mxu0
        %v3741 = vadd.f32 0.0, %v3740
        %v3742 = vpop.f32.mrb[0].mxu0
        %v3743 = vpop.f32.mrb[0].mxu0
        %v3744 = vadd.f32 0.0, %v3743
        %v3745 = vpop.f32.mrb[0].mxu0
        %3746 = vmatprep.mubr.bf16.mxu0 0
        %3747 = vmatmul.mubr.bf16.gmra.mrb[0].mxu0 %v1922
        %v3748 = vpop.f32.mrb[0].mxu0
        %v3749 = vadd.f32 0.0, %v3748
        %v3750 = vpop.f32.mrb[0].mxu0
        %v3751 = vpop.f32.mrb[0].mxu0
        %v3752 = vadd.f32 0.0, %v3751
        %v3753 = vpop.f32.mrb[0].mxu0
        %3754 = vmatprep.mubr.bf16.mxu0 0
        %3755 = vmatmul.mubr.bf16.gmra.mrb[0].mxu0 %v1923
        %v3756 = vpop.f32.mrb[0].mxu0
        %v3757 = vadd.f32 0.0, %v3756
        %v3758 = vpop.f32.mrb[0].mxu0
        %v3759 = vpop.f32.mrb[0].mxu0
        %v3760 = vadd.f32 0.0, %v3759
        %v3761 = vpop.f32.mrb[0].mxu0
        %3762 = vmatprep.mubr.bf16.mxu0 0
        %3763 = vmatmul.mubr.bf16.gmra.mrb[0].mxu0 %v1924
        %v3764 = vpop.f32.mrb[0].mxu0
        %v3765 = vadd.f32 0.0, %v3764
        %v3766 = vpop.f32.mrb[0].mxu0
        %v3767 = vpop.f32.mrb[0].mxu0
        %v3768 = vadd.f32 0.0, %v3767
        %v3769 = vpop.f32.mrb[0].mxu0
        %3770 = vmatprep.mubr.bf16.mxu0 0
        %3771 = vmatmul.mubr.bf16.gmra.mrb[0].mxu0 %v1925
        %v3772 = vpop.f32.mrb[0].mxu0
        %v3773 = vadd.f32 0.0, %v3772
        %v3774 = vpop.f32.mrb[0].mxu0
        %v3775 = vpop.f32.mrb[0].mxu0
        %v3776 = vadd.f32 0.0, %v3775
        %v3777 = vpop.f32.mrb[0].mxu0
        %3778 = vmatprep.mubr.bf16.mxu0 0
        %3779 = vmatmul.mubr.bf16.gmra.mrb[0].mxu0 %v1926
        %v3780 = vpop.f32.mrb[0].mxu0
        %v3781 = vadd.f32 0.0, %v3780
        %v3782 = vpop.f32.mrb[0].mxu0
        %v3783 = vpop.f32.mrb[0].mxu0
        %v3784 = vadd.f32 0.0, %v3783
        %v3785 = vpop.f32.mrb[0].mxu0
        %3786 = vmatprep.mubr.bf16.mxu0 0
        %3787 = vmatmul.mubr.bf16.gmra.mrb[0].mxu0 %v1927
        %v3788 = vpop.f32.mrb[0].mxu0
        %v3789 = vadd.f32 0.0, %v3788
        %v3790 = vpop.f32.mrb[0].mxu0
        %v3791 = vpop.f32.mrb[0].mxu0
        %v3792 = vadd.f32 0.0, %v3791
        %v3793 = vpop.f32.mrb[0].mxu0
        %3794 = vmatprep.mubr.bf16.mxu0 0
        %3795 = vmatmul.mubr.bf16.gmra.mrb[0].mxu0 %v1928
        %v3796 = vpop.f32.mrb[0].mxu0
        %v3797 = vadd.f32 0.0, %v3796
        %v3798 = vpop.f32.mrb[0].mxu0
        %v3799 = vpop.f32.mrb[0].mxu0
        %v3800 = vadd.f32 0.0, %v3799
        %v3801 = vpop.f32.mrb[0].mxu0
        %3802 = vmatprep.mubr.bf16.mxu0 0
        %3803 = vmatmul.mubr.bf16.gmra.mrb[0].mxu0 %v1929
        %v3804 = vpop.f32.mrb[0].mxu0
        %v3805 = vadd.f32 0.0, %v3804
        %v3806 = vpop.f32.mrb[0].mxu0
        %v3807 = vpop.f32.mrb[0].mxu0
        %v3808 = vadd.f32 0.0, %v3807
        %v3809 = vpop.f32.mrb[0].mxu0
        %3810 = vmatprep.mubr.bf16.mxu0 0
        %3811 = vmatmul.mubr.bf16.gmra.mrb[0].mxu0 %v1930
        %v3812 = vpop.f32.mrb[0].mxu0
        %v3813 = vadd.f32 0.0, %v3812
        %v3814 = vpop.f32.mrb[0].mxu0
        %v3815 = vpop.f32.mrb[0].mxu0
        %v3816 = vadd.f32 0.0, %v3815
        %v3817 = vpop.f32.mrb[0].mxu0
        %3818 = vmatprep.mubr.bf16.mxu0 0
        %3819 = vmatmul.mubr.bf16.gmra.mrb[0].mxu0 %v1931
        %v3820 = vpop.f32.mrb[0].mxu0
        %v3821 = vadd.f32 0.0, %v3820
        %v3822 = vpop.f32.mrb[0].mxu0
        %v3823 = vpop.f32.mrb[0].mxu0
        %v3824 = vadd.f32 0.0, %v3823
        %v3825 = vpop.f32.mrb[0].mxu0
        %3826 = vmatprep.mubr.bf16.mxu0 0
        %3827 = vmatmul.mubr.bf16.gmra.mrb[0].mxu0 %v1932
        %v3828 = vpop.f32.mrb[0].mxu0
        %v3829 = vadd.f32 0.0, %v3828
        %v3830 = vpop.f32.mrb[0].mxu0
        %v3831 = vpop.f32.mrb[0].mxu0
        %v3832 = vadd.f32 0.0, %v3831
        %v3833 = vpop.f32.mrb[0].mxu0
        %3834 = vmatprep.mubr.bf16.mxu0 0
        %3835 = vmatmul.mubr.bf16.gmra.mrb[0].mxu0 %v1933
        %v3836 = vpop.f32.mrb[0].mxu0
        %v3837 = vadd.f32 0.0, %v3836
        %v3838 = vpop.f32.mrb[0].mxu0
        %v3839 = vpop.f32.mrb[0].mxu0
        %v3840 = vadd.f32 0.0, %v3839
        %v3841 = vpop.f32.mrb[0].mxu0
        %3842 = vmatprep.mubr.bf16.mxu0 0
        %3843 = vmatmul.mubr.bf16.gmra.mrb[0].mxu0 %v1934
        %v3844 = vpop.f32.mrb[0].mxu0
        %v3845 = vadd.f32 0.0, %v3844
        %v3846 = vpop.f32.mrb[0].mxu0
        %v3847 = vpop.f32.mrb[0].mxu0
        %v3848 = vadd.f32 0.0, %v3847
        %v3849 = vpop.f32.mrb[0].mxu0
        %3850 = vmatprep.mubr.bf16.mxu0 0
        %3851 = vmatmul.mubr.bf16.gmra.mrb[0].mxu0 %v1935
        %v3852 = vpop.f32.mrb[0].mxu0
        %v3853 = vadd.f32 0.0, %v3852
        %v3854 = vpop.f32.mrb[0].mxu0
        %v3855 = vpop.f32.mrb[0].mxu0
        %v3856 = vadd.f32 0.0, %v3855
        %v3857 = vpop.f32.mrb[0].mxu0
        %3858 = vmatprep.mubr.bf16.mxu0 0
        %3859 = vmatmul.mubr.bf16.gmra.mrb[0].mxu0 %v1936
        %v3860 = vpop.f32.mrb[0].mxu0
        %v3861 = vadd.f32 0.0, %v3860
        %v3862 = vpop.f32.mrb[0].mxu0
        %v3863 = vpop.f32.mrb[0].mxu0
        %v3864 = vadd.f32 0.0, %v3863
        %v3865 = vpop.f32.mrb[0].mxu0
        %3866 = vmatprep.mubr.bf16.mxu0 0
        %3867 = vmatmul.mubr.bf16.gmra.mrb[0].mxu0 %v1937
        %v3868 = vpop.f32.mrb[0].mxu0
        %v3869 = vadd.f32 0.0, %v3868
        %v3870 = vpop.f32.mrb[0].mxu0
        %v3871 = vpop.f32.mrb[0].mxu0
        %v3872 = vadd.f32 0.0, %v3871
        %v3873 = vpop.f32.mrb[0].mxu0
        %3874 = vmatprep.mubr.bf16.mxu0 0
        %3875 = vmatmul.mubr.bf16.gmra.mrb[0].mxu0 %v1938
        %v3876 = vpop.f32.mrb[0].mxu0
        %v3877 = vadd.f32 0.0, %v3876
        %v3878 = vpop.f32.mrb[0].mxu0
        %v3879 = vpop.f32.mrb[0].mxu0
        %v3880 = vadd.f32 0.0, %v3879
        %v3881 = vpop.f32.mrb[0].mxu0
        %3882 = vmatprep.mubr.bf16.mxu0 0
        %3883 = vmatmul.mubr.bf16.gmra.mrb[0].mxu0 %v1939
        %v3884 = vpop.f32.mrb[0].mxu0
        %v3885 = vadd.f32 0.0, %v3884
        %v3886 = vpop.f32.mrb[0].mxu0
        %v3887 = vpop.f32.mrb[0].mxu0
        %v3888 = vadd.f32 0.0, %v3887
        %v3889 = vpop.f32.mrb[0].mxu0
        %3890 = vmatprep.mubr.bf16.mxu0 0
        %3891 = vmatmul.mubr.bf16.gmra.mrb[0].mxu0 %v1940
        %v3892 = vpop.f32.mrb[0].mxu0
        %v3893 = vadd.f32 0.0, %v3892
        %v3894 = vpop.f32.mrb[0].mxu0
        %v3895 = vpop.f32.mrb[0].mxu0
        %v3896 = vadd.f32 0.0, %v3895
        %v3897 = vpop.f32.mrb[0].mxu0
        %3898 = vmatprep.mubr.bf16.mxu0 0
        %3899 = vmatmul.mubr.bf16.gmra.mrb[0].mxu0 %v1941
        %v3900 = vpop.f32.mrb[0].mxu0
        %v3901 = vadd.f32 0.0, %v3900
        %v3902 = vpop.f32.mrb[0].mxu0
        %v3903 = vpop.f32.mrb[0].mxu0
        %v3904 = vadd.f32 0.0, %v3903
        %v3905 = vpop.f32.mrb[0].mxu0
        %3906 = vmatprep.mubr.bf16.mxu0 0
        %3907 = vmatmul.mubr.bf16.gmra.mrb[0].mxu0 %v1942
        %v3908 = vpop.f32.mrb[0].mxu0
        %v3909 = vadd.f32 0.0, %v3908
        %v3910 = vpop.f32.mrb[0].mxu0
        %v3911 = vpop.f32.mrb[0].mxu0
        %v3912 = vadd.f32 0.0, %v3911
        %v3913 = vpop.f32.mrb[0].mxu0
        %3914 = vmatprep.mubr.bf16.mxu0 0
        %3915 = vmatmul.mubr.bf16.gmra.mrb[0].mxu0 %v1943
        %v3916 = vpop.f32.mrb[0].mxu0
        %v3917 = vadd.f32 0.0, %v3916
        %v3918 = vpop.f32.mrb[0].mxu0
        %v3919 = vpop.f32.mrb[0].mxu0
        %v3920 = vadd.f32 0.0, %v3919
        %v3921 = vpop.f32.mrb[0].mxu0
        %3922 = vmatprep.mubr.bf16.mxu0 0
        %3923 = vmatmul.mubr.bf16.gmra.mrb[0].mxu0 %v1944
        %v3924 = vpop.f32.mrb[0].mxu0
        %v3925 = vadd.f32 0.0, %v3924
        %v3926 = vpop.f32.mrb[0].mxu0
        %v3927 = vpop.f32.mrb[0].mxu0
        %v3928 = vadd.f32 0.0, %v3927
        %v3929 = vpop.f32.mrb[0].mxu0
        %3930 = vmatprep.mubr.bf16.mxu0 0
        %3931 = vmatmul.mubr.bf16.gmra.mrb[0].mxu0 %v1945
        %v3932 = vpop.f32.mrb[0].mxu0
        %v3933 = vadd.f32 0.0, %v3932
        %v3934 = vpop.f32.mrb[0].mxu0
        %v3935 = vpop.f32.mrb[0].mxu0
        %v3936 = vadd.f32 0.0, %v3935
        %v3937 = vpop.f32.mrb[0].mxu0
        %3938 = vmatprep.mubr.bf16.mxu0 0
        %3939 = vmatmul.mubr.bf16.gmra.mrb[0].mxu0 %v1946
        %v3940 = vpop.f32.mrb[0].mxu0
        %v3941 = vadd.f32 0.0, %v3940
        %v3942 = vpop.f32.mrb[0].mxu0
        %v3943 = vpop.f32.mrb[0].mxu0
        %v3944 = vadd.f32 0.0, %v3943
        %v3945 = vpop.f32.mrb[0].mxu0
        %3946 = vmatprep.mubr.bf16.mxu0 0
        %3947 = vmatmul.mubr.bf16.gmra.mrb[0].mxu0 %v1947
        %v3948 = vpop.f32.mrb[0].mxu0
        %v3949 = vadd.f32 0.0, %v3948
        %v3950 = vpop.f32.mrb[0].mxu0
        %v3951 = vpop.f32.mrb[0].mxu0
        %v3952 = vadd.f32 0.0, %v3951
        %v3953 = vpop.f32.mrb[0].mxu0
        %3954 = vmatprep.mubr.bf16.mxu0 0
        %3955 = vmatmul.mubr.bf16.gmra.mrb[0].mxu0 %v1948
        %v3956 = vpop.f32.mrb[0].mxu0
        %v3957 = vadd.f32 0.0, %v3956
        %v3958 = vpop.f32.mrb[0].mxu0
        %v3959 = vpop.f32.mrb[0].mxu0
        %v3960 = vadd.f32 0.0, %v3959
        %v3961 = vpop.f32.mrb[0].mxu0
        %3962 = vmatprep.mubr.bf16.mxu0 0
        %3963 = vmatmul.mubr.bf16.gmra.mrb[0].mxu0 %v1949
        %v3964 = vpop.f32.mrb[0].mxu0
        %v3965 = vadd.f32 0.0, %v3964
        %v3966 = vpop.f32.mrb[0].mxu0
        %v3967 = vpop.f32.mrb[0].mxu0
        %v3968 = vadd.f32 0.0, %v3967
        %v3969 = vpop.f32.mrb[0].mxu0
        %3970 = vmatprep.mubr.bf16.mxu0 0
        %3971 = vmatmul.mubr.bf16.gmra.mrb[0].mxu0 %v1950
        %v3972 = vpop.f32.mrb[0].mxu0
        %v3973 = vadd.f32 0.0, %v3972
        %v3974 = vpop.f32.mrb[0].mxu0
        %v3975 = vpop.f32.mrb[0].mxu0
        %v3976 = vadd.f32 0.0, %v3975
        %v3977 = vpop.f32.mrb[0].mxu0
        %3978 = vmatprep.mubr.bf16.mxu0 0
        %3979 = vmatmul.mubr.bf16.gmra.mrb[0].mxu0 %v1951
        %v3980 = vpop.f32.mrb[0].mxu0
        %v3981 = vadd.f32 0.0, %v3980
        %v3982 = vpop.f32.mrb[0].mxu0
        %v3983 = vpop.f32.mrb[0].mxu0
        %v3984 = vadd.f32 0.0, %v3983
        %v3985 = vpop.f32.mrb[0].mxu0
        %3986 = vmatprep.mubr.bf16.mxu0 0
        %3987 = vmatmul.mubr.bf16.gmra.mrb[0].mxu0 %v1952
        %v3988 = vpop.f32.mrb[0].mxu0
        %v3989 = vadd.f32 0.0, %v3988
        %v3990 = vpop.f32.mrb[0].mxu0
        %v3991 = vpop.f32.mrb[0].mxu0
        %v3992 = vadd.f32 0.0, %v3991
        %v3993 = vpop.f32.mrb[0].mxu0
        %3994 = vmatprep.mubr.bf16.mxu0 0
        %3995 = vmatmul.mubr.bf16.gmra.mrb[0].mxu0 %v1953
        %v3996 = vpop.f32.mrb[0].mxu0
        %v3997 = vadd.f32 0.0, %v3996
        %v3998 = vpop.f32.mrb[0].mxu0
        %v3999 = vpop.f32.mrb[0].mxu0
        %v4000 = vadd.f32 0.0, %v3999
        %v4001 = vpop.f32.mrb[0].mxu0
        %4002 = vmatprep.mubr.bf16.mxu0 0
        %4003 = vmatmul.mubr.bf16.gmra.mrb[0].mxu0 %v1954
        %v4004 = vpop.f32.mrb[0].mxu0
        %v4005 = vadd.f32 0.0, %v4004
        %v4006 = vpop.f32.mrb[0].mxu0
        %v4007 = vpop.f32.mrb[0].mxu0
        %v4008 = vadd.f32 0.0, %v4007
        %v4009 = vpop.f32.mrb[0].mxu0
        %4010 = vmatprep.mubr.bf16.mxu0 0
        %4011 = vmatmul.mubr.bf16.gmra.mrb[0].mxu0 %v1955
        %v4012 = vpop.f32.mrb[0].mxu0
        %v4013 = vadd.f32 0.0, %v4012
        %v4014 = vpop.f32.mrb[0].mxu0
        %v4015 = vpop.f32.mrb[0].mxu0
        %v4016 = vadd.f32 0.0, %v4015
        %v4017 = vpop.f32.mrb[0].mxu0
        %4018 = vmatprep.mubr.bf16.mxu0 0
        %4019 = vmatmul.mubr.bf16.gmra.mrb[0].mxu0 %v1956
        %v4020 = vpop.f32.mrb[0].mxu0
        %v4021 = vadd.f32 0.0, %v4020
        %v4022 = vpop.f32.mrb[0].mxu0
        %v4023 = vpop.f32.mrb[0].mxu0
        %v4024 = vadd.f32 0.0, %v4023
        %v4025 = vpop.f32.mrb[0].mxu0
        %4026 = vmatprep.mubr.bf16.mxu0 0
        %4027 = vmatmul.mubr.bf16.gmra.mrb[0].mxu0 %v1957
        %v4028 = vpop.f32.mrb[0].mxu0
        %v4029 = vadd.f32 0.0, %v4028
        %v4030 = vpop.f32.mrb[0].mxu0
        %v4031 = vpop.f32.mrb[0].mxu0
        %v4032 = vadd.f32 0.0, %v4031
        %v4033 = vpop.f32.mrb[0].mxu0
        %4034 = vmatprep.mubr.bf16.mxu0 0
        %4035 = vmatmul.mubr.bf16.gmra.mrb[0].mxu0 %v1958
        %v4036 = vpop.f32.mrb[0].mxu0
        %v4037 = vadd.f32 0.0, %v4036
        %v4038 = vpop.f32.mrb[0].mxu0
        %v4039 = vpop.f32.mrb[0].mxu0
        %v4040 = vadd.f32 0.0, %v4039
        %v4041 = vpop.f32.mrb[0].mxu0
        %4042 = vmatprep.mubr.bf16.mxu0 0
        %4043 = vmatmul.mubr.bf16.gmra.mrb[0].mxu0 %v1959
        %v4044 = vpop.f32.mrb[0].mxu0
        %v4045 = vadd.f32 0.0, %v4044
        %v4046 = vpop.f32.mrb[0].mxu0
        %v4047 = vpop.f32.mrb[0].mxu0
        %v4048 = vadd.f32 0.0, %v4047
        %v4049 = vpop.f32.mrb[0].mxu0
        %4050 = vmatprep.mubr.bf16.mxu0 0
        %4051 = vmatmul.mubr.bf16.gmra.mrb[0].mxu0 %v1960
        %v4052 = vpop.f32.mrb[0].mxu0
        %v4053 = vadd.f32 0.0, %v4052
        %v4054 = vpop.f32.mrb[0].mxu0
        %v4055 = vpop.f32.mrb[0].mxu0
        %v4056 = vadd.f32 0.0, %v4055
        %v4057 = vpop.f32.mrb[0].mxu0
        %4058 = vmatprep.mubr.bf16.mxu0 0
        %4059 = vmatmul.mubr.bf16.gmra.mrb[0].mxu0 %v1961
        %v4060 = vpop.f32.mrb[0].mxu0
        %v4061 = vadd.f32 0.0, %v4060
        %v4062 = vpop.f32.mrb[0].mxu0
        %v4063 = vpop.f32.mrb[0].mxu0
        %v4064 = vadd.f32 0.0, %v4063
        %v4065 = vpop.f32.mrb[0].mxu0
        %4066 = vmatprep.mubr.bf16.mxu0 0
        %4067 = vmatmul.mubr.bf16.gmra.mrb[0].mxu0 %v1962
        %v4068 = vpop.f32.mrb[0].mxu0
        %v4069 = vadd.f32 0.0, %v4068
        %v4070 = vpop.f32.mrb[0].mxu0
        %v4071 = vpop.f32.mrb[0].mxu0
        %v4072 = vadd.f32 0.0, %v4071
        %v4073 = vpop.f32.mrb[0].mxu0
        %4074 = vmatprep.mubr.bf16.mxu0 0
        %4075 = vmatmul.mubr.bf16.gmra.mrb[0].mxu0 %v1963
        %v4076 = vpop.f32.mrb[0].mxu0
        %v4077 = vadd.f32 0.0, %v4076
        %v4078 = vpop.f32.mrb[0].mxu0
        %v4079 = vpop.f32.mrb[0].mxu0
        %v4080 = vadd.f32 0.0, %v4079
        %v4081 = vpop.f32.mrb[0].mxu0
        %4082 = vmatprep.mubr.bf16.mxu0 0
        %4083 = vmatmul.mubr.bf16.gmra.mrb[0].mxu0 %v1964
        %v4084 = vpop.f32.mrb[0].mxu0
        %v4085 = vadd.f32 0.0, %v4084
        %v4086 = vpop.f32.mrb[0].mxu0
        %v4087 = vpop.f32.mrb[0].mxu0
        %v4088 = vadd.f32 0.0, %v4087
        %v4089 = vpop.f32.mrb[0].mxu0
        %4090 = vmatprep.mubr.bf16.mxu0 0
        %4091 = vmatmul.mubr.bf16.gmra.mrb[0].mxu0 %v1965
        %v4092 = vpop.f32.mrb[0].mxu0
        %v4093 = vadd.f32 0.0, %v4092
        %v4094 = vpop.f32.mrb[0].mxu0
        %v4095 = vpop.f32.mrb[0].mxu0
        %v4096 = vadd.f32 0.0, %v4095
        %v4097 = vpop.f32.mrb[0].mxu0
        %4098 = vmatprep.mubr.bf16.mxu0 0
        %4099 = vmatmul.mubr.bf16.gmra.mrb[0].mxu0 %v1966
        %v4100 = vpop.f32.mrb[0].mxu0
        %v4101 = vadd.f32 0.0, %v4100
        %v4102 = vpop.f32.mrb[0].mxu0
        %v4103 = vpop.f32.mrb[0].mxu0
        %v4104 = vadd.f32 0.0, %v4103
        %v4105 = vpop.f32.mrb[0].mxu0
        %4106 = vmatprep.mubr.bf16.mxu0 0
        %4107 = vmatmul.mubr.bf16.gmra.mrb[0].mxu0 %v1967
        %v4108 = vpop.f32.mrb[0].mxu0
        %v4109 = vadd.f32 0.0, %v4108
        %v4110 = vpop.f32.mrb[0].mxu0
        %v4111 = vpop.f32.mrb[0].mxu0
        %v4112 = vadd.f32 0.0, %v4111
        %v4113 = vpop.f32.mrb[0].mxu0
        %4114 = vmatprep.mubr.bf16.mxu0 0
        %4115 = vmatmul.mubr.bf16.gmra.mrb[0].mxu0 %v1968
        %v4116 = vpop.f32.mrb[0].mxu0
        %v4117 = vadd.f32 0.0, %v4116
        %v4118 = vpop.f32.mrb[0].mxu0
        %v4119 = vpop.f32.mrb[0].mxu0
        %v4120 = vadd.f32 0.0, %v4119
        %v4121 = vpop.f32.mrb[0].mxu0
        %4122 = vmatprep.mubr.bf16.mxu0 0
        %4123 = vmatmul.mubr.bf16.gmra.mrb[0].mxu0 %v1969
        %v4124 = vpop.f32.mrb[0].mxu0
        %v4125 = vadd.f32 0.0, %v4124
        %v4126 = vpop.f32.mrb[0].mxu0
        %v4127 = vpop.f32.mrb[0].mxu0
        %v4128 = vadd.f32 0.0, %v4127
        %v4129 = vpop.f32.mrb[0].mxu0
        %4130 = vmatprep.mubr.bf16.mxu0 0
        %4131 = vmatmul.mubr.bf16.gmra.mrb[0].mxu0 %v1970
        %v4132 = vpop.f32.mrb[0].mxu0
        %v4133 = vadd.f32 0.0, %v4132
        %v4134 = vpop.f32.mrb[0].mxu0
        %v4135 = vpop.f32.mrb[0].mxu0
        %v4136 = vadd.f32 0.0, %v4135
        %v4137 = vpop.f32.mrb[0].mxu0
        %4138 = vmatprep.mubr.bf16.mxu0 0
        %4139 = vmatmul.mubr.bf16.gmra.mrb[0].mxu0 %v1971
        %v4140 = vpop.f32.mrb[0].mxu0
        %v4141 = vadd.f32 0.0, %v4140
        %v4142 = vpop.f32.mrb[0].mxu0
        %v4143 = vpop.f32.mrb[0].mxu0
        %v4144 = vadd.f32 0.0, %v4143
        %v4145 = vpop.f32.mrb[0].mxu0
        %4146 = vmatprep.mubr.bf16.mxu0 0
        %4147 = vmatmul.mubr.bf16.gmra.mrb[0].mxu0 %v1972
        %v4148 = vpop.f32.mrb[0].mxu0
        %v4149 = vadd.f32 0.0, %v4148
        %v4150 = vpop.f32.mrb[0].mxu0
        %v4151 = vpop.f32.mrb[0].mxu0
        %v4152 = vadd.f32 0.0, %v4151
        %v4153 = vpop.f32.mrb[0].mxu0
        %4154 = vmatprep.mubr.bf16.mxu0 0
        %4155 = vmatmul.mubr.bf16.gmra.mrb[0].mxu0 %v1973
        %v4156 = vpop.f32.mrb[0].mxu0
        %v4157 = vadd.f32 0.0, %v4156
        %v4158 = vpop.f32.mrb[0].mxu0
        %v4159 = vpop.f32.mrb[0].mxu0
        %v4160 = vadd.f32 0.0, %v4159
        %v4161 = vpop.f32.mrb[0].mxu0
        %4162 = vmatprep.mubr.bf16.mxu0 0
        %4163 = vmatmul.mubr.bf16.gmra.mrb[0].mxu0 %v1974
        %v4164 = vpop.f32.mrb[0].mxu0
        %v4165 = vadd.f32 0.0, %v4164
        %v4166 = vpop.f32.mrb[0].mxu0
        %v4167 = vpop.f32.mrb[0].mxu0
        %v4168 = vadd.f32 0.0, %v4167
        %v4169 = vpop.f32.mrb[0].mxu0
        %4170 = vmatprep.mubr.bf16.mxu0 0
        %4171 = vmatmul.mubr.bf16.gmra.mrb[0].mxu0 %v1975
        %v4172 = vpop.f32.mrb[0].mxu0
        %v4173 = vadd.f32 0.0, %v4172
        %v4174 = vpop.f32.mrb[0].mxu0
        %v4175 = vpop.f32.mrb[0].mxu0
        %v4176 = vadd.f32 0.0, %v4175
        %v4177 = vpop.f32.mrb[0].mxu0
        %4178 = vmatprep.mubr.bf16.mxu0 0
        %4179 = vmatmul.mubr.bf16.gmra.mrb[0].mxu0 %v1976
        %v4180 = vpop.f32.mrb[0].mxu0
        %v4181 = vadd.f32 0.0, %v4180
        %v4182 = vpop.f32.mrb[0].mxu0
        %v4183 = vpop.f32.mrb[0].mxu0
        %v4184 = vadd.f32 0.0, %v4183
        %v4185 = vpop.f32.mrb[0].mxu0
        %4186 = vmatprep.mubr.bf16.mxu0 0
        %4187 = vmatmul.mubr.bf16.gmra.mrb[0].mxu0 %v1977
        %v4188 = vpop.f32.mrb[0].mxu0
        %v4189 = vadd.f32 0.0, %v4188
        %v4190 = vpop.f32.mrb[0].mxu0
        %v4191 = vpop.f32.mrb[0].mxu0
        %v4192 = vadd.f32 0.0, %v4191
        %v4193 = vpop.f32.mrb[0].mxu0
        %4194 = vmatprep.mubr.bf16.mxu0 0
        %4195 = vmatmul.mubr.bf16.gmra.mrb[0].mxu0 %v1978
        %v4196 = vpop.f32.mrb[0].mxu0
        %v4197 = vadd.f32 0.0, %v4196
        %v4198 = vpop.f32.mrb[0].mxu0
        %v4199 = vpop.f32.mrb[0].mxu0
        %v4200 = vadd.f32 0.0, %v4199
        %v4201 = vpop.f32.mrb[0].mxu0
        %4202 = vmatprep.mubr.bf16.mxu0 0
        %4203 = vmatmul.mubr.bf16.gmra.mrb[0].mxu0 %v1979
        %v4204 = vpop.f32.mrb[0].mxu0
        %v4205 = vadd.f32 0.0, %v4204
        %v4206 = vpop.f32.mrb[0].mxu0
        %v4207 = vpop.f32.mrb[0].mxu0
        %v4208 = vadd.f32 0.0, %v4207
        %v4209 = vpop.f32.mrb[0].mxu0
        %4210 = vmatprep.mubr.bf16.mxu0 0
        %4211 = vmatmul.mubr.bf16.gmra.mrb[0].mxu0 %v1980
        %v4212 = vpop.f32.mrb[0].mxu0
        %v4213 = vadd.f32 0.0, %v4212
        %v4214 = vpop.f32.mrb[0].mxu0
        %v4215 = vpop.f32.mrb[0].mxu0
        %v4216 = vadd.f32 0.0, %v4215
        %v4217 = vpop.f32.mrb[0].mxu0
        %4218 = vmatprep.mubr.bf16.mxu0 0
        %4219 = vmatmul.mubr.bf16.gmra.mrb[0].mxu0 %v1981
        %v4220 = vpop.f32.mrb[0].mxu0
        %v4221 = vadd.f32 0.0, %v4220
        %v4222 = vpop.f32.mrb[0].mxu0
        %v4223 = vpop.f32.mrb[0].mxu0
        %v4224 = vadd.f32 0.0, %v4223
        %v4225 = vpop.f32.mrb[0].mxu0
        %4226 = vmatprep.mubr.bf16.mxu0 0
        %4227 = vmatmul.mubr.bf16.gmra.mrb[0].mxu0 %v1982
        %v4228 = vpop.f32.mrb[0].mxu0
        %v4229 = vadd.f32 0.0, %v4228
        %v4230 = vpop.f32.mrb[0].mxu0
        %v4231 = vpop.f32.mrb[0].mxu0
        %v4232 = vadd.f32 0.0, %v4231
        %v4233 = vpop.f32.mrb[0].mxu0
        %4234 = vmatprep.mubr.bf16.mxu0 0
        %4235 = vmatmul.mubr.bf16.gmra.mrb[0].mxu0 %v1983
        %v4236 = vpop.f32.mrb[0].mxu0
        %v4237 = vadd.f32 0.0, %v4236
        %v4238 = vpop.f32.mrb[0].mxu0
        %v4239 = vpop.f32.mrb[0].mxu0
        %v4240 = vadd.f32 0.0, %v4239
        %v4241 = vpop.f32.mrb[0].mxu0
        %4242 = vmatprep.mubr.bf16.mxu0 0
        %4243 = vmatmul.mubr.bf16.gmra.mrb[0].mxu0 %v1984
        %v4244 = vpop.f32.mrb[0].mxu0
        %v4245 = vadd.f32 0.0, %v4244
        %v4246 = vpop.f32.mrb[0].mxu0
        %v4247 = vpop.f32.mrb[0].mxu0
        %v4248 = vadd.f32 0.0, %v4247
        %v4249 = vpop.f32.mrb[0].mxu0
        %4250 = vmatprep.mubr.bf16.mxu0 0
        %4251 = vmatmul.mubr.bf16.gmra.mrb[0].mxu0 %v1985
        %v4252 = vpop.f32.mrb[0].mxu0
        %v4253 = vadd.f32 0.0, %v4252
        %v4254 = vpop.f32.mrb[0].mxu0
        %v4255 = vpop.f32.mrb[0].mxu0
        %v4256 = vadd.f32 0.0, %v4255
        %v4257 = vpop.f32.mrb[0].mxu0
        %4258 = vmatprep.mubr.bf16.mxu0 0
        %4259 = vmatmul.mubr.bf16.gmra.mrb[0].mxu0 %v1986
        %v4260 = vpop.f32.mrb[0].mxu0
        %v4261 = vadd.f32 0.0, %v4260
        %v4262 = vpop.f32.mrb[0].mxu0
        %v4263 = vpop.f32.mrb[0].mxu0
        %v4264 = vadd.f32 0.0, %v4263
        %v4265 = vpop.f32.mrb[0].mxu0
        %4266 = vmatprep.mubr.bf16.mxu0 0
        %4267 = vmatmul.mubr.bf16.gmra.mrb[0].mxu0 %v1987
        %v4268 = vpop.f32.mrb[0].mxu0
        %v4269 = vadd.f32 0.0, %v4268
        %v4270 = vpop.f32.mrb[0].mxu0
        %v4271 = vpop.f32.mrb[0].mxu0
        %v4272 = vadd.f32 0.0, %v4271
        %v4273 = vpop.f32.mrb[0].mxu0
        %4274 = vmatprep.mubr.bf16.mxu0 0
        %4275 = vmatmul.mubr.bf16.gmra.mrb[0].mxu0 %v1988
        %v4276 = vpop.f32.mrb[0].mxu0
        %v4277 = vadd.f32 0.0, %v4276
        %v4278 = vpop.f32.mrb[0].mxu0
        %v4279 = vpop.f32.mrb[0].mxu0
        %v4280 = vadd.f32 0.0, %v4279
        %v4281 = vpop.f32.mrb[0].mxu0
        %4282 = vmatprep.mubr.bf16.mxu0 0
        %4283 = vmatmul.mubr.bf16.gmra.mrb[0].mxu0 %v1989
        %v4284 = vpop.f32.mrb[0].mxu0
        %v4285 = vadd.f32 0.0, %v4284
        %v4286 = vpop.f32.mrb[0].mxu0
        %v4287 = vpop.f32.mrb[0].mxu0
        %v4288 = vadd.f32 0.0, %v4287
        %v4289 = vpop.f32.mrb[0].mxu0
        %4290 = vmatprep.mubr.bf16.mxu0 0
        %4291 = vmatmul.mubr.bf16.gmra.mrb[0].mxu0 %v1990
        %v4292 = vpop.f32.mrb[0].mxu0
        %v4293 = vadd.f32 0.0, %v4292
        %v4294 = vpop.f32.mrb[0].mxu0
        %v4295 = vpop.f32.mrb[0].mxu0
        %v4296 = vadd.f32 0.0, %v4295
        %v4297 = vpop.f32.mrb[0].mxu0
        %4298 = vmatprep.mubr.bf16.mxu0 0
        %4299 = vmatmul.mubr.bf16.gmra.mrb[0].mxu0 %v1991
        %v4300 = vpop.f32.mrb[0].mxu0
        %v4301 = vadd.f32 0.0, %v4300
        %v4302 = vpop.f32.mrb[0].mxu0
        %v4303 = vpop.f32.mrb[0].mxu0
        %v4304 = vadd.f32 0.0, %v4303
        %v4305 = vpop.f32.mrb[0].mxu0
        %4306 = vmatprep.mubr.bf16.mxu0 0
        %4307 = vmatmul.mubr.bf16.gmra.mrb[0].mxu0 %v1992
        %v4308 = vpop.f32.mrb[0].mxu0
        %v4309 = vadd.f32 0.0, %v4308
        %v4310 = vpop.f32.mrb[0].mxu0
        %v4311 = vpop.f32.mrb[0].mxu0
        %v4312 = vadd.f32 0.0, %v4311
        %v4313 = vpop.f32.mrb[0].mxu0
        %4314 = vmatprep.mubr.bf16.mxu0 0
        %4315 = vmatmul.mubr.bf16.gmra.mrb[0].mxu0 %v1993
        %v4316 = vpop.f32.mrb[0].mxu0
        %v4317 = vadd.f32 0.0, %v4316
        %v4318 = vpop.f32.mrb[0].mxu0
        %v4319 = vpop.f32.mrb[0].mxu0
        %v4320 = vadd.f32 0.0, %v4319
        %v4321 = vpop.f32.mrb[0].mxu0
        %4322 = vmatprep.mubr.bf16.mxu0 0
        %4323 = vmatmul.mubr.bf16.gmra.mrb[0].mxu0 %v1994
        %v4324 = vpop.f32.mrb[0].mxu0
        %v4325 = vadd.f32 0.0, %v4324
        %v4326 = vpop.f32.mrb[0].mxu0
        %v4327 = vpop.f32.mrb[0].mxu0
        %v4328 = vadd.f32 0.0, %v4327
        %v4329 = vpop.f32.mrb[0].mxu0
        %4330 = vmatprep.mubr.bf16.mxu0 0
        %4331 = vmatmul.mubr.bf16.gmra.mrb[0].mxu0 %v1995
        %v4332 = vpop.f32.mrb[0].mxu0
        %v4333 = vadd.f32 0.0, %v4332
        %v4334 = vpop.f32.mrb[0].mxu0
        %v4335 = vpop.f32.mrb[0].mxu0
        %v4336 = vadd.f32 0.0, %v4335
        %v4337 = vpop.f32.mrb[0].mxu0
        %4338 = vmatprep.mubr.bf16.mxu0 0
        %4339 = vmatmul.mubr.bf16.gmra.mrb[0].mxu0 %v1996
        %v4340 = vpop.f32.mrb[0].mxu0
        %v4341 = vadd.f32 0.0, %v4340
        %v4342 = vpop.f32.mrb[0].mxu0
        %v4343 = vpop.f32.mrb[0].mxu0
        %v4344 = vadd.f32 0.0, %v4343
        %v4345 = vpop.f32.mrb[0].mxu0
        %4346 = vmatprep.mubr.bf16.mxu0 0
        %4347 = vmatmul.mubr.bf16.gmra.mrb[0].mxu0 %v1997
        %v4348 = vpop.f32.mrb[0].mxu0
        %v4349 = vadd.f32 0.0, %v4348
        %v4350 = vpop.f32.mrb[0].mxu0
        %v4351 = vpop.f32.mrb[0].mxu0
        %v4352 = vadd.f32 0.0, %v4351
        %v4353 = vpop.f32.mrb[0].mxu0
        %4354 = vmatprep.mubr.bf16.mxu0 0
        %4355 = vmatmul.mubr.bf16.gmra.mrb[0].mxu0 %v1998
        %v4356 = vpop.f32.mrb[0].mxu0
        %v4357 = vadd.f32 0.0, %v4356
        %v4358 = vpop.f32.mrb[0].mxu0
        %v4359 = vpop.f32.mrb[0].mxu0
        %v4360 = vadd.f32 0.0, %v4359
        %v4361 = vpop.f32.mrb[0].mxu0
        %4362 = vmatprep.mubr.bf16.mxu0 0
        %4363 = vmatmul.mubr.bf16.gmra.mrb[0].mxu0 %v1999
        %v4364 = vpop.f32.mrb[0].mxu0
        %v4365 = vadd.f32 0.0, %v4364
        %v4366 = vpop.f32.mrb[0].mxu0
        %v4367 = vpop.f32.mrb[0].mxu0
        %v4368 = vadd.f32 0.0, %v4367
        %v4369 = vpop.f32.mrb[0].mxu0
        %4370 = vmatprep.mubr.bf16.mxu0 0
        %4371 = vmatmul.mubr.bf16.gmra.mrb[0].mxu0 %v2000
        %v4372 = vpop.f32.mrb[0].mxu0
        %v4373 = vadd.f32 0.0, %v4372
        %v4374 = vpop.f32.mrb[0].mxu0
        %v4375 = vpop.f32.mrb[0].mxu0
        %v4376 = vadd.f32 0.0, %v4375
        %v4377 = vpop.f32.mrb[0].mxu0
        %4378 = vmatprep.mubr.bf16.mxu0 0
        %4379 = vmatmul.mubr.bf16.gmra.mrb[0].mxu0 %v2001
        %v4380 = vpop.f32.mrb[0].mxu0
        %v4381 = vadd.f32 0.0, %v4380
        %v4382 = vpop.f32.mrb[0].mxu0
        %v4383 = vpop.f32.mrb[0].mxu0
        %v4384 = vadd.f32 0.0, %v4383
        %v4385 = vpop.f32.mrb[0].mxu0
        %4386 = vdwg.mxu0
        %4387 = vst [vmem:[%s182] sm:$0xff] %v2341
        %4388 = vst [vmem:[%s182 + $0x8] sm:$0xff] %v2344
        %4389 = vst [vmem:[%s182 + $0x10] sm:$0xff] %v2349
        %4390 = vst [vmem:[%s182 + $0x18] sm:$0xff] %v2352
        %4391 = vst [vmem:[%s182 + $0x20] sm:$0xff] %v2357
        %4392 = vst [vmem:[%s182 + $0x28] sm:$0xff] %v2360
        %4393 = vst [vmem:[%s182 + $0x30] sm:$0xff] %v2365
        %4394 = vst [vmem:[%s182 + $0x38] sm:$0xff] %v2368
        %4395 = vst [vmem:[%s182 + $0x40] sm:$0xff] %v2373
        %4396 = vst [vmem:[%s182 + $0x48] sm:$0xff] %v2376
        %4397 = vst [vmem:[%s182 + $0x50] sm:$0xff] %v2381
        %4398 = vst [vmem:[%s182 + $0x58] sm:$0xff] %v2384
        %4399 = vst [vmem:[%s182 + $0x60] sm:$0xff] %v2389
        %4400 = vst [vmem:[%s182 + $0x68] sm:$0xff] %v2392
        %4401 = vst [vmem:[%s182 + $0x70] sm:$0xff] %v2397
        %4402 = vst [vmem:[%s182 + $0x78] sm:$0xff] %v2400
        %4403 = vst [vmem:[%s182 + $0x80] sm:$0xff] %v2405
        %4404 = vst [vmem:[%s182 + $0x88] sm:$0xff] %v2408
        %4405 = vst [vmem:[%s182 + $0x90] sm:$0xff] %v2413
        %4406 = vst [vmem:[%s182 + $0x98] sm:$0xff] %v2416
        %4407 = vst [vmem:[%s182 + $0xa0] sm:$0xff] %v2421
        %4408 = vst [vmem:[%s182 + $0xa8] sm:$0xff] %v2424
        %4409 = vst [vmem:[%s182 + $0xb0] sm:$0xff] %v2429
        %4410 = vst [vmem:[%s182 + $0xb8] sm:$0xff] %v2432
        %4411 = vst [vmem:[%s182 + $0xc0] sm:$0xff] %v2437
        %4412 = vst [vmem:[%s182 + $0xc8] sm:$0xff] %v2440
        %4413 = vst [vmem:[%s182 + $0xd0] sm:$0xff] %v2445
        %4414 = vst [vmem:[%s182 + $0xd8] sm:$0xff] %v2448
        %4415 = vst [vmem:[%s182 + $0xe0] sm:$0xff] %v2453
        %4416 = vst [vmem:[%s182 + $0xe8] sm:$0xff] %v2456
        %4417 = vst [vmem:[%s182 + $0xf0] sm:$0xff] %v2461
        %4418 = vst [vmem:[%s182 + $0xf8] sm:$0xff] %v2464
        %4419 = vst [vmem:[%s182 + $0x100] sm:$0xff] %v2469
        %4420 = vst [vmem:[%s182 + $0x108] sm:$0xff] %v2472
        %4421 = vst [vmem:[%s182 + $0x110] sm:$0xff] %v2477
        %4422 = vst [vmem:[%s182 + $0x118] sm:$0xff] %v2480
        %4423 = vst [vmem:[%s182 + $0x120] sm:$0xff] %v2485
        %4424 = vst [vmem:[%s182 + $0x128] sm:$0xff] %v2488
        %4425 = vst [vmem:[%s182 + $0x130] sm:$0xff] %v2493
        %4426 = vst [vmem:[%s182 + $0x138] sm:$0xff] %v2496
        %4427 = vst [vmem:[%s182 + $0x140] sm:$0xff] %v2501
        %4428 = vst [vmem:[%s182 + $0x148] sm:$0xff] %v2504
        %4429 = vst [vmem:[%s182 + $0x150] sm:$0xff] %v2509
        %4430 = vst [vmem:[%s182 + $0x158] sm:$0xff] %v2512
        %4431 = vst [vmem:[%s182 + $0x160] sm:$0xff] %v2517
        %4432 = vst [vmem:[%s182 + $0x168] sm:$0xff] %v2520
        %4433 = vst [vmem:[%s182 + $0x170] sm:$0xff] %v2525
        %4434 = vst [vmem:[%s182 + $0x178] sm:$0xff] %v2528
        %4435 = vst [vmem:[%s182 + $0x180] sm:$0xff] %v2533
        %4436 = vst [vmem:[%s182 + $0x188] sm:$0xff] %v2536
        %4437 = vst [vmem:[%s182 + $0x190] sm:$0xff] %v2541
        %4438 = vst [vmem:[%s182 + $0x198] sm:$0xff] %v2544
        %4439 = vst [vmem:[%s182 + $0x1a0] sm:$0xff] %v2549
        %4440 = vst [vmem:[%s182 + $0x1a8] sm:$0xff] %v2552
        %4441 = vst [vmem:[%s182 + $0x1b0] sm:$0xff] %v2557
        %4442 = vst [vmem:[%s182 + $0x1b8] sm:$0xff] %v2560
        %4443 = vst [vmem:[%s182 + $0x1c0] sm:$0xff] %v2565
        %4444 = vst [vmem:[%s182 + $0x1c8] sm:$0xff] %v2568
        %4445 = vst [vmem:[%s182 + $0x1d0] sm:$0xff] %v2573
        %4446 = vst [vmem:[%s182 + $0x1d8] sm:$0xff] %v2576
        %4447 = vst [vmem:[%s182 + $0x1e0] sm:$0xff] %v2581
        %4448 = vst [vmem:[%s182 + $0x1e8] sm:$0xff] %v2584
        %4449 = vst [vmem:[%s182 + $0x1f0] sm:$0xff] %v2589
        %4450 = vst [vmem:[%s182 + $0x1f8] sm:$0xff] %v2592
        %4451 = vst [vmem:[%s182 + $0x200] sm:$0xff] %v2597
        %4452 = vst [vmem:[%s182 + $0x208] sm:$0xff] %v2600
        %4453 = vst [vmem:[%s182 + $0x210] sm:$0xff] %v2605
        %4454 = vst [vmem:[%s182 + $0x218] sm:$0xff] %v2608
        %4455 = vst [vmem:[%s182 + $0x220] sm:$0xff] %v2613
        %4456 = vst [vmem:[%s182 + $0x228] sm:$0xff] %v2616
        %4457 = vst [vmem:[%s182 + $0x230] sm:$0xff] %v2621
        %4458 = vst [vmem:[%s182 + $0x238] sm:$0xff] %v2624
        %4459 = vst [vmem:[%s182 + $0x240] sm:$0xff] %v2629
        %4460 = vst [vmem:[%s182 + $0x248] sm:$0xff] %v2632
        %4461 = vst [vmem:[%s182 + $0x250] sm:$0xff] %v2637
        %4462 = vst [vmem:[%s182 + $0x258] sm:$0xff] %v2640
        %4463 = vst [vmem:[%s182 + $0x260] sm:$0xff] %v2645
        %4464 = vst [vmem:[%s182 + $0x268] sm:$0xff] %v2648
        %4465 = vst [vmem:[%s182 + $0x270] sm:$0xff] %v2653
        %4466 = vst [vmem:[%s182 + $0x278] sm:$0xff] %v2656
        %4467 = vst [vmem:[%s182 + $0x280] sm:$0xff] %v2661
        %4468 = vst [vmem:[%s182 + $0x288] sm:$0xff] %v2664
        %4469 = vst [vmem:[%s182 + $0x290] sm:$0xff] %v2669
        %4470 = vst [vmem:[%s182 + $0x298] sm:$0xff] %v2672
        %4471 = vst [vmem:[%s182 + $0x2a0] sm:$0xff] %v2677
        %4472 = vst [vmem:[%s182 + $0x2a8] sm:$0xff] %v2680
        %4473 = vst [vmem:[%s182 + $0x2b0] sm:$0xff] %v2685
        %4474 = vst [vmem:[%s182 + $0x2b8] sm:$0xff] %v2688
        %4475 = vst [vmem:[%s182 + $0x2c0] sm:$0xff] %v2693
        %4476 = vst [vmem:[%s182 + $0x2c8] sm:$0xff] %v2696
        %4477 = vst [vmem:[%s182 + $0x2d0] sm:$0xff] %v2701
        %4478 = vst [vmem:[%s182 + $0x2d8] sm:$0xff] %v2704
        %4479 = vst [vmem:[%s182 + $0x2e0] sm:$0xff] %v2709
        %4480 = vst [vmem:[%s182 + $0x2e8] sm:$0xff] %v2712
        %4481 = vst [vmem:[%s182 + $0x2f0] sm:$0xff] %v2717
        %4482 = vst [vmem:[%s182 + $0x2f8] sm:$0xff] %v2720
        %4483 = vst [vmem:[%s182 + $0x300] sm:$0xff] %v2725
        %4484 = vst [vmem:[%s182 + $0x308] sm:$0xff] %v2728
        %4485 = vst [vmem:[%s182 + $0x310] sm:$0xff] %v2733
        %4486 = vst [vmem:[%s182 + $0x318] sm:$0xff] %v2736
        %4487 = vst [vmem:[%s182 + $0x320] sm:$0xff] %v2741
        %4488 = vst [vmem:[%s182 + $0x328] sm:$0xff] %v2744
        %4489 = vst [vmem:[%s182 + $0x330] sm:$0xff] %v2749
        %4490 = vst [vmem:[%s182 + $0x338] sm:$0xff] %v2752
        %4491 = vst [vmem:[%s182 + $0x340] sm:$0xff] %v2757
        %4492 = vst [vmem:[%s182 + $0x348] sm:$0xff] %v2760
        %4493 = vst [vmem:[%s182 + $0x350] sm:$0xff] %v2765
        %4494 = vst [vmem:[%s182 + $0x358] sm:$0xff] %v2768
        %4495 = vst [vmem:[%s182 + $0x360] sm:$0xff] %v2773
        %4496 = vst [vmem:[%s182 + $0x368] sm:$0xff] %v2776
        %4497 = vst [vmem:[%s182 + $0x370] sm:$0xff] %v2781
        %4498 = vst [vmem:[%s182 + $0x378] sm:$0xff] %v2784
        %4499 = vst [vmem:[%s182 + $0x380] sm:$0xff] %v2789
        %4500 = vst [vmem:[%s182 + $0x388] sm:$0xff] %v2792
        %4501 = vst [vmem:[%s182 + $0x390] sm:$0xff] %v2797
        %4502 = vst [vmem:[%s182 + $0x398] sm:$0xff] %v2800
        %4503 = vst [vmem:[%s182 + $0x3a0] sm:$0xff] %v2805
        %4504 = vst [vmem:[%s182 + $0x3a8] sm:$0xff] %v2808
        %4505 = vst [vmem:[%s182 + $0x3b0] sm:$0xff] %v2813
        %4506 = vst [vmem:[%s182 + $0x3b8] sm:$0xff] %v2816
        %4507 = vst [vmem:[%s182 + $0x3c0] sm:$0xff] %v2821
        %4508 = vst [vmem:[%s182 + $0x3c8] sm:$0xff] %v2824
        %4509 = vst [vmem:[%s182 + $0x3d0] sm:$0xff] %v2829
        %4510 = vst [vmem:[%s182 + $0x3d8] sm:$0xff] %v2832
        %4511 = vst [vmem:[%s182 + $0x3e0] sm:$0xff] %v2837
        %4512 = vst [vmem:[%s182 + $0x3e8] sm:$0xff] %v2840
        %4513 = vst [vmem:[%s182 + $0x3f0] sm:$0xff] %v2845
        %4514 = vst [vmem:[%s182 + $0x3f8] sm:$0xff] %v2848
        %4515 = vst [vmem:[%s182 + $0x400] sm:$0xff] %v2853
        %4516 = vst [vmem:[%s182 + $0x408] sm:$0xff] %v2856
        %4517 = vst [vmem:[%s182 + $0x410] sm:$0xff] %v2861
        %4518 = vst [vmem:[%s182 + $0x418] sm:$0xff] %v2864
        %4519 = vst [vmem:[%s182 + $0x420] sm:$0xff] %v2869
        %4520 = vst [vmem:[%s182 + $0x428] sm:$0xff] %v2872
        %4521 = vst [vmem:[%s182 + $0x430] sm:$0xff] %v2877
        %4522 = vst [vmem:[%s182 + $0x438] sm:$0xff] %v2880
        %4523 = vst [vmem:[%s182 + $0x440] sm:$0xff] %v2885
        %4524 = vst [vmem:[%s182 + $0x448] sm:$0xff] %v2888
        %4525 = vst [vmem:[%s182 + $0x450] sm:$0xff] %v2893
        %4526 = vst [vmem:[%s182 + $0x458] sm:$0xff] %v2896
        %4527 = vst [vmem:[%s182 + $0x460] sm:$0xff] %v2901
        %4528 = vst [vmem:[%s182 + $0x468] sm:$0xff] %v2904
        %4529 = vst [vmem:[%s182 + $0x470] sm:$0xff] %v2909
        %4530 = vst [vmem:[%s182 + $0x478] sm:$0xff] %v2912
        %4531 = vst [vmem:[%s182 + $0x480] sm:$0xff] %v2917
        %4532 = vst [vmem:[%s182 + $0x488] sm:$0xff] %v2920
        %4533 = vst [vmem:[%s182 + $0x490] sm:$0xff] %v2925
        %4534 = vst [vmem:[%s182 + $0x498] sm:$0xff] %v2928
        %4535 = vst [vmem:[%s182 + $0x4a0] sm:$0xff] %v2933
        %4536 = vst [vmem:[%s182 + $0x4a8] sm:$0xff] %v2936
        %4537 = vst [vmem:[%s182 + $0x4b0] sm:$0xff] %v2941
        %4538 = vst [vmem:[%s182 + $0x4b8] sm:$0xff] %v2944
        %4539 = vst [vmem:[%s182 + $0x4c0] sm:$0xff] %v2949
        %4540 = vst [vmem:[%s182 + $0x4c8] sm:$0xff] %v2952
        %4541 = vst [vmem:[%s182 + $0x4d0] sm:$0xff] %v2957
        %4542 = vst [vmem:[%s182 + $0x4d8] sm:$0xff] %v2960
        %4543 = vst [vmem:[%s182 + $0x4e0] sm:$0xff] %v2965
        %4544 = vst [vmem:[%s182 + $0x4e8] sm:$0xff] %v2968
        %4545 = vst [vmem:[%s182 + $0x4f0] sm:$0xff] %v2973
        %4546 = vst [vmem:[%s182 + $0x4f8] sm:$0xff] %v2976
        %4547 = vst [vmem:[%s182 + $0x500] sm:$0xff] %v2981
        %4548 = vst [vmem:[%s182 + $0x508] sm:$0xff] %v2984
        %4549 = vst [vmem:[%s182 + $0x510] sm:$0xff] %v2989
        %4550 = vst [vmem:[%s182 + $0x518] sm:$0xff] %v2992
        %4551 = vst [vmem:[%s182 + $0x520] sm:$0xff] %v2997
        %4552 = vst [vmem:[%s182 + $0x528] sm:$0xff] %v3000
        %4553 = vst [vmem:[%s182 + $0x530] sm:$0xff] %v3005
        %4554 = vst [vmem:[%s182 + $0x538] sm:$0xff] %v3008
        %4555 = vst [vmem:[%s182 + $0x540] sm:$0xff] %v3013
        %4556 = vst [vmem:[%s182 + $0x548] sm:$0xff] %v3016
        %4557 = vst [vmem:[%s182 + $0x550] sm:$0xff] %v3021
        %4558 = vst [vmem:[%s182 + $0x558] sm:$0xff] %v3024
        %4559 = vst [vmem:[%s182 + $0x560] sm:$0xff] %v3029
        %4560 = vst [vmem:[%s182 + $0x568] sm:$0xff] %v3032
        %4561 = vst [vmem:[%s182 + $0x570] sm:$0xff] %v3037
        %4562 = vst [vmem:[%s182 + $0x578] sm:$0xff] %v3040
        %4563 = vst [vmem:[%s182 + $0x580] sm:$0xff] %v3045
        %4564 = vst [vmem:[%s182 + $0x588] sm:$0xff] %v3048
        %4565 = vst [vmem:[%s182 + $0x590] sm:$0xff] %v3053
        %4566 = vst [vmem:[%s182 + $0x598] sm:$0xff] %v3056
        %4567 = vst [vmem:[%s182 + $0x5a0] sm:$0xff] %v3061
        %4568 = vst [vmem:[%s182 + $0x5a8] sm:$0xff] %v3064
        %4569 = vst [vmem:[%s182 + $0x5b0] sm:$0xff] %v3069
        %4570 = vst [vmem:[%s182 + $0x5b8] sm:$0xff] %v3072
        %4571 = vst [vmem:[%s182 + $0x5c0] sm:$0xff] %v3077
        %4572 = vst [vmem:[%s182 + $0x5c8] sm:$0xff] %v3080
        %4573 = vst [vmem:[%s182 + $0x5d0] sm:$0xff] %v3085
        %4574 = vst [vmem:[%s182 + $0x5d8] sm:$0xff] %v3088
        %4575 = vst [vmem:[%s182 + $0x5e0] sm:$0xff] %v3093
        %4576 = vst [vmem:[%s182 + $0x5e8] sm:$0xff] %v3096
        %4577 = vst [vmem:[%s182 + $0x5f0] sm:$0xff] %v3101
        %4578 = vst [vmem:[%s182 + $0x5f8] sm:$0xff] %v3104
        %4579 = vst [vmem:[%s182 + $0x600] sm:$0xff] %v3109
        %4580 = vst [vmem:[%s182 + $0x608] sm:$0xff] %v3112
        %4581 = vst [vmem:[%s182 + $0x610] sm:$0xff] %v3117
        %4582 = vst [vmem:[%s182 + $0x618] sm:$0xff] %v3120
        %4583 = vst [vmem:[%s182 + $0x620] sm:$0xff] %v3125
        %4584 = vst [vmem:[%s182 + $0x628] sm:$0xff] %v3128
        %4585 = vst [vmem:[%s182 + $0x630] sm:$0xff] %v3133
        %4586 = vst [vmem:[%s182 + $0x638] sm:$0xff] %v3136
        %4587 = vst [vmem:[%s182 + $0x640] sm:$0xff] %v3141
        %4588 = vst [vmem:[%s182 + $0x648] sm:$0xff] %v3144
        %4589 = vst [vmem:[%s182 + $0x650] sm:$0xff] %v3149
        %4590 = vst [vmem:[%s182 + $0x658] sm:$0xff] %v3152
        %4591 = vst [vmem:[%s182 + $0x660] sm:$0xff] %v3157
        %4592 = vst [vmem:[%s182 + $0x668] sm:$0xff] %v3160
        %4593 = vst [vmem:[%s182 + $0x670] sm:$0xff] %v3165
        %4594 = vst [vmem:[%s182 + $0x678] sm:$0xff] %v3168
        %4595 = vst [vmem:[%s182 + $0x680] sm:$0xff] %v3173
        %4596 = vst [vmem:[%s182 + $0x688] sm:$0xff] %v3176
        %4597 = vst [vmem:[%s182 + $0x690] sm:$0xff] %v3181
        %4598 = vst [vmem:[%s182 + $0x698] sm:$0xff] %v3184
        %4599 = vst [vmem:[%s182 + $0x6a0] sm:$0xff] %v3189
        %4600 = vst [vmem:[%s182 + $0x6a8] sm:$0xff] %v3192
        %4601 = vst [vmem:[%s182 + $0x6b0] sm:$0xff] %v3197
        %4602 = vst [vmem:[%s182 + $0x6b8] sm:$0xff] %v3200
        %4603 = vst [vmem:[%s182 + $0x6c0] sm:$0xff] %v3205
        %4604 = vst [vmem:[%s182 + $0x6c8] sm:$0xff] %v3208
        %4605 = vst [vmem:[%s182 + $0x6d0] sm:$0xff] %v3213
        %4606 = vst [vmem:[%s182 + $0x6d8] sm:$0xff] %v3216
        %4607 = vst [vmem:[%s182 + $0x6e0] sm:$0xff] %v3221
        %4608 = vst [vmem:[%s182 + $0x6e8] sm:$0xff] %v3224
        %4609 = vst [vmem:[%s182 + $0x6f0] sm:$0xff] %v3229
        %4610 = vst [vmem:[%s182 + $0x6f8] sm:$0xff] %v3232
        %4611 = vst [vmem:[%s182 + $0x700] sm:$0xff] %v3237
        %4612 = vst [vmem:[%s182 + $0x708] sm:$0xff] %v3240
        %4613 = vst [vmem:[%s182 + $0x710] sm:$0xff] %v3245
        %4614 = vst [vmem:[%s182 + $0x718] sm:$0xff] %v3248
        %4615 = vst [vmem:[%s182 + $0x720] sm:$0xff] %v3253
        %4616 = vst [vmem:[%s182 + $0x728] sm:$0xff] %v3256
        %4617 = vst [vmem:[%s182 + $0x730] sm:$0xff] %v3261
        %4618 = vst [vmem:[%s182 + $0x738] sm:$0xff] %v3264
        %4619 = vst [vmem:[%s182 + $0x740] sm:$0xff] %v3269
        %4620 = vst [vmem:[%s182 + $0x748] sm:$0xff] %v3272
        %4621 = vst [vmem:[%s182 + $0x750] sm:$0xff] %v3277
        %4622 = vst [vmem:[%s182 + $0x758] sm:$0xff] %v3280
        %4623 = vst [vmem:[%s182 + $0x760] sm:$0xff] %v3285
        %4624 = vst [vmem:[%s182 + $0x768] sm:$0xff] %v3288
        %4625 = vst [vmem:[%s182 + $0x770] sm:$0xff] %v3293
        %4626 = vst [vmem:[%s182 + $0x778] sm:$0xff] %v3296
        %4627 = vst [vmem:[%s182 + $0x780] sm:$0xff] %v3301
        %4628 = vst [vmem:[%s182 + $0x788] sm:$0xff] %v3304
        %4629 = vst [vmem:[%s182 + $0x790] sm:$0xff] %v3309
        %4630 = vst [vmem:[%s182 + $0x798] sm:$0xff] %v3312
        %4631 = vst [vmem:[%s182 + $0x7a0] sm:$0xff] %v3317
        %4632 = vst [vmem:[%s182 + $0x7a8] sm:$0xff] %v3320
        %4633 = vst [vmem:[%s182 + $0x7b0] sm:$0xff] %v3325
        %4634 = vst [vmem:[%s182 + $0x7b8] sm:$0xff] %v3328
        %4635 = vst [vmem:[%s182 + $0x7c0] sm:$0xff] %v3333
        %4636 = vst [vmem:[%s182 + $0x7c8] sm:$0xff] %v3336
        %4637 = vst [vmem:[%s182 + $0x7d0] sm:$0xff] %v3341
        %4638 = vst [vmem:[%s182 + $0x7d8] sm:$0xff] %v3344
        %4639 = vst [vmem:[%s182 + $0x7e0] sm:$0xff] %v3349
        %4640 = vst [vmem:[%s182 + $0x7e8] sm:$0xff] %v3352
        %4641 = vst [vmem:[%s182 + $0x7f0] sm:$0xff] %v3357
        %4642 = vst [vmem:[%s182 + $0x7f8] sm:$0xff] %v3360
        %4643 = vst [vmem:[%s182 + $0x800] sm:$0xff] %v3365
        %4644 = vst [vmem:[%s182 + $0x808] sm:$0xff] %v3368
        %4645 = vst [vmem:[%s182 + $0x810] sm:$0xff] %v3373
        %4646 = vst [vmem:[%s182 + $0x818] sm:$0xff] %v3376
        %4647 = vst [vmem:[%s182 + $0x820] sm:$0xff] %v3381
        %4648 = vst [vmem:[%s182 + $0x828] sm:$0xff] %v3384
        %4649 = vst [vmem:[%s182 + $0x830] sm:$0xff] %v3389
        %4650 = vst [vmem:[%s182 + $0x838] sm:$0xff] %v3392
        %4651 = vst [vmem:[%s182 + $0x840] sm:$0xff] %v3397
        %4652 = vst [vmem:[%s182 + $0x848] sm:$0xff] %v3400
        %4653 = vst [vmem:[%s182 + $0x850] sm:$0xff] %v3405
        %4654 = vst [vmem:[%s182 + $0x858] sm:$0xff] %v3408
        %4655 = vst [vmem:[%s182 + $0x860] sm:$0xff] %v3413
        %4656 = vst [vmem:[%s182 + $0x868] sm:$0xff] %v3416
        %4657 = vst [vmem:[%s182 + $0x870] sm:$0xff] %v3421
        %4658 = vst [vmem:[%s182 + $0x878] sm:$0xff] %v3424
        %4659 = vst [vmem:[%s182 + $0x880] sm:$0xff] %v3429
        %4660 = vst [vmem:[%s182 + $0x888] sm:$0xff] %v3432
        %4661 = vst [vmem:[%s182 + $0x890] sm:$0xff] %v3437
        %4662 = vst [vmem:[%s182 + $0x898] sm:$0xff] %v3440
        %4663 = vst [vmem:[%s182 + $0x8a0] sm:$0xff] %v3445
        %4664 = vst [vmem:[%s182 + $0x8a8] sm:$0xff] %v3448
        %4665 = vst [vmem:[%s182 + $0x8b0] sm:$0xff] %v3453
        %4666 = vst [vmem:[%s182 + $0x8b8] sm:$0xff] %v3456
        %4667 = vst [vmem:[%s182 + $0x8c0] sm:$0xff] %v3461
        %4668 = vst [vmem:[%s182 + $0x8c8] sm:$0xff] %v3464
        %4669 = vst [vmem:[%s182 + $0x8d0] sm:$0xff] %v3469
        %4670 = vst [vmem:[%s182 + $0x8d8] sm:$0xff] %v3472
        %4671 = vst [vmem:[%s182 + $0x8e0] sm:$0xff] %v3477
        %4672 = vst [vmem:[%s182 + $0x8e8] sm:$0xff] %v3480
        %4673 = vst [vmem:[%s182 + $0x8f0] sm:$0xff] %v3485
        %4674 = vst [vmem:[%s182 + $0x8f8] sm:$0xff] %v3488
        %4675 = vst [vmem:[%s182 + $0x900] sm:$0xff] %v3493
        %4676 = vst [vmem:[%s182 + $0x908] sm:$0xff] %v3496
        %4677 = vst [vmem:[%s182 + $0x910] sm:$0xff] %v3501
        %4678 = vst [vmem:[%s182 + $0x918] sm:$0xff] %v3504
        %4679 = vst [vmem:[%s182 + $0x920] sm:$0xff] %v3509
        %4680 = vst [vmem:[%s182 + $0x928] sm:$0xff] %v3512
        %4681 = vst [vmem:[%s182 + $0x930] sm:$0xff] %v3517
        %4682 = vst [vmem:[%s182 + $0x938] sm:$0xff] %v3520
        %4683 = vst [vmem:[%s182 + $0x940] sm:$0xff] %v3525
        %4684 = vst [vmem:[%s182 + $0x948] sm:$0xff] %v3528
        %4685 = vst [vmem:[%s182 + $0x950] sm:$0xff] %v3533
        %4686 = vst [vmem:[%s182 + $0x958] sm:$0xff] %v3536
        %4687 = vst [vmem:[%s182 + $0x960] sm:$0xff] %v3541
        %4688 = vst [vmem:[%s182 + $0x968] sm:$0xff] %v3544
        %4689 = vst [vmem:[%s182 + $0x970] sm:$0xff] %v3549
        %4690 = vst [vmem:[%s182 + $0x978] sm:$0xff] %v3552
        %4691 = vst [vmem:[%s182 + $0x980] sm:$0xff] %v3557
        %4692 = vst [vmem:[%s182 + $0x988] sm:$0xff] %v3560
        %4693 = vst [vmem:[%s182 + $0x990] sm:$0xff] %v3565
        %4694 = vst [vmem:[%s182 + $0x998] sm:$0xff] %v3568
        %4695 = vst [vmem:[%s182 + $0x9a0] sm:$0xff] %v3573
        %4696 = vst [vmem:[%s182 + $0x9a8] sm:$0xff] %v3576
        %4697 = vst [vmem:[%s182 + $0x9b0] sm:$0xff] %v3581
        %4698 = vst [vmem:[%s182 + $0x9b8] sm:$0xff] %v3584
        %4699 = vst [vmem:[%s182 + $0x9c0] sm:$0xff] %v3589
        %4700 = vst [vmem:[%s182 + $0x9c8] sm:$0xff] %v3592
        %4701 = vst [vmem:[%s182 + $0x9d0] sm:$0xff] %v3597
        %4702 = vst [vmem:[%s182 + $0x9d8] sm:$0xff] %v3600
        %4703 = vst [vmem:[%s182 + $0x9e0] sm:$0xff] %v3605
        %4704 = vst [vmem:[%s182 + $0x9e8] sm:$0xff] %v3608
        %4705 = vst [vmem:[%s182 + $0x9f0] sm:$0xff] %v3613
        %4706 = vst [vmem:[%s182 + $0x9f8] sm:$0xff] %v3616
        %4707 = vst [vmem:[%s182 + $0xa00] sm:$0xff] %v3621
        %4708 = vst [vmem:[%s182 + $0xa08] sm:$0xff] %v3624
        %4709 = vst [vmem:[%s182 + $0xa10] sm:$0xff] %v3629
        %4710 = vst [vmem:[%s182 + $0xa18] sm:$0xff] %v3632
        %4711 = vst [vmem:[%s182 + $0xa20] sm:$0xff] %v3637
        %4712 = vst [vmem:[%s182 + $0xa28] sm:$0xff] %v3640
        %4713 = vst [vmem:[%s182 + $0xa30] sm:$0xff] %v3645
        %4714 = vst [vmem:[%s182 + $0xa38] sm:$0xff] %v3648
        %4715 = vst [vmem:[%s182 + $0xa40] sm:$0xff] %v3653
        %4716 = vst [vmem:[%s182 + $0xa48] sm:$0xff] %v3656
        %4717 = vst [vmem:[%s182 + $0xa50] sm:$0xff] %v3661
        %4718 = vst [vmem:[%s182 + $0xa58] sm:$0xff] %v3664
        %4719 = vst [vmem:[%s182 + $0xa60] sm:$0xff] %v3669
        %4720 = vst [vmem:[%s182 + $0xa68] sm:$0xff] %v3672
        %4721 = vst [vmem:[%s182 + $0xa70] sm:$0xff] %v3677
        %4722 = vst [vmem:[%s182 + $0xa78] sm:$0xff] %v3680
        %4723 = vst [vmem:[%s182 + $0xa80] sm:$0xff] %v3685
        %4724 = vst [vmem:[%s182 + $0xa88] sm:$0xff] %v3688
        %4725 = vst [vmem:[%s182 + $0xa90] sm:$0xff] %v3693
        %4726 = vst [vmem:[%s182 + $0xa98] sm:$0xff] %v3696
        %4727 = vst [vmem:[%s182 + $0xaa0] sm:$0xff] %v3701
        %4728 = vst [vmem:[%s182 + $0xaa8] sm:$0xff] %v3704
        %4729 = vst [vmem:[%s182 + $0xab0] sm:$0xff] %v3709
        %4730 = vst [vmem:[%s182 + $0xab8] sm:$0xff] %v3712
        %4731 = vst [vmem:[%s182 + $0xac0] sm:$0xff] %v3717
        %4732 = vst [vmem:[%s182 + $0xac8] sm:$0xff] %v3720
        %4733 = vst [vmem:[%s182 + $0xad0] sm:$0xff] %v3725
        %4734 = vst [vmem:[%s182 + $0xad8] sm:$0xff] %v3728
        %4735 = vst [vmem:[%s182 + $0xae0] sm:$0xff] %v3733
        %4736 = vst [vmem:[%s182 + $0xae8] sm:$0xff] %v3736
        %4737 = vst [vmem:[%s182 + $0xaf0] sm:$0xff] %v3741
        %4738 = vst [vmem:[%s182 + $0xaf8] sm:$0xff] %v3744
        %4739 = vst [vmem:[%s182 + $0xb00] sm:$0xff] %v3749
        %4740 = vst [vmem:[%s182 + $0xb08] sm:$0xff] %v3752
        %4741 = vst [vmem:[%s182 + $0xb10] sm:$0xff] %v3757
        %4742 = vst [vmem:[%s182 + $0xb18] sm:$0xff] %v3760
        %4743 = vst [vmem:[%s182 + $0xb20] sm:$0xff] %v3765
        %4744 = vst [vmem:[%s182 + $0xb28] sm:$0xff] %v3768
        %4745 = vst [vmem:[%s182 + $0xb30] sm:$0xff] %v3773
        %4746 = vst [vmem:[%s182 + $0xb38] sm:$0xff] %v3776
        %4747 = vst [vmem:[%s182 + $0xb40] sm:$0xff] %v3781
        %4748 = vst [vmem:[%s182 + $0xb48] sm:$0xff] %v3784
        %4749 = vst [vmem:[%s182 + $0xb50] sm:$0xff] %v3789
        %4750 = vst [vmem:[%s182 + $0xb58] sm:$0xff] %v3792
        %4751 = vst [vmem:[%s182 + $0xb60] sm:$0xff] %v3797
        %4752 = vst [vmem:[%s182 + $0xb68] sm:$0xff] %v3800
        %4753 = vst [vmem:[%s182 + $0xb70] sm:$0xff] %v3805
        %4754 = vst [vmem:[%s182 + $0xb78] sm:$0xff] %v3808
        %4755 = vst [vmem:[%s182 + $0xb80] sm:$0xff] %v3813
        %4756 = vst [vmem:[%s182 + $0xb88] sm:$0xff] %v3816
        %4757 = vst [vmem:[%s182 + $0xb90] sm:$0xff] %v3821
        %4758 = vst [vmem:[%s182 + $0xb98] sm:$0xff] %v3824
        %4759 = vst [vmem:[%s182 + $0xba0] sm:$0xff] %v3829
        %4760 = vst [vmem:[%s182 + $0xba8] sm:$0xff] %v3832
        %4761 = vst [vmem:[%s182 + $0xbb0] sm:$0xff] %v3837
        %4762 = vst [vmem:[%s182 + $0xbb8] sm:$0xff] %v3840
        %4763 = vst [vmem:[%s182 + $0xbc0] sm:$0xff] %v3845
        %4764 = vst [vmem:[%s182 + $0xbc8] sm:$0xff] %v3848
        %4765 = vst [vmem:[%s182 + $0xbd0] sm:$0xff] %v3853
        %4766 = vst [vmem:[%s182 + $0xbd8] sm:$0xff] %v3856
        %4767 = vst [vmem:[%s182 + $0xbe0] sm:$0xff] %v3861
        %4768 = vst [vmem:[%s182 + $0xbe8] sm:$0xff] %v3864
        %4769 = vst [vmem:[%s182 + $0xbf0] sm:$0xff] %v3869
        %4770 = vst [vmem:[%s182 + $0xbf8] sm:$0xff] %v3872
        %4771 = vst [vmem:[%s182 + $0xc00] sm:$0xff] %v3877
        %4772 = vst [vmem:[%s182 + $0xc08] sm:$0xff] %v3880
        %4773 = vst [vmem:[%s182 + $0xc10] sm:$0xff] %v3885
        %4774 = vst [vmem:[%s182 + $0xc18] sm:$0xff] %v3888
        %4775 = vst [vmem:[%s182 + $0xc20] sm:$0xff] %v3893
        %4776 = vst [vmem:[%s182 + $0xc28] sm:$0xff] %v3896
        %4777 = vst [vmem:[%s182 + $0xc30] sm:$0xff] %v3901
        %4778 = vst [vmem:[%s182 + $0xc38] sm:$0xff] %v3904
        %4779 = vst [vmem:[%s182 + $0xc40] sm:$0xff] %v3909
        %4780 = vst [vmem:[%s182 + $0xc48] sm:$0xff] %v3912
        %4781 = vst [vmem:[%s182 + $0xc50] sm:$0xff] %v3917
        %4782 = vst [vmem:[%s182 + $0xc58] sm:$0xff] %v3920
        %4783 = vst [vmem:[%s182 + $0xc60] sm:$0xff] %v3925
        %4784 = vst [vmem:[%s182 + $0xc68] sm:$0xff] %v3928
        %4785 = vst [vmem:[%s182 + $0xc70] sm:$0xff] %v3933
        %4786 = vst [vmem:[%s182 + $0xc78] sm:$0xff] %v3936
        %4787 = vst [vmem:[%s182 + $0xc80] sm:$0xff] %v3941
        %4788 = vst [vmem:[%s182 + $0xc88] sm:$0xff] %v3944
        %4789 = vst [vmem:[%s182 + $0xc90] sm:$0xff] %v3949
        %4790 = vst [vmem:[%s182 + $0xc98] sm:$0xff] %v3952
        %4791 = vst [vmem:[%s182 + $0xca0] sm:$0xff] %v3957
        %4792 = vst [vmem:[%s182 + $0xca8] sm:$0xff] %v3960
        %4793 = vst [vmem:[%s182 + $0xcb0] sm:$0xff] %v3965
        %4794 = vst [vmem:[%s182 + $0xcb8] sm:$0xff] %v3968
        %4795 = vst [vmem:[%s182 + $0xcc0] sm:$0xff] %v3973
        %4796 = vst [vmem:[%s182 + $0xcc8] sm:$0xff] %v3976
        %4797 = vst [vmem:[%s182 + $0xcd0] sm:$0xff] %v3981
        %4798 = vst [vmem:[%s182 + $0xcd8] sm:$0xff] %v3984
        %4799 = vst [vmem:[%s182 + $0xce0] sm:$0xff] %v3989
        %4800 = vst [vmem:[%s182 + $0xce8] sm:$0xff] %v3992
        %4801 = vst [vmem:[%s182 + $0xcf0] sm:$0xff] %v3997
        %4802 = vst [vmem:[%s182 + $0xcf8] sm:$0xff] %v4000
        %4803 = vst [vmem:[%s182 + $0xd00] sm:$0xff] %v4005
        %4804 = vst [vmem:[%s182 + $0xd08] sm:$0xff] %v4008
        %4805 = vst [vmem:[%s182 + $0xd10] sm:$0xff] %v4013
        %4806 = vst [vmem:[%s182 + $0xd18] sm:$0xff] %v4016
        %4807 = vst [vmem:[%s182 + $0xd20] sm:$0xff] %v4021
        %4808 = vst [vmem:[%s182 + $0xd28] sm:$0xff] %v4024
        %4809 = vst [vmem:[%s182 + $0xd30] sm:$0xff] %v4029
        %4810 = vst [vmem:[%s182 + $0xd38] sm:$0xff] %v4032
        %4811 = vst [vmem:[%s182 + $0xd40] sm:$0xff] %v4037
        %4812 = vst [vmem:[%s182 + $0xd48] sm:$0xff] %v4040
        %4813 = vst [vmem:[%s182 + $0xd50] sm:$0xff] %v4045
        %4814 = vst [vmem:[%s182 + $0xd58] sm:$0xff] %v4048
        %4815 = vst [vmem:[%s182 + $0xd60] sm:$0xff] %v4053
        %4816 = vst [vmem:[%s182 + $0xd68] sm:$0xff] %v4056
        %4817 = vst [vmem:[%s182 + $0xd70] sm:$0xff] %v4061
        %4818 = vst [vmem:[%s182 + $0xd78] sm:$0xff] %v4064
        %4819 = vst [vmem:[%s182 + $0xd80] sm:$0xff] %v4069
        %4820 = vst [vmem:[%s182 + $0xd88] sm:$0xff] %v4072
        %4821 = vst [vmem:[%s182 + $0xd90] sm:$0xff] %v4077
        %4822 = vst [vmem:[%s182 + $0xd98] sm:$0xff] %v4080
        %4823 = vst [vmem:[%s182 + $0xda0] sm:$0xff] %v4085
        %4824 = vst [vmem:[%s182 + $0xda8] sm:$0xff] %v4088
        %4825 = vst [vmem:[%s182 + $0xdb0] sm:$0xff] %v4093
        %4826 = vst [vmem:[%s182 + $0xdb8] sm:$0xff] %v4096
        %4827 = vst [vmem:[%s182 + $0xdc0] sm:$0xff] %v4101
        %4828 = vst [vmem:[%s182 + $0xdc8] sm:$0xff] %v4104
        %4829 = vst [vmem:[%s182 + $0xdd0] sm:$0xff] %v4109
        %4830 = vst [vmem:[%s182 + $0xdd8] sm:$0xff] %v4112
        %4831 = vst [vmem:[%s182 + $0xde0] sm:$0xff] %v4117
        %4832 = vst [vmem:[%s182 + $0xde8] sm:$0xff] %v4120
        %4833 = vst [vmem:[%s182 + $0xdf0] sm:$0xff] %v4125
        %4834 = vst [vmem:[%s182 + $0xdf8] sm:$0xff] %v4128
        %4835 = vst [vmem:[%s182 + $0xe00] sm:$0xff] %v4133
        %4836 = vst [vmem:[%s182 + $0xe08] sm:$0xff] %v4136
        %4837 = vst [vmem:[%s182 + $0xe10] sm:$0xff] %v4141
        %4838 = vst [vmem:[%s182 + $0xe18] sm:$0xff] %v4144
        %4839 = vst [vmem:[%s182 + $0xe20] sm:$0xff] %v4149
        %4840 = vst [vmem:[%s182 + $0xe28] sm:$0xff] %v4152
        %4841 = vst [vmem:[%s182 + $0xe30] sm:$0xff] %v4157
        %4842 = vst [vmem:[%s182 + $0xe38] sm:$0xff] %v4160
        %4843 = vst [vmem:[%s182 + $0xe40] sm:$0xff] %v4165
        %4844 = vst [vmem:[%s182 + $0xe48] sm:$0xff] %v4168
        %4845 = vst [vmem:[%s182 + $0xe50] sm:$0xff] %v4173
        %4846 = vst [vmem:[%s182 + $0xe58] sm:$0xff] %v4176
        %4847 = vst [vmem:[%s182 + $0xe60] sm:$0xff] %v4181
        %4848 = vst [vmem:[%s182 + $0xe68] sm:$0xff] %v4184
        %4849 = vst [vmem:[%s182 + $0xe70] sm:$0xff] %v4189
        %4850 = vst [vmem:[%s182 + $0xe78] sm:$0xff] %v4192
        %4851 = vst [vmem:[%s182 + $0xe80] sm:$0xff] %v4197
        %4852 = vst [vmem:[%s182 + $0xe88] sm:$0xff] %v4200
        %4853 = vst [vmem:[%s182 + $0xe90] sm:$0xff] %v4205
        %4854 = vst [vmem:[%s182 + $0xe98] sm:$0xff] %v4208
        %4855 = vst [vmem:[%s182 + $0xea0] sm:$0xff] %v4213
        %4856 = vst [vmem:[%s182 + $0xea8] sm:$0xff] %v4216
        %4857 = vst [vmem:[%s182 + $0xeb0] sm:$0xff] %v4221
        %4858 = vst [vmem:[%s182 + $0xeb8] sm:$0xff] %v4224
        %4859 = vst [vmem:[%s182 + $0xec0] sm:$0xff] %v4229
        %4860 = vst [vmem:[%s182 + $0xec8] sm:$0xff] %v4232
        %4861 = vst [vmem:[%s182 + $0xed0] sm:$0xff] %v4237
        %4862 = vst [vmem:[%s182 + $0xed8] sm:$0xff] %v4240
        %4863 = vst [vmem:[%s182 + $0xee0] sm:$0xff] %v4245
        %4864 = vst [vmem:[%s182 + $0xee8] sm:$0xff] %v4248
        %4865 = vst [vmem:[%s182 + $0xef0] sm:$0xff] %v4253
        %4866 = vst [vmem:[%s182 + $0xef8] sm:$0xff] %v4256
        %4867 = vst [vmem:[%s182 + $0xf00] sm:$0xff] %v4261
        %4868 = vst [vmem:[%s182 + $0xf08] sm:$0xff] %v4264
        %4869 = vst [vmem:[%s182 + $0xf10] sm:$0xff] %v4269
        %4870 = vst [vmem:[%s182 + $0xf18] sm:$0xff] %v4272
        %4871 = vst [vmem:[%s182 + $0xf20] sm:$0xff] %v4277
        %4872 = vst [vmem:[%s182 + $0xf28] sm:$0xff] %v4280
        %4873 = vst [vmem:[%s182 + $0xf30] sm:$0xff] %v4285
        %4874 = vst [vmem:[%s182 + $0xf38] sm:$0xff] %v4288
        %4875 = vst [vmem:[%s182 + $0xf40] sm:$0xff] %v4293
        %4876 = vst [vmem:[%s182 + $0xf48] sm:$0xff] %v4296
        %4877 = vst [vmem:[%s182 + $0xf50] sm:$0xff] %v4301
        %4878 = vst [vmem:[%s182 + $0xf58] sm:$0xff] %v4304
        %4879 = vst [vmem:[%s182 + $0xf60] sm:$0xff] %v4309
        %4880 = vst [vmem:[%s182 + $0xf68] sm:$0xff] %v4312
        %4881 = vst [vmem:[%s182 + $0xf70] sm:$0xff] %v4317
        %4882 = vst [vmem:[%s182 + $0xf78] sm:$0xff] %v4320
        %4883 = vst [vmem:[%s182 + $0xf80] sm:$0xff] %v4325
        %4884 = vst [vmem:[%s182 + $0xf88] sm:$0xff] %v4328
        %4885 = vst [vmem:[%s182 + $0xf90] sm:$0xff] %v4333
        %4886 = vst [vmem:[%s182 + $0xf98] sm:$0xff] %v4336
        %4887 = vst [vmem:[%s182 + $0xfa0] sm:$0xff] %v4341
        %4888 = vst [vmem:[%s182 + $0xfa8] sm:$0xff] %v4344
        %4889 = vst [vmem:[%s182 + $0xfb0] sm:$0xff] %v4349
        %4890 = vst [vmem:[%s182 + $0xfb8] sm:$0xff] %v4352
        %4891 = vst [vmem:[%s182 + $0xfc0] sm:$0xff] %v4357
        %4892 = vst [vmem:[%s182 + $0xfc8] sm:$0xff] %v4360
        %4893 = vst [vmem:[%s182 + $0xfd0] sm:$0xff] %v4365
        %4894 = vst [vmem:[%s182 + $0xfd8] sm:$0xff] %v4368
        %4895 = vst [vmem:[%s182 + $0xfe0] sm:$0xff] %v4373
        %4896 = vst [vmem:[%s182 + $0xfe8] sm:$0xff] %v4376
        %4897 = vst [vmem:[%s182 + $0xff0] sm:$0xff] %v4381
        %4898 = vst [vmem:[%s182 + $0xff8] sm:$0xff] %v4384
        %s4899 = sand.u32 %s75, 1
        %s4900 = scalar_lea.sflag [#allocation4], %s4899
        %s4901 = sand.u32 %s75, 1
        %s4902 = smul.addr %s4901, 4096
        %s4903 = scalar_lea.vmem [#allocation7], %s4902
        // Predicated region
        $region37: #{tpu_custom_call.1} parent=27 // pred_check
          %p4904 = pneg %p85
        $region38: #{tpu_custom_call.1} parent=27 // pred_check_branch
          %4906 = sbr.rel (%p4904) target = $region40
        $region39: #{tpu_custom_call.1} parent=27 // pred_region
          %s4907 = smul.u32 512, %s20
          %s4908 = ssub.s32 525, %s4907
          %p4909 = scmp.lt.s32.totalorder %s4908, 512
          %s4910 = scalar_select %p4909, %s4908, 512
          %s4911 = smul.u32 128, %s4910
          %s4913 = ssub.s32 65536, %s4911
          %4914 = vsyncadd %s4900, %s4913
          %p4915 = scmp.ne.s32.totalorder 0, %s4911
          %s4916 = smul.addr %s4907, 128
          %s4917 = scalar_lea.hbm %s2, %s4916
          %s4918 = smul.u32 8, %s4910
          %s4919 = sshll.u32 %s4903, 4
          %s4920 = int_to_ptr.vmem [resolvable:$true] %s4919
          %s4921 = sshll.u32 %s4918, 4
          %4925 = dma.vmem_to_hbm [thread:$0]  (%p4915), %s4920, %s4921, %s4917, %s4900, 128, 128, 8
        $region40: #{tpu_custom_call.1} parent=27 // pred_fallthru
          _
      $region28: #{tpu_custom_call.1} parent=5 // pred_fallthru
        _
      %p4926 = scmp.le.s32.totalorder 2, %s15
      // Predicated region
      $region41: #{tpu_custom_call.1} parent=5 // pred_check
        %p4927 = pneg %p4926
      $region42: #{tpu_custom_call.1} parent=5 // pred_check_branch
        %4929 = sbr.rel (%p4927) target = $region44
      $region43: #{tpu_custom_call.1} parent=5 // pred_region
        %s4930 = ssub.s32 %s15, 2
        // Predicated region
        $region45: #{tpu_custom_call.1} parent=43 // pred_check
          %p4931 = pneg %p91
        $region46: #{tpu_custom_call.1} parent=43 // pred_check_branch
          %4933 = sbr.rel (%p4931) target = $region48
        $region47: #{tpu_custom_call.1} parent=43 // pred_region
          %s4934 = sand.u32 %s76, 1
          %s4935 = scalar_lea.sflag [#allocation4], %s4934
          %s4936 = sand.u32 %s76, 1
          %s4937 = smul.addr %s4936, 4096
          %s4938 = scalar_lea.vmem [#allocation7], %s4937
          %4939 = dma.done %s4935, 65536
        $region48: #{tpu_custom_call.1} parent=43 // pred_fallthru
          _
      $region44: #{tpu_custom_call.1} parent=5 // pred_fallthru
        _
    $region6: #{tpu_custom_call.1} parent=1 // loop_footer
      %s19 = sadd.s32 1, %s15
    $region7: #{tpu_custom_call.1} parent=1 // loop_footer_branch
      %14 = sbr.rel target = $region3
    $region8: #{tpu_custom_call.1} parent=1 // loop_exit
      _
    %4940 = vsyncpa [#allocation3], 1
    %s4941 = scalar_lea.sflag [#allocation3], 1
    %4942 = vsyncpa %s4941, 1
    %4943 = vsyncpa [#allocation6], 1
    %4944 = vsyncpa [#allocation4], 1
    %s4945 = scalar_lea.sflag [#allocation4], 1
    %4946 = vsyncpa %s4945, 1

</llo_original>
